<compile_context>
chip_gen: v5e
topology: v5e:2x2
jax: 0.10.0
libtpu: 0.0.40
codegen_flags: <defaults>
</compile_context>

<pallas_src>
import functools

import jax
import jax.numpy as jnp
from jax import lax
from jax.experimental import pallas as pl
from jax.experimental.pallas import tpu as pltpu


def _lstm_mlp_kernel(x_ref, wih_ref, whh_ref, bg_ref,
                     w1_ref, b1_ref, w2_ref, b2_ref,
                     out_ref, h_sc, c_sc, xg_sc, hs_sc,
                     *, hidden_pad, t_chunk, tb):
    """One grid step == one (batch block, time chunk)."""
    hp = hidden_pad
    d = x_ref.shape[-1]

    # Reset the recurrent state at the start of every batch block's time sweep
    # (time is the innermost grid axis, so chunk index 0 <=> new batch block).
    @pl.when(pl.program_id(1) == 0)
    def _():
        h_sc[...] = jnp.zeros_like(h_sc)
        c_sc[...] = jnp.zeros_like(c_sc)

    # ---- Input projection, batched over the whole chunk (off the serial path).
    x_flat = x_ref[...].reshape(tb * t_chunk, d)                 # (TB*TC, D) batch-major
    xg = jnp.dot(x_flat.astype(jnp.bfloat16), wih_ref[...],
                 preferred_element_type=jnp.float32) + bg_ref[...]  # (TB*TC, 4Hp) f32
    xg3 = xg.reshape(tb, t_chunk, 4 * hp)
    for b in range(tb):                      # static copies into time-major scratch
        xg_sc[:, b, :] = xg3[b]

    # ---- Serial LSTM recurrence over the chunk (only h @ W_hh left per step).
    def step(t, carry):
        h, c = carry
        gates = xg_sc[t] + jnp.dot(h.astype(jnp.bfloat16), whh_ref[...],
                                   preferred_element_type=jnp.float32)  # (TB, 4Hp)
        i_g = jax.nn.sigmoid(gates[:, 0 * hp:1 * hp])   # gate slices are 128-lane aligned
        f_g = jax.nn.sigmoid(gates[:, 1 * hp:2 * hp])
        g_g = jnp.tanh(gates[:, 2 * hp:3 * hp])
        o_g = jax.nn.sigmoid(gates[:, 3 * hp:4 * hp])
        c_new = f_g * c + i_g * g_g
        h_new = o_g * jnp.tanh(c_new)
        hs_sc[t] = h_new                     # stash hidden state for the batched head
        return h_new, c_new

    h_fin, c_fin = lax.fori_loop(0, t_chunk, step, (h_sc[...], c_sc[...]),
                                 unroll=True if t_chunk <= 16 else 8)
    h_sc[...] = h_fin                        # carry recurrent state across time chunks
    c_sc[...] = c_fin

    # ---- MLP head, batched over the whole chunk on the MXU.
    # Rearrange hidden states batch-major so the (TB, T_CHUNK) output block is
    # produced directly (lane-dense rows, no relayout of scalars).
    hsb = jnp.concatenate([hs_sc[:, b, :] for b in range(tb)], axis=0)  # (TB*TC, Hp)
    z = jnp.dot(hsb.astype(jnp.bfloat16), w1_ref[...],
                preferred_element_type=jnp.float32) + b1_ref[...]
    z = jnp.maximum(z, 0.0)

    # Final Linear(H, 1): VPU multiply + lane reduction -> one lane-dense
    # (1, T_CHUNK) row per batch element.
    w2_row = w2_ref[...]                     # (1, Hp) f32
    b2 = b2_ref[...]                         # (1, 1)  f32
    for b in range(tb):
        zb = z[b * t_chunk:(b + 1) * t_chunk, :]         # (TC, Hp) static slice
        rb = jnp.sum(zb * w2_row, axis=-1)               # (TC,)
        out_ref[b:b + 1, :] = (rb[None, :] + b2).astype(out_ref.dtype)


def rnn_reward_predictor_forward(x_btd, kparams):
    """x_btd: (B, T, D) float32 -> pred_reward (B, T, 1) float32."""
    B, T, D = x_btd.shape
    Hp = kparams["w_hh"].shape[0]
    assert kparams["w_ih"].shape == (D, 4 * Hp)

    # Time chunking: one chunk == whole sequence when it is short, otherwise
    # 128-wide chunks so the (TB, T_CHUNK) output block is lane-dense.
    t_chunk = 128 if (T % 128 == 0) else T
    assert T % t_chunk == 0
    assert t_chunk % 8 == 0, "time chunk must be sublane aligned"
    tb = B if B <= 8 else 8
    assert B % tb == 0, "batch must tile evenly"

    kernel = functools.partial(_lstm_mlp_kernel,
                               hidden_pad=Hp, t_chunk=t_chunk, tb=tb)

    rep = lambda shape: pl.BlockSpec(shape, lambda b, c: (0,) * len(shape))

    out_bt = pl.pallas_call(
        kernel,
        out_shape=jax.ShapeDtypeStruct((B, T), jnp.float32),
        grid_spec=pltpu.PrefetchScalarGridSpec(
            num_scalar_prefetch=0,
            grid=(B // tb, T // t_chunk),            # (batch blocks, time chunks)
            in_specs=[
                pl.BlockSpec((tb, t_chunk, D), lambda b, c: (b, c, 0)),  # x chunk
                rep((D, 4 * Hp)),                    # W_ih^T  (bf16, gate-padded)
                rep((Hp, 4 * Hp)),                   # W_hh^T  (bf16, gate-padded)
                rep((1, 4 * Hp)),                    # b_ih + b_hh
                rep((Hp, Hp)),                       # mlp W1^T (bf16)
                rep((1, Hp)),                        # mlp b1
                rep((1, Hp)),                        # mlp W2 as a row vector
                rep((1, 1)),                         # mlp b2
            ],
            out_specs=pl.BlockSpec((tb, t_chunk), lambda b, c: (b, c)),
            scratch_shapes=[
                pltpu.VMEM((tb, Hp), jnp.float32),               # h carry
                pltpu.VMEM((tb, Hp), jnp.float32),               # c carry
                pltpu.VMEM((t_chunk, tb, 4 * Hp), jnp.float32),  # precomputed x-gates
                pltpu.VMEM((t_chunk, tb, Hp), jnp.float32),      # chunk hidden states
            ],
        ),
        compiler_params=pltpu.CompilerParams(
            # Time carries the recurrence -> "arbitrary"; batch blocks are
            # independent -> "parallel" (lets v7x's 2 TensorCores split them).
            dimension_semantics=("parallel", "arbitrary"),
            vmem_limit_bytes=64 * 1024 * 1024,
        ),
        # NOTE: at production H the constant-index weight inputs should be
        # single-buffered (pipeline_mode / one-time DMA into scratch); at these
        # demo sizes the double-buffered weights are only ~360 KiB of VMEM.
    )(x_btd, kparams["w_ih"], kparams["w_hh"], kparams["b_gates"],
      kparams["w1"], kparams["b1"], kparams["w2"], kparams["b2"])

    return out_bt[..., None]                                      # (B, T, 1)


def make_params(key, obs_dim, act_dim, hidden_dim):
    """Random parameters in PyTorch layout (nn.LSTM / nn.Linear conventions)."""
    D = obs_dim + act_dim
    H = hidden_dim
    ks = jax.random.split(key, 8)
    s = 0.1
    return {
        "w_ih": s * jax.random.normal(ks[0], (4 * H, D), jnp.float32),  # weight_ih_l0
        "w_hh": s * jax.random.normal(ks[1], (4 * H, H), jnp.float32),  # weight_hh_l0
        "b_ih": s * jax.random.normal(ks[2], (4 * H,), jnp.float32),
        "b_hh": s * jax.random.normal(ks[3], (4 * H,), jnp.float32),
        "w1": s * jax.random.normal(ks[4], (H, H), jnp.float32),        # mlp[0].weight
        "b1": s * jax.random.normal(ks[5], (H,), jnp.float32),
        "w2": s * jax.random.normal(ks[6], (1, H), jnp.float32),        # mlp[2].weight
        "b2": s * jax.random.normal(ks[7], (1,), jnp.float32),
    }


def prepare_kernel_params(p):
    """Transpose + zero-pad PyTorch-layout params to the kernel layout.

    Each gate block is padded from H to Hp = ceil(H/128)*128 lanes so gate
    slices are vreg-aligned; zero padding leaves the real lanes untouched
    (padded h/c lanes stay exactly 0 through the recurrence).
    """
    H = p["w_hh"].shape[1]
    D = p["w_ih"].shape[1]
    Hp = ((H + 127) // 128) * 128

    def pad_gates(w_t):  # (K, 4H) -> (K, 4Hp), per-gate zero padding
        K = w_t.shape[0]
        out = jnp.zeros((K, 4 * Hp), jnp.float32)
        for g in range(4):
            out = out.at[:, g * Hp:g * Hp + H].set(w_t[:, g * H:(g + 1) * H])
        return out

    w_ih_p = pad_gates(p["w_ih"].T)                                        # (D, 4Hp)
    w_hh_p = jnp.zeros((Hp, 4 * Hp), jnp.float32).at[:H].set(pad_gates(p["w_hh"].T))
    bg_p = pad_gates((p["b_ih"] + p["b_hh"]).reshape(1, 4 * H))            # (1, 4Hp)
    w1_p = jnp.zeros((Hp, Hp), jnp.float32).at[:H, :H].set(p["w1"].T)      # (Hp, Hp)
    b1_p = jnp.zeros((1, Hp), jnp.float32).at[:, :H].set(p["b1"][None, :])
    w2_p = jnp.zeros((1, Hp), jnp.float32).at[:, :H].set(p["w2"])          # row vector
    b2_p = p["b2"].reshape(1, 1)

    return {
        "w_ih": w_ih_p.astype(jnp.bfloat16),   # bf16 MXU operands, f32 accumulation
        "w_hh": w_hh_p.astype(jnp.bfloat16),
        "b_gates": bg_p,
        "w1": w1_p.astype(jnp.bfloat16),
        "b1": b1_p,
        "w2": w2_p,                            # used by the f32 VPU reduce
        "b2": b2_p,
    }


def reference_forward(x_btd, p, matmul_dtype=jnp.float32):
    """Pure-JAX reference of the PyTorch forward (LSTM + MLP head).

    matmul_dtype=bfloat16 mirrors the kernel's MXU precision; float32 gives the
    exact original-module semantics.
    """
    B, T, _ = x_btd.shape
    H = p["w_hh"].shape[1]
    cast = lambda a: a.astype(matmul_dtype)
    w_ih = cast(p["w_ih"].T)                 # (D, 4H)
    w_hh = cast(p["w_hh"].T)                 # (H, 4H)
    bg = (p["b_ih"] + p["b_hh"])[None, :]
    w1 = cast(p["w1"].T)                     # (H, H)
    b1 = p["b1"][None, :]
    w2 = p["w2"].T                           # (H, 1) kept f32, like the kernel
    b2 = p["b2"]

    def step(carry, x_t):
        h, c = carry
        g = (jnp.dot(cast(x_t), w_ih, preferred_element_type=jnp.float32)
             + jnp.dot(cast(h), w_hh, preferred_element_type=jnp.float32) + bg)
        i = jax.nn.sigmoid(g[:, 0 * H:1 * H])
        f = jax.nn.sigmoid(g[:, 1 * H:2 * H])
        gg = jnp.tanh(g[:, 2 * H:3 * H])
        o = jax.nn.sigmoid(g[:, 3 * H:4 * H])
        c = f * c + i * gg
        h = o * jnp.tanh(c)
        return (h, c), h

    h0 = jnp.zeros((B, H), jnp.float32)
    c0 = jnp.zeros((B, H), jnp.float32)
    _, hs = lax.scan(step, (h0, c0), jnp.swapaxes(x_btd, 0, 1))   # (T, B, H)
    hs = jnp.swapaxes(hs, 0, 1)                                   # (B, T, H)
    z = jnp.maximum(jnp.dot(cast(hs), w1, preferred_element_type=jnp.float32) + b1, 0.0)
    return jnp.dot(z, w2) + b2[None, None, :]                     # (B, T, 1)


if __name__ == "__main__":
    B, T = 2, 8
    obs_dim, act_dim, hidden_dim = 12, 4, 32       # D = 16, H = 32 (padded to 128)

    key = jax.random.PRNGKey(0)
    k_x, k_p = jax.random.split(key)
    x = jax.random.normal(k_x, (B, T, obs_dim + act_dim), jnp.float32)

    torch_params = make_params(k_p, obs_dim, act_dim, hidden_dim)
    kparams = prepare_kernel_params(torch_params)

    pred = rnn_reward_predictor_forward(x, kparams)
    pred = jax.block_until_ready(pred)
    assert pred.shape == (B, T, 1)

    # Tight check against a reference that mirrors the kernel's precision
    # (bf16 MXU operands, f32 accumulation) ...
    ref_mixed = reference_forward(x, torch_params, matmul_dtype=jnp.bfloat16)
    assert jnp.allclose(pred, ref_mixed, atol=5e-3, rtol=5e-3), \
        "mismatch vs mixed-precision reference"

    # ... and a looser check against the pure-float32 module semantics.
    ref_f32 = reference_forward(x, torch_params, matmul_dtype=jnp.float32)
    assert jnp.allclose(pred, ref_f32, atol=5e-2, rtol=5e-2), \
        "mismatch vs float32 reference"

    print("KERNEL_OK")
</pallas_src>

<mosaic_0001>
module attributes {stable_mosaic.version = 11 : i64} {
  func.func @_lstm_mlp_kernel(%arg0: i32, %arg1: i32, %arg2: memref<2x8x16xf32, #tpu.memory_space<vmem>>, %arg3: memref<16x512xbf16, #tpu.memory_space<vmem>>, %arg4: memref<128x512xbf16, #tpu.memory_space<vmem>>, %arg5: memref<1x512xf32, #tpu.memory_space<vmem>>, %arg6: memref<128x128xbf16, #tpu.memory_space<vmem>>, %arg7: memref<1x128xf32, #tpu.memory_space<vmem>>, %arg8: memref<1x128xf32, #tpu.memory_space<vmem>>, %arg9: memref<1x1xf32, #tpu.memory_space<vmem>>, %arg10: memref<2x8xf32, #tpu.memory_space<vmem>>, %arg11: memref<2x128xf32, #tpu.memory_space<vmem>>, %arg12: memref<2x128xf32, #tpu.memory_space<vmem>>, %arg13: memref<8x2x512xf32, #tpu.memory_space<vmem>>, %arg14: memref<8x2x128xf32, #tpu.memory_space<vmem>>) attributes {dimension_semantics = [#tpu.dimension_semantics<parallel>, #tpu.dimension_semantics<arbitrary>], iteration_bounds = array<i64: 1, 1>, scalar_prefetch = 0 : i64, scratch_operands = 4 : i64, tpu.core_type = #tpu.core_type<tc>, window_params = [{transform_indices = @transform_0, window_bounds = array<i64: 2, 8, 16>}, {pipeline_mode = #tpu.pipeline_mode<synchronous>, transform_indices = @transform_1, window_bounds = array<i64: 16, 512>}, {pipeline_mode = #tpu.pipeline_mode<synchronous>, transform_indices = @transform_2, window_bounds = array<i64: 128, 512>}, {pipeline_mode = #tpu.pipeline_mode<synchronous>, transform_indices = @transform_3, window_bounds = array<i64: 1, 512>}, {pipeline_mode = #tpu.pipeline_mode<synchronous>, transform_indices = @transform_4, window_bounds = array<i64: 128, 128>}, {pipeline_mode = #tpu.pipeline_mode<synchronous>, transform_indices = @transform_5, window_bounds = array<i64: 1, 128>}, {pipeline_mode = #tpu.pipeline_mode<synchronous>, transform_indices = @transform_6, window_bounds = array<i64: 1, 128>}, {pipeline_mode = #tpu.pipeline_mode<synchronous>, transform_indices = @transform_7, window_bounds = array<i64: 1, 1>}, {transform_indices = @transform_8, window_bounds = array<i64: 2, 8>}]} {
    %c0_i32 = arith.constant 0 : i32
    %0 = arith.cmpi eq, %arg1, %c0_i32 : i32
    %1 = arith.extui %0 : i1 to i32
    %c0_i32_0 = arith.constant 0 : i32
    %2 = arith.cmpi ne, %1, %c0_i32_0 : i32
    scf.if %2 {
      %cst_123 = arith.constant 0.000000e+00 : f32
      %345 = vector.broadcast %cst_123 : f32 to vector<2x128xf32>
      %c0_124 = arith.constant 0 : index
      %c0_125 = arith.constant 0 : index
      %346 = vector.load %arg11[%c0_124, %c0_125] : memref<2x128xf32, #tpu.memory_space<vmem>>, vector<2x128xf32>
      tpu.vector_store %arg11[%c0_124, %c0_125], %345 {strides = array<i32>} : memref<2x128xf32, #tpu.memory_space<vmem>>, vector<2x128xf32>,
      %cst_126 = arith.constant 0.000000e+00 : f32
      %347 = vector.broadcast %cst_126 : f32 to vector<2x128xf32>
      %c0_127 = arith.constant 0 : index
      %c0_128 = arith.constant 0 : index
      %348 = vector.load %arg12[%c0_127, %c0_128] : memref<2x128xf32, #tpu.memory_space<vmem>>, vector<2x128xf32>
      tpu.vector_store %arg12[%c0_127, %c0_128], %347 {strides = array<i32>} : memref<2x128xf32, #tpu.memory_space<vmem>>, vector<2x128xf32>,
    } else {
    }
    %c0 = arith.constant 0 : index
    %c0_1 = arith.constant 0 : index
    %c0_2 = arith.constant 0 : index
    %3 = vector.load %arg2[%c0, %c0_1, %c0_2] : memref<2x8x16xf32, #tpu.memory_space<vmem>>, vector<2x8x16xf32>
    %4 = vector.shape_cast %3 : vector<2x8x16xf32> to vector<16x16xf32>
    %5 = arith.truncf %4 : vector<16x16xf32> to vector<16x16xbf16>
    %c0_3 = arith.constant 0 : index
    %c0_4 = arith.constant 0 : index
    %6 = vector.load %arg3[%c0_3, %c0_4] : memref<16x512xbf16, #tpu.memory_space<vmem>>, vector<16x512xbf16>
    %cst = arith.constant dense<0.000000e+00> : vector<16x512xf32>
    %7 = tpu.matmul %5, %6, %cst {dimension_numbers = #tpu.dot_dimension_numbers<[1], [0], [0], [1], [0, 0, 1, 1], [], []>} : vector<16x16xbf16>, vector<16x512xbf16>, vector<16x512xf32> -> vector<16x512xf32>
    %c0_5 = arith.constant 0 : index
    %c0_6 = arith.constant 0 : index
    %8 = vector.load %arg5[%c0_5, %c0_6] : memref<1x512xf32, #tpu.memory_space<vmem>>, vector<1x512xf32>
    %9 = vector.broadcast %8 : vector<1x512xf32> to vector<16x512xf32>
    %10 = arith.addf %7, %9 : vector<16x512xf32>
    %11 = vector.shape_cast %10 : vector<16x512xf32> to vector<2x8x512xf32>
    %12 = vector.extract_strided_slice %11 {offsets = [0, 0, 0], sizes = [1, 8, 512], strides = [1, 1, 1]} : vector<2x8x512xf32> to vector<1x8x512xf32>
    %13 = vector.shape_cast %12 : vector<1x8x512xf32> to vector<8x512xf32>
    %c0_7 = arith.constant 0 : index
    %c0_8 = arith.constant 0 : index
    %c0_9 = arith.constant 0 : index
    %14 = vector.load %arg13[%c0_7, %c0_8, %c0_9] : memref<8x2x512xf32, #tpu.memory_space<vmem>>, vector<8x1x512xf32>
    %15 = vector.shape_cast %14 : vector<8x1x512xf32> to vector<8x512xf32>
    %16 = vector.shape_cast %13 : vector<8x512xf32> to vector<8x1x512xf32>
    tpu.vector_store %arg13[%c0_7, %c0_8, %c0_9], %16 {strides = array<i32>} : memref<8x2x512xf32, #tpu.memory_space<vmem>>, vector<8x1x512xf32>,
    %17 = vector.extract_strided_slice %11 {offsets = [1, 0, 0], sizes = [1, 8, 512], strides = [1, 1, 1]} : vector<2x8x512xf32> to vector<1x8x512xf32>
    %18 = vector.shape_cast %17 : vector<1x8x512xf32> to vector<8x512xf32>
    %c0_10 = arith.constant 0 : index
    %c1 = arith.constant 1 : index
    %c0_11 = arith.constant 0 : index
    %19 = vector.load %arg13[%c0_10, %c1, %c0_11] : memref<8x2x512xf32, #tpu.memory_space<vmem>>, vector<8x1x512xf32>
    %20 = vector.shape_cast %19 : vector<8x1x512xf32> to vector<8x512xf32>
    %21 = vector.shape_cast %18 : vector<8x512xf32> to vector<8x1x512xf32>
    tpu.vector_store %arg13[%c0_10, %c1, %c0_11], %21 {strides = array<i32>} : memref<8x2x512xf32, #tpu.memory_space<vmem>>, vector<8x1x512xf32>,
    %c0_12 = arith.constant 0 : index
    %c0_13 = arith.constant 0 : index
    %22 = vector.load %arg11[%c0_12, %c0_13] : memref<2x128xf32, #tpu.memory_space<vmem>>, vector<2x128xf32>
    %c0_14 = arith.constant 0 : index
    %c0_15 = arith.constant 0 : index
    %23 = vector.load %arg12[%c0_14, %c0_15] : memref<2x128xf32, #tpu.memory_space<vmem>>, vector<2x128xf32>
    %c0_i32_16 = arith.constant 0 : i32
    %24 = arith.index_cast %c0_i32_16 : i32 to index
    %c0_17 = arith.constant 0 : index
    %c0_18 = arith.constant 0 : index
    %25 = vector.load %arg13[%24, %c0_17, %c0_18] : memref<8x2x512xf32, #tpu.memory_space<vmem>>, vector<1x2x512xf32>
    %26 = vector.shape_cast %25 : vector<1x2x512xf32> to vector<2x512xf32>
    %27 = arith.truncf %22 : vector<2x128xf32> to vector<2x128xbf16>
    %c0_19 = arith.constant 0 : index
    %c0_20 = arith.constant 0 : index
    %28 = vector.load %arg4[%c0_19, %c0_20] : memref<128x512xbf16, #tpu.memory_space<vmem>>, vector<128x512xbf16>
    %cst_21 = arith.constant dense<0.000000e+00> : vector<2x512xf32>
    %29 = tpu.matmul %27, %28, %cst_21 {dimension_numbers = #tpu.dot_dimension_numbers<[1], [0], [0], [1], [0, 0, 1, 1], [], []>} : vector<2x128xbf16>, vector<128x512xbf16>, vector<2x512xf32> -> vector<2x512xf32>
    %30 = arith.addf %26, %29 : vector<2x512xf32>
    %31 = vector.extract_strided_slice %30 {offsets = [0, 0], sizes = [2, 128], strides = [1, 1]} : vector<2x512xf32> to vector<2x128xf32>
    %32 = arith.negf %31 : vector<2x128xf32>
    %33 = math.exp %32 : vector<2x128xf32>
    %cst_22 = arith.constant 1.000000e+00 : f32
    %34 = vector.broadcast %cst_22 : f32 to vector<2x128xf32>
    %35 = arith.addf %34, %33 : vector<2x128xf32>
    %36 = arith.divf %34, %35 : vector<2x128xf32>
    %37 = vector.extract_strided_slice %30 {offsets = [0, 128], sizes = [2, 128], strides = [1, 1]} : vector<2x512xf32> to vector<2x128xf32>
    %38 = arith.negf %37 : vector<2x128xf32>
    %39 = math.exp %38 : vector<2x128xf32>
    %cst_23 = arith.constant 1.000000e+00 : f32
    %40 = vector.broadcast %cst_23 : f32 to vector<2x128xf32>
    %41 = arith.addf %40, %39 : vector<2x128xf32>
    %42 = arith.divf %40, %41 : vector<2x128xf32>
    %43 = vector.extract_strided_slice %30 {offsets = [0, 256], sizes = [2, 128], strides = [1, 1]} : vector<2x512xf32> to vector<2x128xf32>
    %44 = math.tanh %43 : vector<2x128xf32>
    %45 = vector.extract_strided_slice %30 {offsets = [0, 384], sizes = [2, 128], strides = [1, 1]} : vector<2x512xf32> to vector<2x128xf32>
    %46 = arith.negf %45 : vector<2x128xf32>
    %47 = math.exp %46 : vector<2x128xf32>
    %cst_24 = arith.constant 1.000000e+00 : f32
    %48 = vector.broadcast %cst_24 : f32 to vector<2x128xf32>
    %49 = arith.addf %48, %47 : vector<2x128xf32>
    %50 = arith.divf %48, %49 : vector<2x128xf32>
    %51 = arith.mulf %42, %23 : vector<2x128xf32>
    %52 = arith.mulf %36, %44 : vector<2x128xf32>
    %53 = arith.addf %51, %52 : vector<2x128xf32>
    %54 = math.tanh %53 : vector<2x128xf32>
    %55 = arith.mulf %50, %54 : vector<2x128xf32>
    %56 = arith.index_cast %c0_i32_16 : i32 to index
    %c0_25 = arith.constant 0 : index
    %c0_26 = arith.constant 0 : index
    %57 = vector.load %arg14[%56, %c0_25, %c0_26] : memref<8x2x128xf32, #tpu.memory_space<vmem>>, vector<1x2x128xf32>
    %58 = vector.shape_cast %57 : vector<1x2x128xf32> to vector<2x128xf32>
    %59 = vector.shape_cast %55 : vector<2x128xf32> to vector<1x2x128xf32>
    tpu.vector_store %arg14[%56, %c0_25, %c0_26], %59 {strides = array<i32>} : memref<8x2x128xf32, #tpu.memory_space<vmem>>, vector<1x2x128xf32>,
    %c1_i32 = arith.constant 1 : i32
    %60 = arith.index_cast %c1_i32 : i32 to index
    %c0_27 = arith.constant 0 : index
    %c0_28 = arith.constant 0 : index
    %61 = vector.load %arg13[%60, %c0_27, %c0_28] : memref<8x2x512xf32, #tpu.memory_space<vmem>>, vector<1x2x512xf32>
    %62 = vector.shape_cast %61 : vector<1x2x512xf32> to vector<2x512xf32>
    %63 = arith.truncf %55 : vector<2x128xf32> to vector<2x128xbf16>
    %c0_29 = arith.constant 0 : index
    %c0_30 = arith.constant 0 : index
    %64 = vector.load %arg4[%c0_29, %c0_30] : memref<128x512xbf16, #tpu.memory_space<vmem>>, vector<128x512xbf16>
    %cst_31 = arith.constant dense<0.000000e+00> : vector<2x512xf32>
    %65 = tpu.matmul %63, %64, %cst_31 {dimension_numbers = #tpu.dot_dimension_numbers<[1], [0], [0], [1], [0, 0, 1, 1], [], []>} : vector<2x128xbf16>, vector<128x512xbf16>, vector<2x512xf32> -> vector<2x512xf32>
    %66 = arith.addf %62, %65 : vector<2x512xf32>
    %67 = vector.extract_strided_slice %66 {offsets = [0, 0], sizes = [2, 128], strides = [1, 1]} : vector<2x512xf32> to vector<2x128xf32>
    %68 = arith.negf %67 : vector<2x128xf32>
    %69 = math.exp %68 : vector<2x128xf32>
    %cst_32 = arith.constant 1.000000e+00 : f32
    %70 = vector.broadcast %cst_32 : f32 to vector<2x128xf32>
    %71 = arith.addf %70, %69 : vector<2x128xf32>
    %72 = arith.divf %70, %71 : vector<2x128xf32>
    %73 = vector.extract_strided_slice %66 {offsets = [0, 128], sizes = [2, 128], strides = [1, 1]} : vector<2x512xf32> to vector<2x128xf32>
    %74 = arith.negf %73 : vector<2x128xf32>
    %75 = math.exp %74 : vector<2x128xf32>
    %cst_33 = arith.constant 1.000000e+00 : f32
    %76 = vector.broadcast %cst_33 : f32 to vector<2x128xf32>
    %77 = arith.addf %76, %75 : vector<2x128xf32>
    %78 = arith.divf %76, %77 : vector<2x128xf32>
    %79 = vector.extract_strided_slice %66 {offsets = [0, 256], sizes = [2, 128], strides = [1, 1]} : vector<2x512xf32> to vector<2x128xf32>
    %80 = math.tanh %79 : vector<2x128xf32>
    %81 = vector.extract_strided_slice %66 {offsets = [0, 384], sizes = [2, 128], strides = [1, 1]} : vector<2x512xf32> to vector<2x128xf32>
    %82 = arith.negf %81 : vector<2x128xf32>
    %83 = math.exp %82 : vector<2x128xf32>
    %cst_34 = arith.constant 1.000000e+00 : f32
    %84 = vector.broadcast %cst_34 : f32 to vector<2x128xf32>
    %85 = arith.addf %84, %83 : vector<2x128xf32>
    %86 = arith.divf %84, %85 : vector<2x128xf32>
    %87 = arith.mulf %78, %53 : vector<2x128xf32>
    %88 = arith.mulf %72, %80 : vector<2x128xf32>
    %89 = arith.addf %87, %88 : vector<2x128xf32>
    %90 = math.tanh %89 : vector<2x128xf32>
    %91 = arith.mulf %86, %90 : vector<2x128xf32>
    %92 = arith.index_cast %c1_i32 : i32 to index
    %c0_35 = arith.constant 0 : index
    %c0_36 = arith.constant 0 : index
    %93 = vector.load %arg14[%92, %c0_35, %c0_36] : memref<8x2x128xf32, #tpu.memory_space<vmem>>, vector<1x2x128xf32>
    %94 = vector.shape_cast %93 : vector<1x2x128xf32> to vector<2x128xf32>
    %95 = vector.shape_cast %91 : vector<2x128xf32> to vector<1x2x128xf32>
    tpu.vector_store %arg14[%92, %c0_35, %c0_36], %95 {strides = array<i32>} : memref<8x2x128xf32, #tpu.memory_space<vmem>>, vector<1x2x128xf32>,
    %c2_i32 = arith.constant 2 : i32
    %96 = arith.index_cast %c2_i32 : i32 to index
    %c0_37 = arith.constant 0 : index
    %c0_38 = arith.constant 0 : index
    %97 = vector.load %arg13[%96, %c0_37, %c0_38] : memref<8x2x512xf32, #tpu.memory_space<vmem>>, vector<1x2x512xf32>
    %98 = vector.shape_cast %97 : vector<1x2x512xf32> to vector<2x512xf32>
    %99 = arith.truncf %91 : vector<2x128xf32> to vector<2x128xbf16>
    %c0_39 = arith.constant 0 : index
    %c0_40 = arith.constant 0 : index
    %100 = vector.load %arg4[%c0_39, %c0_40] : memref<128x512xbf16, #tpu.memory_space<vmem>>, vector<128x512xbf16>
    %cst_41 = arith.constant dense<0.000000e+00> : vector<2x512xf32>
    %101 = tpu.matmul %99, %100, %cst_41 {dimension_numbers = #tpu.dot_dimension_numbers<[1], [0], [0], [1], [0, 0, 1, 1], [], []>} : vector<2x128xbf16>, vector<128x512xbf16>, vector<2x512xf32> -> vector<2x512xf32>
    %102 = arith.addf %98, %101 : vector<2x512xf32>
    %103 = vector.extract_strided_slice %102 {offsets = [0, 0], sizes = [2, 128], strides = [1, 1]} : vector<2x512xf32> to vector<2x128xf32>
    %104 = arith.negf %103 : vector<2x128xf32>
    %105 = math.exp %104 : vector<2x128xf32>
    %cst_42 = arith.constant 1.000000e+00 : f32
    %106 = vector.broadcast %cst_42 : f32 to vector<2x128xf32>
    %107 = arith.addf %106, %105 : vector<2x128xf32>
    %108 = arith.divf %106, %107 : vector<2x128xf32>
    %109 = vector.extract_strided_slice %102 {offsets = [0, 128], sizes = [2, 128], strides = [1, 1]} : vector<2x512xf32> to vector<2x128xf32>
    %110 = arith.negf %109 : vector<2x128xf32>
    %111 = math.exp %110 : vector<2x128xf32>
    %cst_43 = arith.constant 1.000000e+00 : f32
    %112 = vector.broadcast %cst_43 : f32 to vector<2x128xf32>
    %113 = arith.addf %112, %111 : vector<2x128xf32>
    %114 = arith.divf %112, %113 : vector<2x128xf32>
    %115 = vector.extract_strided_slice %102 {offsets = [0, 256], sizes = [2, 128], strides = [1, 1]} : vector<2x512xf32> to vector<2x128xf32>
    %116 = math.tanh %115 : vector<2x128xf32>
    %117 = vector.extract_strided_slice %102 {offsets = [0, 384], sizes = [2, 128], strides = [1, 1]} : vector<2x512xf32> to vector<2x128xf32>
    %118 = arith.negf %117 : vector<2x128xf32>
    %119 = math.exp %118 : vector<2x128xf32>
    %cst_44 = arith.constant 1.000000e+00 : f32
    %120 = vector.broadcast %cst_44 : f32 to vector<2x128xf32>
    %121 = arith.addf %120, %119 : vector<2x128xf32>
    %122 = arith.divf %120, %121 : vector<2x128xf32>
    %123 = arith.mulf %114, %89 : vector<2x128xf32>
    %124 = arith.mulf %108, %116 : vector<2x128xf32>
    %125 = arith.addf %123, %124 : vector<2x128xf32>
    %126 = math.tanh %125 : vector<2x128xf32>
    %127 = arith.mulf %122, %126 : vector<2x128xf32>
    %128 = arith.index_cast %c2_i32 : i32 to index
    %c0_45 = arith.constant 0 : index
    %c0_46 = arith.constant 0 : index
    %129 = vector.load %arg14[%128, %c0_45, %c0_46] : memref<8x2x128xf32, #tpu.memory_space<vmem>>, vector<1x2x128xf32>
    %130 = vector.shape_cast %129 : vector<1x2x128xf32> to vector<2x128xf32>
    %131 = vector.shape_cast %127 : vector<2x128xf32> to vector<1x2x128xf32>
    tpu.vector_store %arg14[%128, %c0_45, %c0_46], %131 {strides = array<i32>} : memref<8x2x128xf32, #tpu.memory_space<vmem>>, vector<1x2x128xf32>,
    %c3_i32 = arith.constant 3 : i32
    %132 = arith.index_cast %c3_i32 : i32 to index
    %c0_47 = arith.constant 0 : index
    %c0_48 = arith.constant 0 : index
    %133 = vector.load %arg13[%132, %c0_47, %c0_48] : memref<8x2x512xf32, #tpu.memory_space<vmem>>, vector<1x2x512xf32>
    %134 = vector.shape_cast %133 : vector<1x2x512xf32> to vector<2x512xf32>
    %135 = arith.truncf %127 : vector<2x128xf32> to vector<2x128xbf16>
    %c0_49 = arith.constant 0 : index
    %c0_50 = arith.constant 0 : index
    %136 = vector.load %arg4[%c0_49, %c0_50] : memref<128x512xbf16, #tpu.memory_space<vmem>>, vector<128x512xbf16>
    %cst_51 = arith.constant dense<0.000000e+00> : vector<2x512xf32>
    %137 = tpu.matmul %135, %136, %cst_51 {dimension_numbers = #tpu.dot_dimension_numbers<[1], [0], [0], [1], [0, 0, 1, 1], [], []>} : vector<2x128xbf16>, vector<128x512xbf16>, vector<2x512xf32> -> vector<2x512xf32>
    %138 = arith.addf %134, %137 : vector<2x512xf32>
    %139 = vector.extract_strided_slice %138 {offsets = [0, 0], sizes = [2, 128], strides = [1, 1]} : vector<2x512xf32> to vector<2x128xf32>
    %140 = arith.negf %139 : vector<2x128xf32>
    %141 = math.exp %140 : vector<2x128xf32>
    %cst_52 = arith.constant 1.000000e+00 : f32
    %142 = vector.broadcast %cst_52 : f32 to vector<2x128xf32>
    %143 = arith.addf %142, %141 : vector<2x128xf32>
    %144 = arith.divf %142, %143 : vector<2x128xf32>
    %145 = vector.extract_strided_slice %138 {offsets = [0, 128], sizes = [2, 128], strides = [1, 1]} : vector<2x512xf32> to vector<2x128xf32>
    %146 = arith.negf %145 : vector<2x128xf32>
    %147 = math.exp %146 : vector<2x128xf32>
    %cst_53 = arith.constant 1.000000e+00 : f32
    %148 = vector.broadcast %cst_53 : f32 to vector<2x128xf32>
    %149 = arith.addf %148, %147 : vector<2x128xf32>
    %150 = arith.divf %148, %149 : vector<2x128xf32>
    %151 = vector.extract_strided_slice %138 {offsets = [0, 256], sizes = [2, 128], strides = [1, 1]} : vector<2x512xf32> to vector<2x128xf32>
    %152 = math.tanh %151 : vector<2x128xf32>
    %153 = vector.extract_strided_slice %138 {offsets = [0, 384], sizes = [2, 128], strides = [1, 1]} : vector<2x512xf32> to vector<2x128xf32>
    %154 = arith.negf %153 : vector<2x128xf32>
    %155 = math.exp %154 : vector<2x128xf32>
    %cst_54 = arith.constant 1.000000e+00 : f32
    %156 = vector.broadcast %cst_54 : f32 to vector<2x128xf32>
    %157 = arith.addf %156, %155 : vector<2x128xf32>
    %158 = arith.divf %156, %157 : vector<2x128xf32>
    %159 = arith.mulf %150, %125 : vector<2x128xf32>
    %160 = arith.mulf %144, %152 : vector<2x128xf32>
    %161 = arith.addf %159, %160 : vector<2x128xf32>
    %162 = math.tanh %161 : vector<2x128xf32>
    %163 = arith.mulf %158, %162 : vector<2x128xf32>
    %164 = arith.index_cast %c3_i32 : i32 to index
    %c0_55 = arith.constant 0 : index
    %c0_56 = arith.constant 0 : index
    %165 = vector.load %arg14[%164, %c0_55, %c0_56] : memref<8x2x128xf32, #tpu.memory_space<vmem>>, vector<1x2x128xf32>
    %166 = vector.shape_cast %165 : vector<1x2x128xf32> to vector<2x128xf32>
    %167 = vector.shape_cast %163 : vector<2x128xf32> to vector<1x2x128xf32>
    tpu.vector_store %arg14[%164, %c0_55, %c0_56], %167 {strides = array<i32>} : memref<8x2x128xf32, #tpu.memory_space<vmem>>, vector<1x2x128xf32>,
    %c4_i32 = arith.constant 4 : i32
    %168 = arith.index_cast %c4_i32 : i32 to index
    %c0_57 = arith.constant 0 : index
    %c0_58 = arith.constant 0 : index
    %169 = vector.load %arg13[%168, %c0_57, %c0_58] : memref<8x2x512xf32, #tpu.memory_space<vmem>>, vector<1x2x512xf32>
    %170 = vector.shape_cast %169 : vector<1x2x512xf32> to vector<2x512xf32>
    %171 = arith.truncf %163 : vector<2x128xf32> to vector<2x128xbf16>
    %c0_59 = arith.constant 0 : index
    %c0_60 = arith.constant 0 : index
    %172 = vector.load %arg4[%c0_59, %c0_60] : memref<128x512xbf16, #tpu.memory_space<vmem>>, vector<128x512xbf16>
    %cst_61 = arith.constant dense<0.000000e+00> : vector<2x512xf32>
    %173 = tpu.matmul %171, %172, %cst_61 {dimension_numbers = #tpu.dot_dimension_numbers<[1], [0], [0], [1], [0, 0, 1, 1], [], []>} : vector<2x128xbf16>, vector<128x512xbf16>, vector<2x512xf32> -> vector<2x512xf32>
    %174 = arith.addf %170, %173 : vector<2x512xf32>
    %175 = vector.extract_strided_slice %174 {offsets = [0, 0], sizes = [2, 128], strides = [1, 1]} : vector<2x512xf32> to vector<2x128xf32>
    %176 = arith.negf %175 : vector<2x128xf32>
    %177 = math.exp %176 : vector<2x128xf32>
    %cst_62 = arith.constant 1.000000e+00 : f32
    %178 = vector.broadcast %cst_62 : f32 to vector<2x128xf32>
    %179 = arith.addf %178, %177 : vector<2x128xf32>
    %180 = arith.divf %178, %179 : vector<2x128xf32>
    %181 = vector.extract_strided_slice %174 {offsets = [0, 128], sizes = [2, 128], strides = [1, 1]} : vector<2x512xf32> to vector<2x128xf32>
    %182 = arith.negf %181 : vector<2x128xf32>
    %183 = math.exp %182 : vector<2x128xf32>
    %cst_63 = arith.constant 1.000000e+00 : f32
    %184 = vector.broadcast %cst_63 : f32 to vector<2x128xf32>
    %185 = arith.addf %184, %183 : vector<2x128xf32>
    %186 = arith.divf %184, %185 : vector<2x128xf32>
    %187 = vector.extract_strided_slice %174 {offsets = [0, 256], sizes = [2, 128], strides = [1, 1]} : vector<2x512xf32> to vector<2x128xf32>
    %188 = math.tanh %187 : vector<2x128xf32>
    %189 = vector.extract_strided_slice %174 {offsets = [0, 384], sizes = [2, 128], strides = [1, 1]} : vector<2x512xf32> to vector<2x128xf32>
    %190 = arith.negf %189 : vector<2x128xf32>
    %191 = math.exp %190 : vector<2x128xf32>
    %cst_64 = arith.constant 1.000000e+00 : f32
    %192 = vector.broadcast %cst_64 : f32 to vector<2x128xf32>
    %193 = arith.addf %192, %191 : vector<2x128xf32>
    %194 = arith.divf %192, %193 : vector<2x128xf32>
    %195 = arith.mulf %186, %161 : vector<2x128xf32>
    %196 = arith.mulf %180, %188 : vector<2x128xf32>
    %197 = arith.addf %195, %196 : vector<2x128xf32>
    %198 = math.tanh %197 : vector<2x128xf32>
    %199 = arith.mulf %194, %198 : vector<2x128xf32>
    %200 = arith.index_cast %c4_i32 : i32 to index
    %c0_65 = arith.constant 0 : index
    %c0_66 = arith.constant 0 : index
    %201 = vector.load %arg14[%200, %c0_65, %c0_66] : memref<8x2x128xf32, #tpu.memory_space<vmem>>, vector<1x2x128xf32>
    %202 = vector.shape_cast %201 : vector<1x2x128xf32> to vector<2x128xf32>
    %203 = vector.shape_cast %199 : vector<2x128xf32> to vector<1x2x128xf32>
    tpu.vector_store %arg14[%200, %c0_65, %c0_66], %203 {strides = array<i32>} : memref<8x2x128xf32, #tpu.memory_space<vmem>>, vector<1x2x128xf32>,
    %c5_i32 = arith.constant 5 : i32
    %204 = arith.index_cast %c5_i32 : i32 to index
    %c0_67 = arith.constant 0 : index
    %c0_68 = arith.constant 0 : index
    %205 = vector.load %arg13[%204, %c0_67, %c0_68] : memref<8x2x512xf32, #tpu.memory_space<vmem>>, vector<1x2x512xf32>
    %206 = vector.shape_cast %205 : vector<1x2x512xf32> to vector<2x512xf32>
    %207 = arith.truncf %199 : vector<2x128xf32> to vector<2x128xbf16>
    %c0_69 = arith.constant 0 : index
    %c0_70 = arith.constant 0 : index
    %208 = vector.load %arg4[%c0_69, %c0_70] : memref<128x512xbf16, #tpu.memory_space<vmem>>, vector<128x512xbf16>
    %cst_71 = arith.constant dense<0.000000e+00> : vector<2x512xf32>
    %209 = tpu.matmul %207, %208, %cst_71 {dimension_numbers = #tpu.dot_dimension_numbers<[1], [0], [0], [1], [0, 0, 1, 1], [], []>} : vector<2x128xbf16>, vector<128x512xbf16>, vector<2x512xf32> -> vector<2x512xf32>
    %210 = arith.addf %206, %209 : vector<2x512xf32>
    %211 = vector.extract_strided_slice %210 {offsets = [0, 0], sizes = [2, 128], strides = [1, 1]} : vector<2x512xf32> to vector<2x128xf32>
    %212 = arith.negf %211 : vector<2x128xf32>
    %213 = math.exp %212 : vector<2x128xf32>
    %cst_72 = arith.constant 1.000000e+00 : f32
    %214 = vector.broadcast %cst_72 : f32 to vector<2x128xf32>
    %215 = arith.addf %214, %213 : vector<2x128xf32>
    %216 = arith.divf %214, %215 : vector<2x128xf32>
    %217 = vector.extract_strided_slice %210 {offsets = [0, 128], sizes = [2, 128], strides = [1, 1]} : vector<2x512xf32> to vector<2x128xf32>
    %218 = arith.negf %217 : vector<2x128xf32>
    %219 = math.exp %218 : vector<2x128xf32>
    %cst_73 = arith.constant 1.000000e+00 : f32
    %220 = vector.broadcast %cst_73 : f32 to vector<2x128xf32>
    %221 = arith.addf %220, %219 : vector<2x128xf32>
    %222 = arith.divf %220, %221 : vector<2x128xf32>
    %223 = vector.extract_strided_slice %210 {offsets = [0, 256], sizes = [2, 128], strides = [1, 1]} : vector<2x512xf32> to vector<2x128xf32>
    %224 = math.tanh %223 : vector<2x128xf32>
    %225 = vector.extract_strided_slice %210 {offsets = [0, 384], sizes = [2, 128], strides = [1, 1]} : vector<2x512xf32> to vector<2x128xf32>
    %226 = arith.negf %225 : vector<2x128xf32>
    %227 = math.exp %226 : vector<2x128xf32>
    %cst_74 = arith.constant 1.000000e+00 : f32
    %228 = vector.broadcast %cst_74 : f32 to vector<2x128xf32>
    %229 = arith.addf %228, %227 : vector<2x128xf32>
    %230 = arith.divf %228, %229 : vector<2x128xf32>
    %231 = arith.mulf %222, %197 : vector<2x128xf32>
    %232 = arith.mulf %216, %224 : vector<2x128xf32>
    %233 = arith.addf %231, %232 : vector<2x128xf32>
    %234 = math.tanh %233 : vector<2x128xf32>
    %235 = arith.mulf %230, %234 : vector<2x128xf32>
    %236 = arith.index_cast %c5_i32 : i32 to index
    %c0_75 = arith.constant 0 : index
    %c0_76 = arith.constant 0 : index
    %237 = vector.load %arg14[%236, %c0_75, %c0_76] : memref<8x2x128xf32, #tpu.memory_space<vmem>>, vector<1x2x128xf32>
    %238 = vector.shape_cast %237 : vector<1x2x128xf32> to vector<2x128xf32>
    %239 = vector.shape_cast %235 : vector<2x128xf32> to vector<1x2x128xf32>
    tpu.vector_store %arg14[%236, %c0_75, %c0_76], %239 {strides = array<i32>} : memref<8x2x128xf32, #tpu.memory_space<vmem>>, vector<1x2x128xf32>,
    %c6_i32 = arith.constant 6 : i32
    %240 = arith.index_cast %c6_i32 : i32 to index
    %c0_77 = arith.constant 0 : index
    %c0_78 = arith.constant 0 : index
    %241 = vector.load %arg13[%240, %c0_77, %c0_78] : memref<8x2x512xf32, #tpu.memory_space<vmem>>, vector<1x2x512xf32>
    %242 = vector.shape_cast %241 : vector<1x2x512xf32> to vector<2x512xf32>
    %243 = arith.truncf %235 : vector<2x128xf32> to vector<2x128xbf16>
    %c0_79 = arith.constant 0 : index
    %c0_80 = arith.constant 0 : index
    %244 = vector.load %arg4[%c0_79, %c0_80] : memref<128x512xbf16, #tpu.memory_space<vmem>>, vector<128x512xbf16>
    %cst_81 = arith.constant dense<0.000000e+00> : vector<2x512xf32>
    %245 = tpu.matmul %243, %244, %cst_81 {dimension_numbers = #tpu.dot_dimension_numbers<[1], [0], [0], [1], [0, 0, 1, 1], [], []>} : vector<2x128xbf16>, vector<128x512xbf16>, vector<2x512xf32> -> vector<2x512xf32>
    %246 = arith.addf %242, %245 : vector<2x512xf32>
    %247 = vector.extract_strided_slice %246 {offsets = [0, 0], sizes = [2, 128], strides = [1, 1]} : vector<2x512xf32> to vector<2x128xf32>
    %248 = arith.negf %247 : vector<2x128xf32>
    %249 = math.exp %248 : vector<2x128xf32>
    %cst_82 = arith.constant 1.000000e+00 : f32
    %250 = vector.broadcast %cst_82 : f32 to vector<2x128xf32>
    %251 = arith.addf %250, %249 : vector<2x128xf32>
    %252 = arith.divf %250, %251 : vector<2x128xf32>
    %253 = vector.extract_strided_slice %246 {offsets = [0, 128], sizes = [2, 128], strides = [1, 1]} : vector<2x512xf32> to vector<2x128xf32>
    %254 = arith.negf %253 : vector<2x128xf32>
    %255 = math.exp %254 : vector<2x128xf32>
    %cst_83 = arith.constant 1.000000e+00 : f32
    %256 = vector.broadcast %cst_83 : f32 to vector<2x128xf32>
    %257 = arith.addf %256, %255 : vector<2x128xf32>
    %258 = arith.divf %256, %257 : vector<2x128xf32>
    %259 = vector.extract_strided_slice %246 {offsets = [0, 256], sizes = [2, 128], strides = [1, 1]} : vector<2x512xf32> to vector<2x128xf32>
    %260 = math.tanh %259 : vector<2x128xf32>
    %261 = vector.extract_strided_slice %246 {offsets = [0, 384], sizes = [2, 128], strides = [1, 1]} : vector<2x512xf32> to vector<2x128xf32>
    %262 = arith.negf %261 : vector<2x128xf32>
    %263 = math.exp %262 : vector<2x128xf32>
    %cst_84 = arith.constant 1.000000e+00 : f32
    %264 = vector.broadcast %cst_84 : f32 to vector<2x128xf32>
    %265 = arith.addf %264, %263 : vector<2x128xf32>
    %266 = arith.divf %264, %265 : vector<2x128xf32>
    %267 = arith.mulf %258, %233 : vector<2x128xf32>
    %268 = arith.mulf %252, %260 : vector<2x128xf32>
    %269 = arith.addf %267, %268 : vector<2x128xf32>
    %270 = math.tanh %269 : vector<2x128xf32>
    %271 = arith.mulf %266, %270 : vector<2x128xf32>
    %272 = arith.index_cast %c6_i32 : i32 to index
    %c0_85 = arith.constant 0 : index
    %c0_86 = arith.constant 0 : index
    %273 = vector.load %arg14[%272, %c0_85, %c0_86] : memref<8x2x128xf32, #tpu.memory_space<vmem>>, vector<1x2x128xf32>
    %274 = vector.shape_cast %273 : vector<1x2x128xf32> to vector<2x128xf32>
    %275 = vector.shape_cast %271 : vector<2x128xf32> to vector<1x2x128xf32>
    tpu.vector_store %arg14[%272, %c0_85, %c0_86], %275 {strides = array<i32>} : memref<8x2x128xf32, #tpu.memory_space<vmem>>, vector<1x2x128xf32>,
    %c7_i32 = arith.constant 7 : i32
    %276 = arith.index_cast %c7_i32 : i32 to index
    %c0_87 = arith.constant 0 : index
    %c0_88 = arith.constant 0 : index
    %277 = vector.load %arg13[%276, %c0_87, %c0_88] : memref<8x2x512xf32, #tpu.memory_space<vmem>>, vector<1x2x512xf32>
    %278 = vector.shape_cast %277 : vector<1x2x512xf32> to vector<2x512xf32>
    %279 = arith.truncf %271 : vector<2x128xf32> to vector<2x128xbf16>
    %c0_89 = arith.constant 0 : index
    %c0_90 = arith.constant 0 : index
    %280 = vector.load %arg4[%c0_89, %c0_90] : memref<128x512xbf16, #tpu.memory_space<vmem>>, vector<128x512xbf16>
    %cst_91 = arith.constant dense<0.000000e+00> : vector<2x512xf32>
    %281 = tpu.matmul %279, %280, %cst_91 {dimension_numbers = #tpu.dot_dimension_numbers<[1], [0], [0], [1], [0, 0, 1, 1], [], []>} : vector<2x128xbf16>, vector<128x512xbf16>, vector<2x512xf32> -> vector<2x512xf32>
    %282 = arith.addf %278, %281 : vector<2x512xf32>
    %283 = vector.extract_strided_slice %282 {offsets = [0, 0], sizes = [2, 128], strides = [1, 1]} : vector<2x512xf32> to vector<2x128xf32>
    %284 = arith.negf %283 : vector<2x128xf32>
    %285 = math.exp %284 : vector<2x128xf32>
    %cst_92 = arith.constant 1.000000e+00 : f32
    %286 = vector.broadcast %cst_92 : f32 to vector<2x128xf32>
    %287 = arith.addf %286, %285 : vector<2x128xf32>
    %288 = arith.divf %286, %287 : vector<2x128xf32>
    %289 = vector.extract_strided_slice %282 {offsets = [0, 128], sizes = [2, 128], strides = [1, 1]} : vector<2x512xf32> to vector<2x128xf32>
    %290 = arith.negf %289 : vector<2x128xf32>
    %291 = math.exp %290 : vector<2x128xf32>
    %cst_93 = arith.constant 1.000000e+00 : f32
    %292 = vector.broadcast %cst_93 : f32 to vector<2x128xf32>
    %293 = arith.addf %292, %291 : vector<2x128xf32>
    %294 = arith.divf %292, %293 : vector<2x128xf32>
    %295 = vector.extract_strided_slice %282 {offsets = [0, 256], sizes = [2, 128], strides = [1, 1]} : vector<2x512xf32> to vector<2x128xf32>
    %296 = math.tanh %295 : vector<2x128xf32>
    %297 = vector.extract_strided_slice %282 {offsets = [0, 384], sizes = [2, 128], strides = [1, 1]} : vector<2x512xf32> to vector<2x128xf32>
    %298 = arith.negf %297 : vector<2x128xf32>
    %299 = math.exp %298 : vector<2x128xf32>
    %cst_94 = arith.constant 1.000000e+00 : f32
    %300 = vector.broadcast %cst_94 : f32 to vector<2x128xf32>
    %301 = arith.addf %300, %299 : vector<2x128xf32>
    %302 = arith.divf %300, %301 : vector<2x128xf32>
    %303 = arith.mulf %294, %269 : vector<2x128xf32>
    %304 = arith.mulf %288, %296 : vector<2x128xf32>
    %305 = arith.addf %303, %304 : vector<2x128xf32>
    %306 = math.tanh %305 : vector<2x128xf32>
    %307 = arith.mulf %302, %306 : vector<2x128xf32>
    %308 = arith.index_cast %c7_i32 : i32 to index
    %c0_95 = arith.constant 0 : index
    %c0_96 = arith.constant 0 : index
    %309 = vector.load %arg14[%308, %c0_95, %c0_96] : memref<8x2x128xf32, #tpu.memory_space<vmem>>, vector<1x2x128xf32>
    %310 = vector.shape_cast %309 : vector<1x2x128xf32> to vector<2x128xf32>
    %311 = vector.shape_cast %307 : vector<2x128xf32> to vector<1x2x128xf32>
    tpu.vector_store %arg14[%308, %c0_95, %c0_96], %311 {strides = array<i32>} : memref<8x2x128xf32, #tpu.memory_space<vmem>>, vector<1x2x128xf32>,
    %c8_i32 = arith.constant 8 : i32
    %c0_97 = arith.constant 0 : index
    %c0_98 = arith.constant 0 : index
    %312 = vector.load %arg11[%c0_97, %c0_98] : memref<2x128xf32, #tpu.memory_space<vmem>>, vector<2x128xf32>
    tpu.vector_store %arg11[%c0_97, %c0_98], %307 {strides = array<i32>} : memref<2x128xf32, #tpu.memory_space<vmem>>, vector<2x128xf32>,
    %c0_99 = arith.constant 0 : index
    %c0_100 = arith.constant 0 : index
    %313 = vector.load %arg12[%c0_99, %c0_100] : memref<2x128xf32, #tpu.memory_space<vmem>>, vector<2x128xf32>
    tpu.vector_store %arg12[%c0_99, %c0_100], %305 {strides = array<i32>} : memref<2x128xf32, #tpu.memory_space<vmem>>, vector<2x128xf32>,
    %c0_101 = arith.constant 0 : index
    %c0_102 = arith.constant 0 : index
    %c0_103 = arith.constant 0 : index
    %314 = vector.load %arg14[%c0_101, %c0_102, %c0_103] : memref<8x2x128xf32, #tpu.memory_space<vmem>>, vector<8x1x128xf32>
    %315 = vector.shape_cast %314 : vector<8x1x128xf32> to vector<8x128xf32>
    %c0_104 = arith.constant 0 : index
    %c1_105 = arith.constant 1 : index
    %c0_106 = arith.constant 0 : index
    %316 = vector.load %arg14[%c0_104, %c1_105, %c0_106] : memref<8x2x128xf32, #tpu.memory_space<vmem>>, vector<8x1x128xf32>
    %317 = vector.shape_cast %316 : vector<8x1x128xf32> to vector<8x128xf32>
    %318 = tpu.concatenate %315, %317 in 0 : vector<8x128xf32>, vector<8x128xf32> -> vector<16x128xf32>
    %319 = arith.truncf %318 : vector<16x128xf32> to vector<16x128xbf16>
    %c0_107 = arith.constant 0 : index
    %c0_108 = arith.constant 0 : index
    %320 = vector.load %arg6[%c0_107, %c0_108] : memref<128x128xbf16, #tpu.memory_space<vmem>>, vector<128x128xbf16>
    %cst_109 = arith.constant dense<0.000000e+00> : vector<16x128xf32>
    %321 = tpu.matmul %319, %320, %cst_109 {dimension_numbers = #tpu.dot_dimension_numbers<[1], [0], [0], [1], [0, 0, 1, 1], [], []>} : vector<16x128xbf16>, vector<128x128xbf16>, vector<16x128xf32> -> vector<16x128xf32>
    %c0_110 = arith.constant 0 : index
    %c0_111 = arith.constant 0 : index
    %322 = vector.load %arg7[%c0_110, %c0_111] : memref<1x128xf32, #tpu.memory_space<vmem>>, vector<1x128xf32>
    %323 = vector.broadcast %322 : vector<1x128xf32> to vector<16x128xf32>
    %324 = arith.addf %321, %323 : vector<16x128xf32>
    %cst_112 = arith.constant 0.000000e+00 : f32
    %325 = vector.broadcast %cst_112 : f32 to vector<16x128xf32>
    %326 = arith.maximumf %324, %325 : vector<16x128xf32>
    %c0_113 = arith.constant 0 : index
    %c0_114 = arith.constant 0 : index
    %327 = vector.load %arg8[%c0_113, %c0_114] : memref<1x128xf32, #tpu.memory_space<vmem>>, vector<1x128xf32>
    %c0_115 = arith.constant 0 : index
    %c0_116 = arith.constant 0 : index
    %328 = vector.load %arg9[%c0_115, %c0_116] : memref<1x1xf32, #tpu.memory_space<vmem>>, vector<1x1xf32>
    %329 = vector.extract_strided_slice %326 {offsets = [0, 0], sizes = [8, 128], strides = [1, 1]} : vector<16x128xf32> to vector<8x128xf32>
    %330 = vector.broadcast %327 : vector<1x128xf32> to vector<8x128xf32>
    %331 = arith.mulf %329, %330 : vector<8x128xf32>
    %cst_117 = arith.constant dense<0.000000e+00> : vector<8xf32>
    %332 = vector.multi_reduction <add>, %331, %cst_117 [1] : vector<8x128xf32> to vector<8xf32>
    %333 = vector.shape_cast %332 : vector<8xf32> to vector<1x8xf32>
    %334 = vector.broadcast %328 : vector<1x1xf32> to vector<1x8xf32>
    %335 = arith.addf %333, %334 : vector<1x8xf32>
    %c0_118 = arith.constant 0 : index
    %c0_119 = arith.constant 0 : index
    %336 = vector.load %arg10[%c0_118, %c0_119] : memref<2x8xf32, #tpu.memory_space<vmem>>, vector<1x8xf32>
    tpu.vector_store %arg10[%c0_118, %c0_119], %335 {strides = array<i32>} : memref<2x8xf32, #tpu.memory_space<vmem>>, vector<1x8xf32>,
    %337 = vector.extract_strided_slice %326 {offsets = [8, 0], sizes = [8, 128], strides = [1, 1]} : vector<16x128xf32> to vector<8x128xf32>
    %338 = vector.broadcast %327 : vector<1x128xf32> to vector<8x128xf32>
    %339 = arith.mulf %337, %338 : vector<8x128xf32>
    %cst_120 = arith.constant dense<0.000000e+00> : vector<8xf32>
    %340 = vector.multi_reduction <add>, %339, %cst_120 [1] : vector<8x128xf32> to vector<8xf32>
    %341 = vector.shape_cast %340 : vector<8xf32> to vector<1x8xf32>
    %342 = vector.broadcast %328 : vector<1x1xf32> to vector<1x8xf32>
    %343 = arith.addf %341, %342 : vector<1x8xf32>
    %c1_121 = arith.constant 1 : index
    %c0_122 = arith.constant 0 : index
    %344 = vector.load %arg10[%c1_121, %c0_122] : memref<2x8xf32, #tpu.memory_space<vmem>>, vector<1x8xf32>
    tpu.vector_store %arg10[%c1_121, %c0_122], %343 {strides = array<i32>} : memref<2x8xf32, #tpu.memory_space<vmem>>, vector<1x8xf32>,
    return
  }
  func.func @transform_0(%arg0: i32, %arg1: i32) -> (i32, i32, i32) {
    %c0_i32 = arith.constant 0 : i32
    %c0_i32_0 = arith.constant 0 : i32
    return %arg0, %arg1, %c0_i32 : i32, i32, i32
  }
  func.func @transform_1(%arg0: i32, %arg1: i32) -> (i32, i32) {
    %c0_i32 = arith.constant 0 : i32
    %c0_i32_0 = arith.constant 0 : i32
    %c0_i32_1 = arith.constant 0 : i32
    return %c0_i32, %c0_i32_0 : i32, i32
  }
  func.func @transform_2(%arg0: i32, %arg1: i32) -> (i32, i32) {
    %c0_i32 = arith.constant 0 : i32
    %c0_i32_0 = arith.constant 0 : i32
    %c0_i32_1 = arith.constant 0 : i32
    return %c0_i32, %c0_i32_0 : i32, i32
  }
  func.func @transform_3(%arg0: i32, %arg1: i32) -> (i32, i32) {
    %c0_i32 = arith.constant 0 : i32
    %c0_i32_0 = arith.constant 0 : i32
    %c0_i32_1 = arith.constant 0 : i32
    return %c0_i32, %c0_i32_0 : i32, i32
  }
  func.func @transform_4(%arg0: i32, %arg1: i32) -> (i32, i32) {
    %c0_i32 = arith.constant 0 : i32
    %c0_i32_0 = arith.constant 0 : i32
    %c0_i32_1 = arith.constant 0 : i32
    return %c0_i32, %c0_i32_0 : i32, i32
  }
  func.func @transform_5(%arg0: i32, %arg1: i32) -> (i32, i32) {
    %c0_i32 = arith.constant 0 : i32
    %c0_i32_0 = arith.constant 0 : i32
    %c0_i32_1 = arith.constant 0 : i32
    return %c0_i32, %c0_i32_0 : i32, i32
  }
  func.func @transform_6(%arg0: i32, %arg1: i32) -> (i32, i32) {
    %c0_i32 = arith.constant 0 : i32
    %c0_i32_0 = arith.constant 0 : i32
    %c0_i32_1 = arith.constant 0 : i32
    return %c0_i32, %c0_i32_0 : i32, i32
  }
  func.func @transform_7(%arg0: i32, %arg1: i32) -> (i32, i32) {
    %c0_i32 = arith.constant 0 : i32
    %c0_i32_0 = arith.constant 0 : i32
    %c0_i32_1 = arith.constant 0 : i32
    return %c0_i32, %c0_i32_0 : i32, i32
  }
  func.func @transform_8(%arg0: i32, %arg1: i32) -> (i32, i32) {
    %c0_i32 = arith.constant 0 : i32
    return %arg0, %arg1 : i32, i32
  }
}

</mosaic_0001>

<llo_original>
// kernel: tpu_custom_call.1
$region0: #{tpu_custom_call.1}
  #allocation0 [shape = 'u32[]', space=smem, size = 0x4, offset = 0x4, fixed_abs, tag = 'smem constant byte address 0x4 - core index']
  #allocation1 [shape = 'u32[72,128]{1,0:T(1,128)}', space=vmem, size = 0x9000, scoped, tag = 'internal scratch']
  #allocation2 [shape = 'f32[2,128]{1,0:T(2,128)}', space=vmem, size = 0x400, scoped, tag = 'scratch operand']
  #allocation3 [shape = 'f32[2,128]{1,0:T(2,128)}', space=vmem, size = 0x400, scoped, tag = 'scratch operand']
  #allocation4 [shape = 'f32[8,2,512]{2,1,0:T(2,128)}', space=vmem, size = 0x8000, scoped, tag = 'scratch operand']
  #allocation5 [shape = 'f32[8,2,128]{2,1,0:T(2,128)}', space=vmem, size = 0x2000, scoped, tag = 'scratch operand']
  #allocation6 [shape = 'f32[1,1]{1,0:T(1,128)S(1)}', space=vmem, size = 0x200, scoped, tag = 'scoped memory for tpu_custom_call.1']
  %s0 = inlined_call_operand.hbm [shape: f32[2,8,16], index: 0, kind: input, shape index: {}]
  %s1 = inlined_call_operand.hbm [shape: bf16[16,512], index: 1, kind: input, shape index: {}]
  %s2 = inlined_call_operand.hbm [shape: bf16[128,512], index: 2, kind: input, shape index: {}]
  %s3 = inlined_call_operand.vmem [shape: f32[1,512], index: 3, kind: input, shape index: {}]
  %s4 = inlined_call_operand.hbm [shape: bf16[128,128], index: 4, kind: input, shape index: {}]
  %s5 = inlined_call_operand.vmem [shape: f32[1,128], index: 5, kind: input, shape index: {}]
  %s6 = inlined_call_operand.vmem [shape: f32[1,128], index: 6, kind: input, shape index: {}]
  %s7 = inlined_call_operand.<no memory space> [shape: f32[1,1], index: 7, kind: input, shape index: {}]
  %s8 = inlined_call_operand.hbm [shape: f32[2,8], index: 8, kind: output, shape index: {}]
  %s9 = sld [smem:[#allocation0]]
  $region62: #{tpu_custom_call.1} parent=0
    _
  %s11 = ssub.s32 1, %s9
  %s12 = scalar_select 0, %s11, %s9
  %v13 = vstv %s7
  %14 = vst [vmem:[#allocation6] sm:$0x1] %v13
  $region1: #{tpu_custom_call.1} parent=0
    #allocation7 [shape = 'u8[8192]{0}', space=vmem, size = 0x2000, scoped, tag = 'input window, operand 0, single buffered']
    #allocation8 [shape = 's32[1]{0}', space=sflag, size = 0x4, scoped, tag = 'scoped memory for tpu_custom_call.1']
    #allocation9 [shape = 's32[1]{0}', space=sflag, size = 0x4, scoped, tag = 'scoped memory for tpu_custom_call.1']
    #allocation10 [shape = 'u8[16384]{0}', space=vmem, size = 0x4000, scoped, tag = 'input window, operand 1, single buffered']
    #allocation11 [shape = 's32[1]{0}', space=sflag, size = 0x4, scoped, tag = 'scoped memory for tpu_custom_call.1']
    #allocation12 [shape = 'u8[131072]{0}', space=vmem, size = 0x20000, scoped, tag = 'input window, operand 2, single buffered']
    #allocation13 [shape = 'u8[32768]{0}', space=vmem, size = 0x8000, scoped, tag = 'input window, operand 4, single buffered']
    #allocation14 [shape = 's32[1]{0}', space=sflag, size = 0x4, scoped, tag = 'scoped memory for tpu_custom_call.1']
    #allocation15 [shape = 'u8[1024]{0}', space=vmem, size = 0x400, scoped, tag = 'output window, operand 0, single buffered']
    %15 = vsyncpa [#allocation8], 0
    %16 = vsyncpa [#allocation11], 0
    %17 = vsyncpa [#allocation14], 0
    %18 = vsyncpa [#allocation9], 0
    // Predicated region
    $region2: #{tpu_custom_call.1} parent=1 // pred_check
      _
    $region3: #{tpu_custom_call.1} parent=1 // pred_check_branch
      %20 = sbr.rel (0) target = $region5
    $region4: #{tpu_custom_call.1} parent=1 // pred_region
      %22 = vsyncadd [#allocation8], 0
      %s23 = sshll.u32 %s0, 4
      %s24 = int_to_ptr.hbm [resolvable:$true] %s23
      %s25 = sshll.u32 [#allocation7], 4
      %s26 = int_to_ptr.vmem [resolvable:$true] %s25
      %31 = dma.hbm_to_vmem [thread:$0]  %s24, 256, %s26, [#allocation8], 128, 128, 8
    $region5: #{tpu_custom_call.1} parent=1 // pred_fallthru
      _
    // Predicated region
    $region6: #{tpu_custom_call.1} parent=1 // pred_check
      _
    $region7: #{tpu_custom_call.1} parent=1 // pred_check_branch
      %33 = sbr.rel (0) target = $region9
    $region8: #{tpu_custom_call.1} parent=1 // pred_region
      %35 = vsyncadd [#allocation11], 0
      %s36 = sshll.u32 %s1, 4
      %s37 = int_to_ptr.hbm [resolvable:$true] %s36
      %s38 = sshll.u32 [#allocation10], 4
      %s39 = int_to_ptr.vmem [resolvable:$true] %s38
      %44 = dma.hbm_to_vmem [thread:$0]  %s37, 512, %s39, [#allocation11], 256, 256, 16
    $region9: #{tpu_custom_call.1} parent=1 // pred_fallthru
      _
    // Predicated region
    $region10: #{tpu_custom_call.1} parent=1 // pred_check
      _
    $region11: #{tpu_custom_call.1} parent=1 // pred_check_branch
      %46 = sbr.rel (0) target = $region13
    $region12: #{tpu_custom_call.1} parent=1 // pred_region
      %48 = vsyncadd [#allocation11], 0
      %s49 = sshll.u32 %s2, 4
      %s50 = int_to_ptr.hbm [resolvable:$true] %s49
      %s51 = sshll.u32 [#allocation12], 4
      %s52 = int_to_ptr.vmem [resolvable:$true] %s51
      %57 = dma.hbm_to_vmem [thread:$0]  %s50, 4096, %s52, [#allocation11], 256, 256, 16
    $region13: #{tpu_custom_call.1} parent=1 // pred_fallthru
      _
    // Predicated region
    $region14: #{tpu_custom_call.1} parent=1 // pred_check
      _
    $region15: #{tpu_custom_call.1} parent=1 // pred_check_branch
      %59 = sbr.rel (0) target = $region17
    $region16: #{tpu_custom_call.1} parent=1 // pred_region
      _
    $region17: #{tpu_custom_call.1} parent=1 // pred_fallthru
      _
    // Predicated region
    $region18: #{tpu_custom_call.1} parent=1 // pred_check
      _
    $region19: #{tpu_custom_call.1} parent=1 // pred_check_branch
      %61 = sbr.rel (0) target = $region21
    $region20: #{tpu_custom_call.1} parent=1 // pred_region
      %63 = vsyncadd [#allocation14], 0
      %s64 = sshll.u32 %s4, 4
      %s65 = int_to_ptr.hbm [resolvable:$true] %s64
      %s66 = sshll.u32 [#allocation13], 4
      %s67 = int_to_ptr.vmem [resolvable:$true] %s66
      %72 = dma.hbm_to_vmem [thread:$0]  %s65, 1024, %s67, [#allocation14], 64, 64, 4
    $region21: #{tpu_custom_call.1} parent=1 // pred_fallthru
      _
    // Predicated region
    $region22: #{tpu_custom_call.1} parent=1 // pred_check
      _
    $region23: #{tpu_custom_call.1} parent=1 // pred_check_branch
      %74 = sbr.rel (0) target = $region25
    $region24: #{tpu_custom_call.1} parent=1 // pred_region
      _
    $region25: #{tpu_custom_call.1} parent=1 // pred_fallthru
      _
    // Predicated region
    $region26: #{tpu_custom_call.1} parent=1 // pred_check
      _
    $region27: #{tpu_custom_call.1} parent=1 // pred_check_branch
      %76 = sbr.rel (0) target = $region29
    $region28: #{tpu_custom_call.1} parent=1 // pred_region
      _
    $region29: #{tpu_custom_call.1} parent=1 // pred_fallthru
      _
    // Predicated region
    $region30: #{tpu_custom_call.1} parent=1 // pred_check
      _
    $region31: #{tpu_custom_call.1} parent=1 // pred_check_branch
      %78 = sbr.rel (0) target = $region33
    $region32: #{tpu_custom_call.1} parent=1 // pred_region
      _
    $region33: #{tpu_custom_call.1} parent=1 // pred_fallthru
      _
    // Predicated region
    $region34: #{tpu_custom_call.1} parent=1 // pred_check
      _
    $region35: #{tpu_custom_call.1} parent=1 // pred_check_branch
      %80 = sbr.rel (0) target = $region37
    $region36: #{tpu_custom_call.1} parent=1 // pred_region
      %82 = dma.done [#allocation8], 256
    $region37: #{tpu_custom_call.1} parent=1 // pred_fallthru
      _
    // Predicated region
    $region38: #{tpu_custom_call.1} parent=1 // pred_check
      _
    $region39: #{tpu_custom_call.1} parent=1 // pred_check_branch
      %84 = sbr.rel (0) target = $region41
    $region40: #{tpu_custom_call.1} parent=1 // pred_region
      %86 = dma.done [#allocation11], 512
    $region41: #{tpu_custom_call.1} parent=1 // pred_fallthru
      _
    // Predicated region
    $region42: #{tpu_custom_call.1} parent=1 // pred_check
      _
    $region43: #{tpu_custom_call.1} parent=1 // pred_check_branch
      %88 = sbr.rel (0) target = $region45
    $region44: #{tpu_custom_call.1} parent=1 // pred_region
      %90 = dma.done [#allocation11], 4096
    $region45: #{tpu_custom_call.1} parent=1 // pred_fallthru
      _
    // Predicated region
    $region46: #{tpu_custom_call.1} parent=1 // pred_check
      _
    $region47: #{tpu_custom_call.1} parent=1 // pred_check_branch
      %92 = sbr.rel (0) target = $region49
    $region48: #{tpu_custom_call.1} parent=1 // pred_region
      %94 = dma.done [#allocation14], 1024
    $region49: #{tpu_custom_call.1} parent=1 // pred_fallthru
      _
    %p96 = scmp.eq.s32.totalorder 0, 0
    // Predicated region
    $region50: #{tpu_custom_call.1} parent=1 // pred_check
      %p97 = pneg %p96
    $region51: #{tpu_custom_call.1} parent=1 // pred_check_branch
      %99 = sbr.rel (%p97) target = $region53
    $region52: #{tpu_custom_call.1} parent=1 // pred_region
      %100 = vst [vmem:[#allocation2] sm:$0x3] 0.0
      %101 = vst [vmem:[#allocation3] sm:$0x3] 0.0
    $region53: #{tpu_custom_call.1} parent=1 // pred_fallthru
      _
    %v102 = vld [vmem:[#allocation7] sm:$0xff]
    %v103 = vld [vmem:[#allocation7 + $0x8] sm:$0xff]
    %v104 = vpack.c.bf16 %v103, %v102
    %v105 = vld [vmem:[#allocation10] sm:$0xff]
    %v106 = vld [vmem:[#allocation10 + $0x8] sm:$0xff]
    %v107 = vld [vmem:[#allocation10 + $0x10] sm:$0xff]
    %v108 = vld [vmem:[#allocation10 + $0x18] sm:$0xff]
    %v109 = vld [vmem:[%s3] sm:$0xf]
    %v111 = vperm.slane %v109, 0
    %v112 = vperm.slane %v109, 1
    %v113 = vperm.slane %v109, 2
    %v114 = vperm.slane %v109, 3
    %v123 = vunpack.c.l.b16 %v105
    %v124 = vunpack.c.h.b16 %v105
    %v125 = vunpack.c.l.b16 %v106
    %v126 = vunpack.c.h.b16 %v106
    %v127 = vunpack.c.l.b16 %v107
    %v128 = vunpack.c.h.b16 %v107
    %v129 = vunpack.c.l.b16 %v108
    %v130 = vunpack.c.h.b16 %v108
    %v131 = vpack.c.b16 %v127, %v123
    %v132 = vpack.c.b16 %v128, %v124
    %v133 = vpack.c.b16 %v129, %v125
    %v134 = vpack.c.b16 %v130, %v126
    %vm139 = vcmask 130048
    %v141 = vsel %vm139, %v104, 0
    %143 = vmatpush.bf16.msra.mxu0 0
    %144 = vmatpush.bf16.msra.mxu0 0
    %145 = vmatpush.bf16.msra.mxu0 0
    %146 = vmatpush.bf16.msra.mxu0 0
    %147 = vmatpush.bf16.msra.mxu0 0
    %148 = vmatpush.bf16.msra.mxu0 0
    %149 = vmatpush.bf16.msra.mxu0 0
    %150 = vmatpush.bf16.msra.mxu0 %v131
    %151 = vmatmul.bf16.gmra.mxu0 %v141
    %v152 = vpop.f32.mrf.mxu0
    %v153 = vadd.f32 %v111, %v152
    %v154 = vpop.f32.mrf.mxu0
    %v155 = vadd.f32 %v111, %v154
    %156 = vdwg.mxu0
    %157 = vmatpush.bf16.msra.mxu0 0
    %158 = vmatpush.bf16.msra.mxu0 0
    %159 = vmatpush.bf16.msra.mxu0 0
    %160 = vmatpush.bf16.msra.mxu0 0
    %161 = vmatpush.bf16.msra.mxu0 0
    %162 = vmatpush.bf16.msra.mxu0 0
    %163 = vmatpush.bf16.msra.mxu0 0
    %164 = vmatpush.bf16.msra.mxu0 %v132
    %165 = vmatmul.bf16.gmra.mxu0 %v141
    %v166 = vpop.f32.mrf.mxu0
    %v167 = vadd.f32 %v112, %v166
    %v168 = vpop.f32.mrf.mxu0
    %v169 = vadd.f32 %v112, %v168
    %170 = vdwg.mxu0
    %171 = vmatpush.bf16.msra.mxu0 0
    %172 = vmatpush.bf16.msra.mxu0 0
    %173 = vmatpush.bf16.msra.mxu0 0
    %174 = vmatpush.bf16.msra.mxu0 0
    %175 = vmatpush.bf16.msra.mxu0 0
    %176 = vmatpush.bf16.msra.mxu0 0
    %177 = vmatpush.bf16.msra.mxu0 0
    %178 = vmatpush.bf16.msra.mxu0 %v133
    %179 = vmatmul.bf16.gmra.mxu0 %v141
    %v180 = vpop.f32.mrf.mxu0
    %v181 = vadd.f32 %v113, %v180
    %v182 = vpop.f32.mrf.mxu0
    %v183 = vadd.f32 %v113, %v182
    %184 = vdwg.mxu0
    %185 = vmatpush.bf16.msra.mxu0 0
    %186 = vmatpush.bf16.msra.mxu0 0
    %187 = vmatpush.bf16.msra.mxu0 0
    %188 = vmatpush.bf16.msra.mxu0 0
    %189 = vmatpush.bf16.msra.mxu0 0
    %190 = vmatpush.bf16.msra.mxu0 0
    %191 = vmatpush.bf16.msra.mxu0 0
    %192 = vmatpush.bf16.msra.mxu0 %v134
    %193 = vmatmul.bf16.gmra.mxu0 %v141
    %v194 = vpop.f32.mrf.mxu0
    %v195 = vadd.f32 %v114, %v194
    %v196 = vpop.f32.mrf.mxu0
    %v197 = vadd.f32 %v114, %v196
    %198 = vdwg.mxu0
    %v203 = vrot.slane %v167, 7
    %v204 = vrot.slane %v181, 6
    %v205 = vrot.slane %v195, 5
    %vm206 = vcmask 1040384
    %v207 = vsel %vm206, %v153, %v203
    %vm208 = vcmask 1042434
    %v209 = vsel %vm208, %v204, %v205
    %vm210 = vcmask 1041408
    %v211 = vsel %vm210, %v207, %v209
    %vm212 = vcmask 1041409
    %v213 = vsel %vm212, %v153, %v203
    %vm214 = vcmask 1043459
    %v215 = vsel %vm214, %v204, %v205
    %vm216 = vcmask 1042433
    %v217 = vsel %vm216, %v213, %v215
    %v218 = vrot.slane %v217, 1
    %v219 = vsel %vm208, %v153, %v203
    %vm220 = vcmask 1044484
    %v221 = vsel %vm220, %v204, %v205
    %vm222 = vcmask 1043458
    %v223 = vsel %vm222, %v219, %v221
    %v224 = vrot.slane %v223, 2
    %v225 = vsel %vm214, %v153, %v203
    %vm226 = vcmask 1045509
    %v227 = vsel %vm226, %v204, %v205
    %vm228 = vcmask 1044483
    %v229 = vsel %vm228, %v225, %v227
    %v230 = vrot.slane %v229, 3
    %v231 = vsel %vm220, %v153, %v203
    %vm232 = vcmask 1046534
    %v233 = vsel %vm232, %v204, %v205
    %vm234 = vcmask 1045508
    %v235 = vsel %vm234, %v231, %v233
    %v236 = vrot.slane %v235, 4
    %v237 = vsel %vm226, %v153, %v203
    %vm238 = vcmask 1046528
    %v239 = vsel %vm238, %v205, %v204
    %vm240 = vcmask 1046533
    %v241 = vsel %vm240, %v237, %v239
    %v242 = vrot.slane %v241, 5
    %v243 = vsel %vm232, %v153, %v203
    %v244 = vsel %vm206, %v204, %v205
    %vm245 = vcmask 1045504
    %v246 = vsel %vm245, %v244, %v243
    %v247 = vrot.slane %v246, 6
    %v248 = vsel %vm238, %v203, %v153
    %v249 = vsel %vm212, %v204, %v205
    %vm250 = vcmask 1046529
    %v251 = vsel %vm250, %v249, %v248
    %v252 = vrot.slane %v251, 7
    %v261 = vlaneseq
    %vm262 = vcmp.ge.s32.totalorder %v261, 0
    %vm263 = vcmp.lt.s32.totalorder %v261, 512
    %vm264 = vmand %vm262, %vm263
    %265 = vst.msk [vmem:[#allocation4] ss:$2 sm:$0xf] %vm264, %v211
    %s266 = scalar_lea.vmem [#allocation4], 8
    %267 = vst.msk [vmem:[%s266] ss:$2 sm:$0xf] %vm264, %v218
    %s268 = scalar_lea.vmem [#allocation4], 16
    %269 = vst.msk [vmem:[%s268] ss:$2 sm:$0xf] %vm264, %v224
    %s270 = scalar_lea.vmem [#allocation4], 24
    %271 = vst.msk [vmem:[%s270] ss:$2 sm:$0xf] %vm264, %v230
    %s272 = scalar_lea.vmem [#allocation4], 32
    %273 = vst.msk [vmem:[%s272] ss:$2 sm:$0xf] %vm264, %v236
    %s274 = scalar_lea.vmem [#allocation4], 40
    %275 = vst.msk [vmem:[%s274] ss:$2 sm:$0xf] %vm264, %v242
    %s276 = scalar_lea.vmem [#allocation4], 48
    %277 = vst.msk [vmem:[%s276] ss:$2 sm:$0xf] %vm264, %v247
    %s278 = scalar_lea.vmem [#allocation4], 56
    %279 = vst.msk [vmem:[%s278] ss:$2 sm:$0xf] %vm264, %v252
    %v284 = vrot.slane %v169, 7
    %v285 = vrot.slane %v183, 6
    %v286 = vrot.slane %v197, 5
    %v287 = vsel %vm206, %v155, %v284
    %v288 = vsel %vm208, %v285, %v286
    %v289 = vsel %vm210, %v287, %v288
    %v290 = vsel %vm212, %v155, %v284
    %v291 = vsel %vm214, %v285, %v286
    %v292 = vsel %vm216, %v290, %v291
    %v293 = vrot.slane %v292, 1
    %v294 = vsel %vm208, %v155, %v284
    %v295 = vsel %vm220, %v285, %v286
    %v296 = vsel %vm222, %v294, %v295
    %v297 = vrot.slane %v296, 2
    %v298 = vsel %vm214, %v155, %v284
    %v299 = vsel %vm226, %v285, %v286
    %v300 = vsel %vm228, %v298, %v299
    %v301 = vrot.slane %v300, 3
    %v302 = vsel %vm220, %v155, %v284
    %v303 = vsel %vm232, %v285, %v286
    %v304 = vsel %vm234, %v302, %v303
    %v305 = vrot.slane %v304, 4
    %v306 = vsel %vm226, %v155, %v284
    %v307 = vsel %vm238, %v286, %v285
    %v308 = vsel %vm240, %v306, %v307
    %v309 = vrot.slane %v308, 5
    %v310 = vsel %vm232, %v155, %v284
    %v311 = vsel %vm206, %v285, %v286
    %v312 = vsel %vm245, %v311, %v310
    %v313 = vrot.slane %v312, 6
    %v314 = vsel %vm238, %v284, %v155
    %v315 = vsel %vm212, %v285, %v286
    %v316 = vsel %vm250, %v315, %v314
    %v317 = vrot.slane %v316, 7
    %s326 = scalar_lea.vmem [#allocation4], 1
    %327 = vst.msk [vmem:[%s326] ss:$2 sm:$0xf] %vm264, %v289
    %s328 = scalar_lea.vmem [#allocation4], 9
    %329 = vst.msk [vmem:[%s328] ss:$2 sm:$0xf] %vm264, %v293
    %s330 = scalar_lea.vmem [#allocation4], 17
    %331 = vst.msk [vmem:[%s330] ss:$2 sm:$0xf] %vm264, %v297
    %s332 = scalar_lea.vmem [#allocation4], 25
    %333 = vst.msk [vmem:[%s332] ss:$2 sm:$0xf] %vm264, %v301
    %s334 = scalar_lea.vmem [#allocation4], 33
    %335 = vst.msk [vmem:[%s334] ss:$2 sm:$0xf] %vm264, %v305
    %s336 = scalar_lea.vmem [#allocation4], 41
    %337 = vst.msk [vmem:[%s336] ss:$2 sm:$0xf] %vm264, %v309
    %s338 = scalar_lea.vmem [#allocation4], 49
    %339 = vst.msk [vmem:[%s338] ss:$2 sm:$0xf] %vm264, %v313
    %s340 = scalar_lea.vmem [#allocation4], 57
    %341 = vst.msk [vmem:[%s340] ss:$2 sm:$0xf] %vm264, %v317
    %v342 = vld [vmem:[#allocation2] sm:$0x3]
    %v343 = vld [vmem:[#allocation3] sm:$0x3]
    %v344 = vld [vmem:[#allocation4] sm:$0xff]
    %v345 = vpack.c.bf16 %v342, %v342
    %v346 = vld [vmem:[#allocation12] sm:$0xff]
    %v347 = vld [vmem:[#allocation12 + $0x8] sm:$0xff]
    %v348 = vld [vmem:[#allocation12 + $0x10] sm:$0xff]
    %v349 = vld [vmem:[#allocation12 + $0x18] sm:$0xff]
    %v350 = vld [vmem:[#allocation12 + $0x20] sm:$0xff]
    %v351 = vld [vmem:[#allocation12 + $0x28] sm:$0xff]
    %v352 = vld [vmem:[#allocation12 + $0x30] sm:$0xff]
    %v353 = vld [vmem:[#allocation12 + $0x38] sm:$0xff]
    %v354 = vld [vmem:[#allocation12 + $0x40] sm:$0xff]
    %v355 = vld [vmem:[#allocation12 + $0x48] sm:$0xff]
    %v356 = vld [vmem:[#allocation12 + $0x50] sm:$0xff]
    %v357 = vld [vmem:[#allocation12 + $0x58] sm:$0xff]
    %v358 = vld [vmem:[#allocation12 + $0x60] sm:$0xff]
    %v359 = vld [vmem:[#allocation12 + $0x68] sm:$0xff]
    %v360 = vld [vmem:[#allocation12 + $0x70] sm:$0xff]
    %v361 = vld [vmem:[#allocation12 + $0x78] sm:$0xff]
    %v362 = vld [vmem:[#allocation12 + $0x80] sm:$0xff]
    %v363 = vld [vmem:[#allocation12 + $0x88] sm:$0xff]
    %v364 = vld [vmem:[#allocation12 + $0x90] sm:$0xff]
    %v365 = vld [vmem:[#allocation12 + $0x98] sm:$0xff]
    %v366 = vld [vmem:[#allocation12 + $0xa0] sm:$0xff]
    %v367 = vld [vmem:[#allocation12 + $0xa8] sm:$0xff]
    %v368 = vld [vmem:[#allocation12 + $0xb0] sm:$0xff]
    %v369 = vld [vmem:[#allocation12 + $0xb8] sm:$0xff]
    %v370 = vld [vmem:[#allocation12 + $0xc0] sm:$0xff]
    %v371 = vld [vmem:[#allocation12 + $0xc8] sm:$0xff]
    %v372 = vld [vmem:[#allocation12 + $0xd0] sm:$0xff]
    %v373 = vld [vmem:[#allocation12 + $0xd8] sm:$0xff]
    %v374 = vld [vmem:[#allocation12 + $0xe0] sm:$0xff]
    %v375 = vld [vmem:[#allocation12 + $0xe8] sm:$0xff]
    %v376 = vld [vmem:[#allocation12 + $0xf0] sm:$0xff]
    %v377 = vld [vmem:[#allocation12 + $0xf8] sm:$0xff]
    %v410 = vunpack.c.l.b16 %v346
    %v411 = vunpack.c.h.b16 %v346
    %v412 = vunpack.c.l.b16 %v347
    %v413 = vunpack.c.h.b16 %v347
    %v414 = vunpack.c.l.b16 %v348
    %v415 = vunpack.c.h.b16 %v348
    %v416 = vunpack.c.l.b16 %v349
    %v417 = vunpack.c.h.b16 %v349
    %v418 = vunpack.c.l.b16 %v350
    %v419 = vunpack.c.h.b16 %v350
    %v420 = vunpack.c.l.b16 %v351
    %v421 = vunpack.c.h.b16 %v351
    %v422 = vunpack.c.l.b16 %v352
    %v423 = vunpack.c.h.b16 %v352
    %v424 = vunpack.c.l.b16 %v353
    %v425 = vunpack.c.h.b16 %v353
    %v426 = vunpack.c.l.b16 %v354
    %v427 = vunpack.c.h.b16 %v354
    %v428 = vunpack.c.l.b16 %v355
    %v429 = vunpack.c.h.b16 %v355
    %v430 = vunpack.c.l.b16 %v356
    %v431 = vunpack.c.h.b16 %v356
    %v432 = vunpack.c.l.b16 %v357
    %v433 = vunpack.c.h.b16 %v357
    %v434 = vunpack.c.l.b16 %v358
    %v435 = vunpack.c.h.b16 %v358
    %v436 = vunpack.c.l.b16 %v359
    %v437 = vunpack.c.h.b16 %v359
    %v438 = vunpack.c.l.b16 %v360
    %v439 = vunpack.c.h.b16 %v360
    %v440 = vunpack.c.l.b16 %v361
    %v441 = vunpack.c.h.b16 %v361
    %v442 = vunpack.c.l.b16 %v362
    %v443 = vunpack.c.h.b16 %v362
    %v444 = vunpack.c.l.b16 %v363
    %v445 = vunpack.c.h.b16 %v363
    %v446 = vunpack.c.l.b16 %v364
    %v447 = vunpack.c.h.b16 %v364
    %v448 = vunpack.c.l.b16 %v365
    %v449 = vunpack.c.h.b16 %v365
    %v450 = vunpack.c.l.b16 %v366
    %v451 = vunpack.c.h.b16 %v366
    %v452 = vunpack.c.l.b16 %v367
    %v453 = vunpack.c.h.b16 %v367
    %v454 = vunpack.c.l.b16 %v368
    %v455 = vunpack.c.h.b16 %v368
    %v456 = vunpack.c.l.b16 %v369
    %v457 = vunpack.c.h.b16 %v369
    %v458 = vunpack.c.l.b16 %v370
    %v459 = vunpack.c.h.b16 %v370
    %v460 = vunpack.c.l.b16 %v371
    %v461 = vunpack.c.h.b16 %v371
    %v462 = vunpack.c.l.b16 %v372
    %v463 = vunpack.c.h.b16 %v372
    %v464 = vunpack.c.l.b16 %v373
    %v465 = vunpack.c.h.b16 %v373
    %v466 = vunpack.c.l.b16 %v374
    %v467 = vunpack.c.h.b16 %v374
    %v468 = vunpack.c.l.b16 %v375
    %v469 = vunpack.c.h.b16 %v375
    %v470 = vunpack.c.l.b16 %v376
    %v471 = vunpack.c.h.b16 %v376
    %v472 = vunpack.c.l.b16 %v377
    %v473 = vunpack.c.h.b16 %v377
    %v474 = vpack.c.b16 %v414, %v410
    %v475 = vpack.c.b16 %v415, %v411
    %v476 = vpack.c.b16 %v416, %v412
    %v477 = vpack.c.b16 %v417, %v413
    %v478 = vpack.c.b16 %v422, %v418
    %v479 = vpack.c.b16 %v423, %v419
    %v480 = vpack.c.b16 %v424, %v420
    %v481 = vpack.c.b16 %v425, %v421
    %v482 = vpack.c.b16 %v430, %v426
    %v483 = vpack.c.b16 %v431, %v427
    %v484 = vpack.c.b16 %v432, %v428
    %v485 = vpack.c.b16 %v433, %v429
    %v486 = vpack.c.b16 %v438, %v434
    %v487 = vpack.c.b16 %v439, %v435
    %v488 = vpack.c.b16 %v440, %v436
    %v489 = vpack.c.b16 %v441, %v437
    %v490 = vpack.c.b16 %v446, %v442
    %v491 = vpack.c.b16 %v447, %v443
    %v492 = vpack.c.b16 %v448, %v444
    %v493 = vpack.c.b16 %v449, %v445
    %v494 = vpack.c.b16 %v454, %v450
    %v495 = vpack.c.b16 %v455, %v451
    %v496 = vpack.c.b16 %v456, %v452
    %v497 = vpack.c.b16 %v457, %v453
    %v498 = vpack.c.b16 %v462, %v458
    %v499 = vpack.c.b16 %v463, %v459
    %v500 = vpack.c.b16 %v464, %v460
    %v501 = vpack.c.b16 %v465, %v461
    %v502 = vpack.c.b16 %v470, %v466
    %v503 = vpack.c.b16 %v471, %v467
    %v504 = vpack.c.b16 %v472, %v468
    %v505 = vpack.c.b16 %v473, %v469
    %538 = vmatpush.bf16.msra.mxu0 %v502
    %539 = vmatpush.bf16.msra.mxu0 %v498
    %540 = vmatpush.bf16.msra.mxu0 %v494
    %541 = vmatpush.bf16.msra.mxu0 %v490
    %542 = vmatpush.bf16.msra.mxu0 %v486
    %543 = vmatpush.bf16.msra.mxu0 %v482
    %544 = vmatpush.bf16.msra.mxu0 %v478
    %545 = vmatpush.bf16.msra.mxu0 %v474
    %546 = vmatmul.bf16.gmra.mxu0 %v345
    %v547 = vpop.f32.mrf.mxu0
    %v548 = vadd.f32 0.0, %v547
    %v549 = vpop.f32.mrf.mxu0
    %550 = vdwg.mxu0
    %551 = vmatpush.bf16.msra.mxu0 %v503
    %552 = vmatpush.bf16.msra.mxu0 %v499
    %553 = vmatpush.bf16.msra.mxu0 %v495
    %554 = vmatpush.bf16.msra.mxu0 %v491
    %555 = vmatpush.bf16.msra.mxu0 %v487
    %556 = vmatpush.bf16.msra.mxu0 %v483
    %557 = vmatpush.bf16.msra.mxu0 %v479
    %558 = vmatpush.bf16.msra.mxu0 %v475
    %559 = vmatmul.bf16.gmra.mxu0 %v345
    %v560 = vpop.f32.mrf.mxu0
    %v561 = vadd.f32 0.0, %v560
    %v562 = vpop.f32.mrf.mxu0
    %563 = vdwg.mxu0
    %564 = vmatpush.bf16.msra.mxu0 %v504
    %565 = vmatpush.bf16.msra.mxu0 %v500
    %566 = vmatpush.bf16.msra.mxu0 %v496
    %567 = vmatpush.bf16.msra.mxu0 %v492
    %568 = vmatpush.bf16.msra.mxu0 %v488
    %569 = vmatpush.bf16.msra.mxu0 %v484
    %570 = vmatpush.bf16.msra.mxu0 %v480
    %571 = vmatpush.bf16.msra.mxu0 %v476
    %572 = vmatmul.bf16.gmra.mxu0 %v345
    %v573 = vpop.f32.mrf.mxu0
    %v574 = vadd.f32 0.0, %v573
    %v575 = vpop.f32.mrf.mxu0
    %576 = vdwg.mxu0
    %577 = vmatpush.bf16.msra.mxu0 %v505
    %578 = vmatpush.bf16.msra.mxu0 %v501
    %579 = vmatpush.bf16.msra.mxu0 %v497
    %580 = vmatpush.bf16.msra.mxu0 %v493
    %581 = vmatpush.bf16.msra.mxu0 %v489
    %582 = vmatpush.bf16.msra.mxu0 %v485
    %583 = vmatpush.bf16.msra.mxu0 %v481
    %584 = vmatpush.bf16.msra.mxu0 %v477
    %585 = vmatmul.bf16.gmra.mxu0 %v345
    %v586 = vpop.f32.mrf.mxu0
    %v587 = vadd.f32 0.0, %v586
    %v588 = vpop.f32.mrf.mxu0
    %589 = vdwg.mxu0
    %v594 = vrot.slane %v561, 6
    %v595 = vrot.slane %v574, 4
    %v596 = vrot.slane %v587, 2
    %v597 = vsel %vm210, %v548, %v594
    %v598 = vsel %vm234, %v595, %v596
    %vm599 = vcmask 1043456
    %v600 = vsel %vm599, %v597, %v598
    %v602 = vadd.f32 %v344, %v600
    %v603 = vxor.u32 %v602, 2147483648
    %v604 = vmul.f32 %v603, 1.442695
    %v605 = vpow.pop %v604
    %v606 = vadd.f32 %v605, 1.0
    %v607 = vrcp.pop %v606
    %v608 = vmul.f32 %v606, %v607
    %v609 = vsub.f32 1.0, %v608
    %v610 = vmul.f32 %v607, %v609
    %v611 = vadd.f32 %v607, %v610
    %vm612 = vweird.f32 %v606
    %vm613 = vweird.f32 %v607
    %vm614 = vmor %vm612, %vm613
    %v615 = vsel %vm614, %v607, %v611
    %v616 = vand.u32 2147483647, %v606
    %vm617 = vcmp.eq.f32.partialorder %v616, 8.507059e+37
    %v618 = vand.u32 %v606, 2147483648
    %v619 = vor.u32 1.1754944e-38, %v618
    %v620 = vsel %vm617, %v619, %v615
    %v621 = vmul.f32 1.0, %v620
    %v623 = vrot.slane %v602, 2
    %v625 = vxor.u32 %v623, 2147483648
    %v626 = vmul.f32 %v625, 1.442695
    %v627 = vpow.pop %v626
    %v628 = vadd.f32 %v627, 1.0
    %v629 = vrcp.pop %v628
    %v630 = vmul.f32 %v628, %v629
    %v631 = vsub.f32 1.0, %v630
    %v632 = vmul.f32 %v629, %v631
    %v633 = vadd.f32 %v629, %v632
    %vm634 = vweird.f32 %v628
    %vm635 = vweird.f32 %v629
    %vm636 = vmor %vm634, %vm635
    %v637 = vsel %vm636, %v629, %v633
    %v638 = vand.u32 2147483647, %v628
    %vm639 = vcmp.eq.f32.partialorder %v638, 8.507059e+37
    %v640 = vand.u32 %v628, 2147483648
    %v641 = vor.u32 1.1754944e-38, %v640
    %v642 = vsel %vm639, %v641, %v637
    %v643 = vmul.f32 1.0, %v642
    %v644 = vrot.slane %v602, 4
    %v646 = vtanh.pop %v644
    %v647 = vrot.slane %v602, 6
    %v649 = vxor.u32 %v647, 2147483648
    %v650 = vmul.f32 %v649, 1.442695
    %v651 = vpow.pop %v650
    %v652 = vadd.f32 %v651, 1.0
    %v653 = vrcp.pop %v652
    %v654 = vmul.f32 %v652, %v653
    %v655 = vsub.f32 1.0, %v654
    %v656 = vmul.f32 %v653, %v655
    %v657 = vadd.f32 %v653, %v656
    %vm658 = vweird.f32 %v652
    %vm659 = vweird.f32 %v653
    %vm660 = vmor %vm658, %vm659
    %v661 = vsel %vm660, %v653, %v657
    %v662 = vand.u32 2147483647, %v652
    %vm663 = vcmp.eq.f32.partialorder %v662, 8.507059e+37
    %v664 = vand.u32 %v652, 2147483648
    %v665 = vor.u32 1.1754944e-38, %v664
    %v666 = vsel %vm663, %v665, %v661
    %v667 = vmul.f32 1.0, %v666
    %v668 = vmul.f32 %v643, %v343
    %v669 = vmul.f32 %v621, %v646
    %v670 = vadd.f32 %v668, %v669
    %v671 = vtanh.pop %v670
    %v672 = vmul.f32 %v667, %v671
    %673 = vst [vmem:[#allocation5] sm:$0x3] %v672
    %s674 = scalar_lea.vmem [#allocation4], 8
    %v675 = vld [vmem:[%s674] sm:$0xff]
    %v676 = vpack.c.bf16 %v672, %v672
    %v677 = vld [vmem:[#allocation12] sm:$0xff]
    %v678 = vld [vmem:[#allocation12 + $0x8] sm:$0xff]
    %v679 = vld [vmem:[#allocation12 + $0x10] sm:$0xff]
    %v680 = vld [vmem:[#allocation12 + $0x18] sm:$0xff]
    %v681 = vld [vmem:[#allocation12 + $0x20] sm:$0xff]
    %v682 = vld [vmem:[#allocation12 + $0x28] sm:$0xff]
    %v683 = vld [vmem:[#allocation12 + $0x30] sm:$0xff]
    %v684 = vld [vmem:[#allocation12 + $0x38] sm:$0xff]
    %v685 = vld [vmem:[#allocation12 + $0x40] sm:$0xff]
    %v686 = vld [vmem:[#allocation12 + $0x48] sm:$0xff]
    %v687 = vld [vmem:[#allocation12 + $0x50] sm:$0xff]
    %v688 = vld [vmem:[#allocation12 + $0x58] sm:$0xff]
    %v689 = vld [vmem:[#allocation12 + $0x60] sm:$0xff]
    %v690 = vld [vmem:[#allocation12 + $0x68] sm:$0xff]
    %v691 = vld [vmem:[#allocation12 + $0x70] sm:$0xff]
    %v692 = vld [vmem:[#allocation12 + $0x78] sm:$0xff]
    %v693 = vld [vmem:[#allocation12 + $0x80] sm:$0xff]
    %v694 = vld [vmem:[#allocation12 + $0x88] sm:$0xff]
    %v695 = vld [vmem:[#allocation12 + $0x90] sm:$0xff]
    %v696 = vld [vmem:[#allocation12 + $0x98] sm:$0xff]
    %v697 = vld [vmem:[#allocation12 + $0xa0] sm:$0xff]
    %v698 = vld [vmem:[#allocation12 + $0xa8] sm:$0xff]
    %v699 = vld [vmem:[#allocation12 + $0xb0] sm:$0xff]
    %v700 = vld [vmem:[#allocation12 + $0xb8] sm:$0xff]
    %v701 = vld [vmem:[#allocation12 + $0xc0] sm:$0xff]
    %v702 = vld [vmem:[#allocation12 + $0xc8] sm:$0xff]
    %v703 = vld [vmem:[#allocation12 + $0xd0] sm:$0xff]
    %v704 = vld [vmem:[#allocation12 + $0xd8] sm:$0xff]
    %v705 = vld [vmem:[#allocation12 + $0xe0] sm:$0xff]
    %v706 = vld [vmem:[#allocation12 + $0xe8] sm:$0xff]
    %v707 = vld [vmem:[#allocation12 + $0xf0] sm:$0xff]
    %v708 = vld [vmem:[#allocation12 + $0xf8] sm:$0xff]
    %v741 = vunpack.c.l.b16 %v677
    %v742 = vunpack.c.h.b16 %v677
    %v743 = vunpack.c.l.b16 %v678
    %v744 = vunpack.c.h.b16 %v678
    %v745 = vunpack.c.l.b16 %v679
    %v746 = vunpack.c.h.b16 %v679
    %v747 = vunpack.c.l.b16 %v680
    %v748 = vunpack.c.h.b16 %v680
    %v749 = vunpack.c.l.b16 %v681
    %v750 = vunpack.c.h.b16 %v681
    %v751 = vunpack.c.l.b16 %v682
    %v752 = vunpack.c.h.b16 %v682
    %v753 = vunpack.c.l.b16 %v683
    %v754 = vunpack.c.h.b16 %v683
    %v755 = vunpack.c.l.b16 %v684
    %v756 = vunpack.c.h.b16 %v684
    %v757 = vunpack.c.l.b16 %v685
    %v758 = vunpack.c.h.b16 %v685
    %v759 = vunpack.c.l.b16 %v686
    %v760 = vunpack.c.h.b16 %v686
    %v761 = vunpack.c.l.b16 %v687
    %v762 = vunpack.c.h.b16 %v687
    %v763 = vunpack.c.l.b16 %v688
    %v764 = vunpack.c.h.b16 %v688
    %v765 = vunpack.c.l.b16 %v689
    %v766 = vunpack.c.h.b16 %v689
    %v767 = vunpack.c.l.b16 %v690
    %v768 = vunpack.c.h.b16 %v690
    %v769 = vunpack.c.l.b16 %v691
    %v770 = vunpack.c.h.b16 %v691
    %v771 = vunpack.c.l.b16 %v692
    %v772 = vunpack.c.h.b16 %v692
    %v773 = vunpack.c.l.b16 %v693
    %v774 = vunpack.c.h.b16 %v693
    %v775 = vunpack.c.l.b16 %v694
    %v776 = vunpack.c.h.b16 %v694
    %v777 = vunpack.c.l.b16 %v695
    %v778 = vunpack.c.h.b16 %v695
    %v779 = vunpack.c.l.b16 %v696
    %v780 = vunpack.c.h.b16 %v696
    %v781 = vunpack.c.l.b16 %v697
    %v782 = vunpack.c.h.b16 %v697
    %v783 = vunpack.c.l.b16 %v698
    %v784 = vunpack.c.h.b16 %v698
    %v785 = vunpack.c.l.b16 %v699
    %v786 = vunpack.c.h.b16 %v699
    %v787 = vunpack.c.l.b16 %v700
    %v788 = vunpack.c.h.b16 %v700
    %v789 = vunpack.c.l.b16 %v701
    %v790 = vunpack.c.h.b16 %v701
    %v791 = vunpack.c.l.b16 %v702
    %v792 = vunpack.c.h.b16 %v702
    %v793 = vunpack.c.l.b16 %v703
    %v794 = vunpack.c.h.b16 %v703
    %v795 = vunpack.c.l.b16 %v704
    %v796 = vunpack.c.h.b16 %v704
    %v797 = vunpack.c.l.b16 %v705
    %v798 = vunpack.c.h.b16 %v705
    %v799 = vunpack.c.l.b16 %v706
    %v800 = vunpack.c.h.b16 %v706
    %v801 = vunpack.c.l.b16 %v707
    %v802 = vunpack.c.h.b16 %v707
    %v803 = vunpack.c.l.b16 %v708
    %v804 = vunpack.c.h.b16 %v708
    %v805 = vpack.c.b16 %v745, %v741
    %v806 = vpack.c.b16 %v746, %v742
    %v807 = vpack.c.b16 %v747, %v743
    %v808 = vpack.c.b16 %v748, %v744
    %v809 = vpack.c.b16 %v753, %v749
    %v810 = vpack.c.b16 %v754, %v750
    %v811 = vpack.c.b16 %v755, %v751
    %v812 = vpack.c.b16 %v756, %v752
    %v813 = vpack.c.b16 %v761, %v757
    %v814 = vpack.c.b16 %v762, %v758
    %v815 = vpack.c.b16 %v763, %v759
    %v816 = vpack.c.b16 %v764, %v760
    %v817 = vpack.c.b16 %v769, %v765
    %v818 = vpack.c.b16 %v770, %v766
    %v819 = vpack.c.b16 %v771, %v767
    %v820 = vpack.c.b16 %v772, %v768
    %v821 = vpack.c.b16 %v777, %v773
    %v822 = vpack.c.b16 %v778, %v774
    %v823 = vpack.c.b16 %v779, %v775
    %v824 = vpack.c.b16 %v780, %v776
    %v825 = vpack.c.b16 %v785, %v781
    %v826 = vpack.c.b16 %v786, %v782
    %v827 = vpack.c.b16 %v787, %v783
    %v828 = vpack.c.b16 %v788, %v784
    %v829 = vpack.c.b16 %v793, %v789
    %v830 = vpack.c.b16 %v794, %v790
    %v831 = vpack.c.b16 %v795, %v791
    %v832 = vpack.c.b16 %v796, %v792
    %v833 = vpack.c.b16 %v801, %v797
    %v834 = vpack.c.b16 %v802, %v798
    %v835 = vpack.c.b16 %v803, %v799
    %v836 = vpack.c.b16 %v804, %v800
    %869 = vmatpush.bf16.msra.mxu0 %v833
    %870 = vmatpush.bf16.msra.mxu0 %v829
    %871 = vmatpush.bf16.msra.mxu0 %v825
    %872 = vmatpush.bf16.msra.mxu0 %v821
    %873 = vmatpush.bf16.msra.mxu0 %v817
    %874 = vmatpush.bf16.msra.mxu0 %v813
    %875 = vmatpush.bf16.msra.mxu0 %v809
    %876 = vmatpush.bf16.msra.mxu0 %v805
    %877 = vmatmul.bf16.gmra.mxu0 %v676
    %v878 = vpop.f32.mrf.mxu0
    %v879 = vadd.f32 0.0, %v878
    %v880 = vpop.f32.mrf.mxu0
    %881 = vdwg.mxu0
    %882 = vmatpush.bf16.msra.mxu0 %v834
    %883 = vmatpush.bf16.msra.mxu0 %v830
    %884 = vmatpush.bf16.msra.mxu0 %v826
    %885 = vmatpush.bf16.msra.mxu0 %v822
    %886 = vmatpush.bf16.msra.mxu0 %v818
    %887 = vmatpush.bf16.msra.mxu0 %v814
    %888 = vmatpush.bf16.msra.mxu0 %v810
    %889 = vmatpush.bf16.msra.mxu0 %v806
    %890 = vmatmul.bf16.gmra.mxu0 %v676
    %v891 = vpop.f32.mrf.mxu0
    %v892 = vadd.f32 0.0, %v891
    %v893 = vpop.f32.mrf.mxu0
    %894 = vdwg.mxu0
    %895 = vmatpush.bf16.msra.mxu0 %v835
    %896 = vmatpush.bf16.msra.mxu0 %v831
    %897 = vmatpush.bf16.msra.mxu0 %v827
    %898 = vmatpush.bf16.msra.mxu0 %v823
    %899 = vmatpush.bf16.msra.mxu0 %v819
    %900 = vmatpush.bf16.msra.mxu0 %v815
    %901 = vmatpush.bf16.msra.mxu0 %v811
    %902 = vmatpush.bf16.msra.mxu0 %v807
    %903 = vmatmul.bf16.gmra.mxu0 %v676
    %v904 = vpop.f32.mrf.mxu0
    %v905 = vadd.f32 0.0, %v904
    %v906 = vpop.f32.mrf.mxu0
    %907 = vdwg.mxu0
    %908 = vmatpush.bf16.msra.mxu0 %v836
    %909 = vmatpush.bf16.msra.mxu0 %v832
    %910 = vmatpush.bf16.msra.mxu0 %v828
    %911 = vmatpush.bf16.msra.mxu0 %v824
    %912 = vmatpush.bf16.msra.mxu0 %v820
    %913 = vmatpush.bf16.msra.mxu0 %v816
    %914 = vmatpush.bf16.msra.mxu0 %v812
    %915 = vmatpush.bf16.msra.mxu0 %v808
    %916 = vmatmul.bf16.gmra.mxu0 %v676
    %v917 = vpop.f32.mrf.mxu0
    %v918 = vadd.f32 0.0, %v917
    %v919 = vpop.f32.mrf.mxu0
    %920 = vdwg.mxu0
    %v925 = vrot.slane %v892, 6
    %v926 = vrot.slane %v905, 4
    %v927 = vrot.slane %v918, 2
    %v928 = vsel %vm210, %v879, %v925
    %v929 = vsel %vm234, %v926, %v927
    %v930 = vsel %vm599, %v928, %v929
    %v932 = vadd.f32 %v675, %v930
    %v933 = vxor.u32 %v932, 2147483648
    %v934 = vmul.f32 %v933, 1.442695
    %v935 = vpow.pop %v934
    %v936 = vadd.f32 %v935, 1.0
    %v937 = vrcp.pop %v936
    %v938 = vmul.f32 %v936, %v937
    %v939 = vsub.f32 1.0, %v938
    %v940 = vmul.f32 %v937, %v939
    %v941 = vadd.f32 %v937, %v940
    %vm942 = vweird.f32 %v936
    %vm943 = vweird.f32 %v937
    %vm944 = vmor %vm942, %vm943
    %v945 = vsel %vm944, %v937, %v941
    %v946 = vand.u32 2147483647, %v936
    %vm947 = vcmp.eq.f32.partialorder %v946, 8.507059e+37
    %v948 = vand.u32 %v936, 2147483648
    %v949 = vor.u32 1.1754944e-38, %v948
    %v950 = vsel %vm947, %v949, %v945
    %v951 = vmul.f32 1.0, %v950
    %v953 = vrot.slane %v932, 2
    %v955 = vxor.u32 %v953, 2147483648
    %v956 = vmul.f32 %v955, 1.442695
    %v957 = vpow.pop %v956
    %v958 = vadd.f32 %v957, 1.0
    %v959 = vrcp.pop %v958
    %v960 = vmul.f32 %v958, %v959
    %v961 = vsub.f32 1.0, %v960
    %v962 = vmul.f32 %v959, %v961
    %v963 = vadd.f32 %v959, %v962
    %vm964 = vweird.f32 %v958
    %vm965 = vweird.f32 %v959
    %vm966 = vmor %vm964, %vm965
    %v967 = vsel %vm966, %v959, %v963
    %v968 = vand.u32 2147483647, %v958
    %vm969 = vcmp.eq.f32.partialorder %v968, 8.507059e+37
    %v970 = vand.u32 %v958, 2147483648
    %v971 = vor.u32 1.1754944e-38, %v970
    %v972 = vsel %vm969, %v971, %v967
    %v973 = vmul.f32 1.0, %v972
    %v974 = vrot.slane %v932, 4
    %v976 = vtanh.pop %v974
    %v977 = vrot.slane %v932, 6
    %v979 = vxor.u32 %v977, 2147483648
    %v980 = vmul.f32 %v979, 1.442695
    %v981 = vpow.pop %v980
    %v982 = vadd.f32 %v981, 1.0
    %v983 = vrcp.pop %v982
    %v984 = vmul.f32 %v982, %v983
    %v985 = vsub.f32 1.0, %v984
    %v986 = vmul.f32 %v983, %v985
    %v987 = vadd.f32 %v983, %v986
    %vm988 = vweird.f32 %v982
    %vm989 = vweird.f32 %v983
    %vm990 = vmor %vm988, %vm989
    %v991 = vsel %vm990, %v983, %v987
    %v992 = vand.u32 2147483647, %v982
    %vm993 = vcmp.eq.f32.partialorder %v992, 8.507059e+37
    %v994 = vand.u32 %v982, 2147483648
    %v995 = vor.u32 1.1754944e-38, %v994
    %v996 = vsel %vm993, %v995, %v991
    %v997 = vmul.f32 1.0, %v996
    %v998 = vmul.f32 %v973, %v670
    %v999 = vmul.f32 %v951, %v976
    %v1000 = vadd.f32 %v998, %v999
    %v1001 = vtanh.pop %v1000
    %v1002 = vmul.f32 %v997, %v1001
    %s1003 = scalar_lea.vmem [#allocation5], 2
    %1004 = vst [vmem:[%s1003] sm:$0x3] %v1002
    %s1005 = scalar_lea.vmem [#allocation4], 16
    %v1006 = vld [vmem:[%s1005] sm:$0xff]
    %v1007 = vpack.c.bf16 %v1002, %v1002
    %v1008 = vld [vmem:[#allocation12] sm:$0xff]
    %v1009 = vld [vmem:[#allocation12 + $0x8] sm:$0xff]
    %v1010 = vld [vmem:[#allocation12 + $0x10] sm:$0xff]
    %v1011 = vld [vmem:[#allocation12 + $0x18] sm:$0xff]
    %v1012 = vld [vmem:[#allocation12 + $0x20] sm:$0xff]
    %v1013 = vld [vmem:[#allocation12 + $0x28] sm:$0xff]
    %v1014 = vld [vmem:[#allocation12 + $0x30] sm:$0xff]
    %v1015 = vld [vmem:[#allocation12 + $0x38] sm:$0xff]
    %v1016 = vld [vmem:[#allocation12 + $0x40] sm:$0xff]
    %v1017 = vld [vmem:[#allocation12 + $0x48] sm:$0xff]
    %v1018 = vld [vmem:[#allocation12 + $0x50] sm:$0xff]
    %v1019 = vld [vmem:[#allocation12 + $0x58] sm:$0xff]
    %v1020 = vld [vmem:[#allocation12 + $0x60] sm:$0xff]
    %v1021 = vld [vmem:[#allocation12 + $0x68] sm:$0xff]
    %v1022 = vld [vmem:[#allocation12 + $0x70] sm:$0xff]
    %v1023 = vld [vmem:[#allocation12 + $0x78] sm:$0xff]
    %v1024 = vld [vmem:[#allocation12 + $0x80] sm:$0xff]
    %v1025 = vld [vmem:[#allocation12 + $0x88] sm:$0xff]
    %v1026 = vld [vmem:[#allocation12 + $0x90] sm:$0xff]
    %v1027 = vld [vmem:[#allocation12 + $0x98] sm:$0xff]
    %v1028 = vld [vmem:[#allocation12 + $0xa0] sm:$0xff]
    %v1029 = vld [vmem:[#allocation12 + $0xa8] sm:$0xff]
    %v1030 = vld [vmem:[#allocation12 + $0xb0] sm:$0xff]
    %v1031 = vld [vmem:[#allocation12 + $0xb8] sm:$0xff]
    %v1032 = vld [vmem:[#allocation12 + $0xc0] sm:$0xff]
    %v1033 = vld [vmem:[#allocation12 + $0xc8] sm:$0xff]
    %v1034 = vld [vmem:[#allocation12 + $0xd0] sm:$0xff]
    %v1035 = vld [vmem:[#allocation12 + $0xd8] sm:$0xff]
    %v1036 = vld [vmem:[#allocation12 + $0xe0] sm:$0xff]
    %v1037 = vld [vmem:[#allocation12 + $0xe8] sm:$0xff]
    %v1038 = vld [vmem:[#allocation12 + $0xf0] sm:$0xff]
    %v1039 = vld [vmem:[#allocation12 + $0xf8] sm:$0xff]
    %v1072 = vunpack.c.l.b16 %v1008
    %v1073 = vunpack.c.h.b16 %v1008
    %v1074 = vunpack.c.l.b16 %v1009
    %v1075 = vunpack.c.h.b16 %v1009
    %v1076 = vunpack.c.l.b16 %v1010
    %v1077 = vunpack.c.h.b16 %v1010
    %v1078 = vunpack.c.l.b16 %v1011
    %v1079 = vunpack.c.h.b16 %v1011
    %v1080 = vunpack.c.l.b16 %v1012
    %v1081 = vunpack.c.h.b16 %v1012
    %v1082 = vunpack.c.l.b16 %v1013
    %v1083 = vunpack.c.h.b16 %v1013
    %v1084 = vunpack.c.l.b16 %v1014
    %v1085 = vunpack.c.h.b16 %v1014
    %v1086 = vunpack.c.l.b16 %v1015
    %v1087 = vunpack.c.h.b16 %v1015
    %v1088 = vunpack.c.l.b16 %v1016
    %v1089 = vunpack.c.h.b16 %v1016
    %v1090 = vunpack.c.l.b16 %v1017
    %v1091 = vunpack.c.h.b16 %v1017
    %v1092 = vunpack.c.l.b16 %v1018
    %v1093 = vunpack.c.h.b16 %v1018
    %v1094 = vunpack.c.l.b16 %v1019
    %v1095 = vunpack.c.h.b16 %v1019
    %v1096 = vunpack.c.l.b16 %v1020
    %v1097 = vunpack.c.h.b16 %v1020
    %v1098 = vunpack.c.l.b16 %v1021
    %v1099 = vunpack.c.h.b16 %v1021
    %v1100 = vunpack.c.l.b16 %v1022
    %v1101 = vunpack.c.h.b16 %v1022
    %v1102 = vunpack.c.l.b16 %v1023
    %v1103 = vunpack.c.h.b16 %v1023
    %v1104 = vunpack.c.l.b16 %v1024
    %v1105 = vunpack.c.h.b16 %v1024
    %v1106 = vunpack.c.l.b16 %v1025
    %v1107 = vunpack.c.h.b16 %v1025
    %v1108 = vunpack.c.l.b16 %v1026
    %v1109 = vunpack.c.h.b16 %v1026
    %v1110 = vunpack.c.l.b16 %v1027
    %v1111 = vunpack.c.h.b16 %v1027
    %v1112 = vunpack.c.l.b16 %v1028
    %v1113 = vunpack.c.h.b16 %v1028
    %v1114 = vunpack.c.l.b16 %v1029
    %v1115 = vunpack.c.h.b16 %v1029
    %v1116 = vunpack.c.l.b16 %v1030
    %v1117 = vunpack.c.h.b16 %v1030
    %v1118 = vunpack.c.l.b16 %v1031
    %v1119 = vunpack.c.h.b16 %v1031
    %v1120 = vunpack.c.l.b16 %v1032
    %v1121 = vunpack.c.h.b16 %v1032
    %v1122 = vunpack.c.l.b16 %v1033
    %v1123 = vunpack.c.h.b16 %v1033
    %v1124 = vunpack.c.l.b16 %v1034
    %v1125 = vunpack.c.h.b16 %v1034
    %v1126 = vunpack.c.l.b16 %v1035
    %v1127 = vunpack.c.h.b16 %v1035
    %v1128 = vunpack.c.l.b16 %v1036
    %v1129 = vunpack.c.h.b16 %v1036
    %v1130 = vunpack.c.l.b16 %v1037
    %v1131 = vunpack.c.h.b16 %v1037
    %v1132 = vunpack.c.l.b16 %v1038
    %v1133 = vunpack.c.h.b16 %v1038
    %v1134 = vunpack.c.l.b16 %v1039
    %v1135 = vunpack.c.h.b16 %v1039
    %v1136 = vpack.c.b16 %v1076, %v1072
    %v1137 = vpack.c.b16 %v1077, %v1073
    %v1138 = vpack.c.b16 %v1078, %v1074
    %v1139 = vpack.c.b16 %v1079, %v1075
    %v1140 = vpack.c.b16 %v1084, %v1080
    %v1141 = vpack.c.b16 %v1085, %v1081
    %v1142 = vpack.c.b16 %v1086, %v1082
    %v1143 = vpack.c.b16 %v1087, %v1083
    %v1144 = vpack.c.b16 %v1092, %v1088
    %v1145 = vpack.c.b16 %v1093, %v1089
    %v1146 = vpack.c.b16 %v1094, %v1090
    %v1147 = vpack.c.b16 %v1095, %v1091
    %v1148 = vpack.c.b16 %v1100, %v1096
    %v1149 = vpack.c.b16 %v1101, %v1097
    %v1150 = vpack.c.b16 %v1102, %v1098
    %v1151 = vpack.c.b16 %v1103, %v1099
    %v1152 = vpack.c.b16 %v1108, %v1104
    %v1153 = vpack.c.b16 %v1109, %v1105
    %v1154 = vpack.c.b16 %v1110, %v1106
    %v1155 = vpack.c.b16 %v1111, %v1107
    %v1156 = vpack.c.b16 %v1116, %v1112
    %v1157 = vpack.c.b16 %v1117, %v1113
    %v1158 = vpack.c.b16 %v1118, %v1114
    %v1159 = vpack.c.b16 %v1119, %v1115
    %v1160 = vpack.c.b16 %v1124, %v1120
    %v1161 = vpack.c.b16 %v1125, %v1121
    %v1162 = vpack.c.b16 %v1126, %v1122
    %v1163 = vpack.c.b16 %v1127, %v1123
    %v1164 = vpack.c.b16 %v1132, %v1128
    %v1165 = vpack.c.b16 %v1133, %v1129
    %v1166 = vpack.c.b16 %v1134, %v1130
    %v1167 = vpack.c.b16 %v1135, %v1131
    %1200 = vmatpush.bf16.msra.mxu0 %v1164
    %1201 = vmatpush.bf16.msra.mxu0 %v1160
    %1202 = vmatpush.bf16.msra.mxu0 %v1156
    %1203 = vmatpush.bf16.msra.mxu0 %v1152
    %1204 = vmatpush.bf16.msra.mxu0 %v1148
    %1205 = vmatpush.bf16.msra.mxu0 %v1144
    %1206 = vmatpush.bf16.msra.mxu0 %v1140
    %1207 = vmatpush.bf16.msra.mxu0 %v1136
    %1208 = vmatmul.bf16.gmra.mxu0 %v1007
    %v1209 = vpop.f32.mrf.mxu0
    %v1210 = vadd.f32 0.0, %v1209
    %v1211 = vpop.f32.mrf.mxu0
    %1212 = vdwg.mxu0
    %1213 = vmatpush.bf16.msra.mxu0 %v1165
    %1214 = vmatpush.bf16.msra.mxu0 %v1161
    %1215 = vmatpush.bf16.msra.mxu0 %v1157
    %1216 = vmatpush.bf16.msra.mxu0 %v1153
    %1217 = vmatpush.bf16.msra.mxu0 %v1149
    %1218 = vmatpush.bf16.msra.mxu0 %v1145
    %1219 = vmatpush.bf16.msra.mxu0 %v1141
    %1220 = vmatpush.bf16.msra.mxu0 %v1137
    %1221 = vmatmul.bf16.gmra.mxu0 %v1007
    %v1222 = vpop.f32.mrf.mxu0
    %v1223 = vadd.f32 0.0, %v1222
    %v1224 = vpop.f32.mrf.mxu0
    %1225 = vdwg.mxu0
    %1226 = vmatpush.bf16.msra.mxu0 %v1166
    %1227 = vmatpush.bf16.msra.mxu0 %v1162
    %1228 = vmatpush.bf16.msra.mxu0 %v1158
    %1229 = vmatpush.bf16.msra.mxu0 %v1154
    %1230 = vmatpush.bf16.msra.mxu0 %v1150
    %1231 = vmatpush.bf16.msra.mxu0 %v1146
    %1232 = vmatpush.bf16.msra.mxu0 %v1142
    %1233 = vmatpush.bf16.msra.mxu0 %v1138
    %1234 = vmatmul.bf16.gmra.mxu0 %v1007
    %v1235 = vpop.f32.mrf.mxu0
    %v1236 = vadd.f32 0.0, %v1235
    %v1237 = vpop.f32.mrf.mxu0
    %1238 = vdwg.mxu0
    %1239 = vmatpush.bf16.msra.mxu0 %v1167
    %1240 = vmatpush.bf16.msra.mxu0 %v1163
    %1241 = vmatpush.bf16.msra.mxu0 %v1159
    %1242 = vmatpush.bf16.msra.mxu0 %v1155
    %1243 = vmatpush.bf16.msra.mxu0 %v1151
    %1244 = vmatpush.bf16.msra.mxu0 %v1147
    %1245 = vmatpush.bf16.msra.mxu0 %v1143
    %1246 = vmatpush.bf16.msra.mxu0 %v1139
    %1247 = vmatmul.bf16.gmra.mxu0 %v1007
    %v1248 = vpop.f32.mrf.mxu0
    %v1249 = vadd.f32 0.0, %v1248
    %v1250 = vpop.f32.mrf.mxu0
    %1251 = vdwg.mxu0
    %v1256 = vrot.slane %v1223, 6
    %v1257 = vrot.slane %v1236, 4
    %v1258 = vrot.slane %v1249, 2
    %v1259 = vsel %vm210, %v1210, %v1256
    %v1260 = vsel %vm234, %v1257, %v1258
    %v1261 = vsel %vm599, %v1259, %v1260
    %v1263 = vadd.f32 %v1006, %v1261
    %v1264 = vxor.u32 %v1263, 2147483648
    %v1265 = vmul.f32 %v1264, 1.442695
    %v1266 = vpow.pop %v1265
    %v1267 = vadd.f32 %v1266, 1.0
    %v1268 = vrcp.pop %v1267
    %v1269 = vmul.f32 %v1267, %v1268
    %v1270 = vsub.f32 1.0, %v1269
    %v1271 = vmul.f32 %v1268, %v1270
    %v1272 = vadd.f32 %v1268, %v1271
    %vm1273 = vweird.f32 %v1267
    %vm1274 = vweird.f32 %v1268
    %vm1275 = vmor %vm1273, %vm1274
    %v1276 = vsel %vm1275, %v1268, %v1272
    %v1277 = vand.u32 2147483647, %v1267
    %vm1278 = vcmp.eq.f32.partialorder %v1277, 8.507059e+37
    %v1279 = vand.u32 %v1267, 2147483648
    %v1280 = vor.u32 1.1754944e-38, %v1279
    %v1281 = vsel %vm1278, %v1280, %v1276
    %v1282 = vmul.f32 1.0, %v1281
    %v1284 = vrot.slane %v1263, 2
    %v1286 = vxor.u32 %v1284, 2147483648
    %v1287 = vmul.f32 %v1286, 1.442695
    %v1288 = vpow.pop %v1287
    %v1289 = vadd.f32 %v1288, 1.0
    %v1290 = vrcp.pop %v1289
    %v1291 = vmul.f32 %v1289, %v1290
    %v1292 = vsub.f32 1.0, %v1291
    %v1293 = vmul.f32 %v1290, %v1292
    %v1294 = vadd.f32 %v1290, %v1293
    %vm1295 = vweird.f32 %v1289
    %vm1296 = vweird.f32 %v1290
    %vm1297 = vmor %vm1295, %vm1296
    %v1298 = vsel %vm1297, %v1290, %v1294
    %v1299 = vand.u32 2147483647, %v1289
    %vm1300 = vcmp.eq.f32.partialorder %v1299, 8.507059e+37
    %v1301 = vand.u32 %v1289, 2147483648
    %v1302 = vor.u32 1.1754944e-38, %v1301
    %v1303 = vsel %vm1300, %v1302, %v1298
    %v1304 = vmul.f32 1.0, %v1303
    %v1305 = vrot.slane %v1263, 4
    %v1307 = vtanh.pop %v1305
    %v1308 = vrot.slane %v1263, 6
    %v1310 = vxor.u32 %v1308, 2147483648
    %v1311 = vmul.f32 %v1310, 1.442695
    %v1312 = vpow.pop %v1311
    %v1313 = vadd.f32 %v1312, 1.0
    %v1314 = vrcp.pop %v1313
    %v1315 = vmul.f32 %v1313, %v1314
    %v1316 = vsub.f32 1.0, %v1315
    %v1317 = vmul.f32 %v1314, %v1316
    %v1318 = vadd.f32 %v1314, %v1317
    %vm1319 = vweird.f32 %v1313
    %vm1320 = vweird.f32 %v1314
    %vm1321 = vmor %vm1319, %vm1320
    %v1322 = vsel %vm1321, %v1314, %v1318
    %v1323 = vand.u32 2147483647, %v1313
    %vm1324 = vcmp.eq.f32.partialorder %v1323, 8.507059e+37
    %v1325 = vand.u32 %v1313, 2147483648
    %v1326 = vor.u32 1.1754944e-38, %v1325
    %v1327 = vsel %vm1324, %v1326, %v1322
    %v1328 = vmul.f32 1.0, %v1327
    %v1329 = vmul.f32 %v1304, %v1000
    %v1330 = vmul.f32 %v1282, %v1307
    %v1331 = vadd.f32 %v1329, %v1330
    %v1332 = vtanh.pop %v1331
    %v1333 = vmul.f32 %v1328, %v1332
    %s1334 = scalar_lea.vmem [#allocation5], 4
    %1335 = vst [vmem:[%s1334] sm:$0x3] %v1333
    %s1336 = scalar_lea.vmem [#allocation4], 24
    %v1337 = vld [vmem:[%s1336] sm:$0xff]
    %v1338 = vpack.c.bf16 %v1333, %v1333
    %v1339 = vld [vmem:[#allocation12] sm:$0xff]
    %v1340 = vld [vmem:[#allocation12 + $0x8] sm:$0xff]
    %v1341 = vld [vmem:[#allocation12 + $0x10] sm:$0xff]
    %v1342 = vld [vmem:[#allocation12 + $0x18] sm:$0xff]
    %v1343 = vld [vmem:[#allocation12 + $0x20] sm:$0xff]
    %v1344 = vld [vmem:[#allocation12 + $0x28] sm:$0xff]
    %v1345 = vld [vmem:[#allocation12 + $0x30] sm:$0xff]
    %v1346 = vld [vmem:[#allocation12 + $0x38] sm:$0xff]
    %v1347 = vld [vmem:[#allocation12 + $0x40] sm:$0xff]
    %v1348 = vld [vmem:[#allocation12 + $0x48] sm:$0xff]
    %v1349 = vld [vmem:[#allocation12 + $0x50] sm:$0xff]
    %v1350 = vld [vmem:[#allocation12 + $0x58] sm:$0xff]
    %v1351 = vld [vmem:[#allocation12 + $0x60] sm:$0xff]
    %v1352 = vld [vmem:[#allocation12 + $0x68] sm:$0xff]
    %v1353 = vld [vmem:[#allocation12 + $0x70] sm:$0xff]
    %v1354 = vld [vmem:[#allocation12 + $0x78] sm:$0xff]
    %v1355 = vld [vmem:[#allocation12 + $0x80] sm:$0xff]
    %v1356 = vld [vmem:[#allocation12 + $0x88] sm:$0xff]
    %v1357 = vld [vmem:[#allocation12 + $0x90] sm:$0xff]
    %v1358 = vld [vmem:[#allocation12 + $0x98] sm:$0xff]
    %v1359 = vld [vmem:[#allocation12 + $0xa0] sm:$0xff]
    %v1360 = vld [vmem:[#allocation12 + $0xa8] sm:$0xff]
    %v1361 = vld [vmem:[#allocation12 + $0xb0] sm:$0xff]
    %v1362 = vld [vmem:[#allocation12 + $0xb8] sm:$0xff]
    %v1363 = vld [vmem:[#allocation12 + $0xc0] sm:$0xff]
    %v1364 = vld [vmem:[#allocation12 + $0xc8] sm:$0xff]
    %v1365 = vld [vmem:[#allocation12 + $0xd0] sm:$0xff]
    %v1366 = vld [vmem:[#allocation12 + $0xd8] sm:$0xff]
    %v1367 = vld [vmem:[#allocation12 + $0xe0] sm:$0xff]
    %v1368 = vld [vmem:[#allocation12 + $0xe8] sm:$0xff]
    %v1369 = vld [vmem:[#allocation12 + $0xf0] sm:$0xff]
    %v1370 = vld [vmem:[#allocation12 + $0xf8] sm:$0xff]
    %v1403 = vunpack.c.l.b16 %v1339
    %v1404 = vunpack.c.h.b16 %v1339
    %v1405 = vunpack.c.l.b16 %v1340
    %v1406 = vunpack.c.h.b16 %v1340
    %v1407 = vunpack.c.l.b16 %v1341
    %v1408 = vunpack.c.h.b16 %v1341
    %v1409 = vunpack.c.l.b16 %v1342
    %v1410 = vunpack.c.h.b16 %v1342
    %v1411 = vunpack.c.l.b16 %v1343
    %v1412 = vunpack.c.h.b16 %v1343
    %v1413 = vunpack.c.l.b16 %v1344
    %v1414 = vunpack.c.h.b16 %v1344
    %v1415 = vunpack.c.l.b16 %v1345
    %v1416 = vunpack.c.h.b16 %v1345
    %v1417 = vunpack.c.l.b16 %v1346
    %v1418 = vunpack.c.h.b16 %v1346
    %v1419 = vunpack.c.l.b16 %v1347
    %v1420 = vunpack.c.h.b16 %v1347
    %v1421 = vunpack.c.l.b16 %v1348
    %v1422 = vunpack.c.h.b16 %v1348
    %v1423 = vunpack.c.l.b16 %v1349
    %v1424 = vunpack.c.h.b16 %v1349
    %v1425 = vunpack.c.l.b16 %v1350
    %v1426 = vunpack.c.h.b16 %v1350
    %v1427 = vunpack.c.l.b16 %v1351
    %v1428 = vunpack.c.h.b16 %v1351
    %v1429 = vunpack.c.l.b16 %v1352
    %v1430 = vunpack.c.h.b16 %v1352
    %v1431 = vunpack.c.l.b16 %v1353
    %v1432 = vunpack.c.h.b16 %v1353
    %v1433 = vunpack.c.l.b16 %v1354
    %v1434 = vunpack.c.h.b16 %v1354
    %v1435 = vunpack.c.l.b16 %v1355
    %v1436 = vunpack.c.h.b16 %v1355
    %v1437 = vunpack.c.l.b16 %v1356
    %v1438 = vunpack.c.h.b16 %v1356
    %v1439 = vunpack.c.l.b16 %v1357
    %v1440 = vunpack.c.h.b16 %v1357
    %v1441 = vunpack.c.l.b16 %v1358
    %v1442 = vunpack.c.h.b16 %v1358
    %v1443 = vunpack.c.l.b16 %v1359
    %v1444 = vunpack.c.h.b16 %v1359
    %v1445 = vunpack.c.l.b16 %v1360
    %v1446 = vunpack.c.h.b16 %v1360
    %v1447 = vunpack.c.l.b16 %v1361
    %v1448 = vunpack.c.h.b16 %v1361
    %v1449 = vunpack.c.l.b16 %v1362
    %v1450 = vunpack.c.h.b16 %v1362
    %v1451 = vunpack.c.l.b16 %v1363
    %v1452 = vunpack.c.h.b16 %v1363
    %v1453 = vunpack.c.l.b16 %v1364
    %v1454 = vunpack.c.h.b16 %v1364
    %v1455 = vunpack.c.l.b16 %v1365
    %v1456 = vunpack.c.h.b16 %v1365
    %v1457 = vunpack.c.l.b16 %v1366
    %v1458 = vunpack.c.h.b16 %v1366
    %v1459 = vunpack.c.l.b16 %v1367
    %v1460 = vunpack.c.h.b16 %v1367
    %v1461 = vunpack.c.l.b16 %v1368
    %v1462 = vunpack.c.h.b16 %v1368
    %v1463 = vunpack.c.l.b16 %v1369
    %v1464 = vunpack.c.h.b16 %v1369
    %v1465 = vunpack.c.l.b16 %v1370
    %v1466 = vunpack.c.h.b16 %v1370
    %v1467 = vpack.c.b16 %v1407, %v1403
    %v1468 = vpack.c.b16 %v1408, %v1404
    %v1469 = vpack.c.b16 %v1409, %v1405
    %v1470 = vpack.c.b16 %v1410, %v1406
    %v1471 = vpack.c.b16 %v1415, %v1411
    %v1472 = vpack.c.b16 %v1416, %v1412
    %v1473 = vpack.c.b16 %v1417, %v1413
    %v1474 = vpack.c.b16 %v1418, %v1414
    %v1475 = vpack.c.b16 %v1423, %v1419
    %v1476 = vpack.c.b16 %v1424, %v1420
    %v1477 = vpack.c.b16 %v1425, %v1421
    %v1478 = vpack.c.b16 %v1426, %v1422
    %v1479 = vpack.c.b16 %v1431, %v1427
    %v1480 = vpack.c.b16 %v1432, %v1428
    %v1481 = vpack.c.b16 %v1433, %v1429
    %v1482 = vpack.c.b16 %v1434, %v1430
    %v1483 = vpack.c.b16 %v1439, %v1435
    %v1484 = vpack.c.b16 %v1440, %v1436
    %v1485 = vpack.c.b16 %v1441, %v1437
    %v1486 = vpack.c.b16 %v1442, %v1438
    %v1487 = vpack.c.b16 %v1447, %v1443
    %v1488 = vpack.c.b16 %v1448, %v1444
    %v1489 = vpack.c.b16 %v1449, %v1445
    %v1490 = vpack.c.b16 %v1450, %v1446
    %v1491 = vpack.c.b16 %v1455, %v1451
    %v1492 = vpack.c.b16 %v1456, %v1452
    %v1493 = vpack.c.b16 %v1457, %v1453
    %v1494 = vpack.c.b16 %v1458, %v1454
    %v1495 = vpack.c.b16 %v1463, %v1459
    %v1496 = vpack.c.b16 %v1464, %v1460
    %v1497 = vpack.c.b16 %v1465, %v1461
    %v1498 = vpack.c.b16 %v1466, %v1462
    %1531 = vmatpush.bf16.msra.mxu0 %v1495
    %1532 = vmatpush.bf16.msra.mxu0 %v1491
    %1533 = vmatpush.bf16.msra.mxu0 %v1487
    %1534 = vmatpush.bf16.msra.mxu0 %v1483
    %1535 = vmatpush.bf16.msra.mxu0 %v1479
    %1536 = vmatpush.bf16.msra.mxu0 %v1475
    %1537 = vmatpush.bf16.msra.mxu0 %v1471
    %1538 = vmatpush.bf16.msra.mxu0 %v1467
    %1539 = vmatmul.bf16.gmra.mxu0 %v1338
    %v1540 = vpop.f32.mrf.mxu0
    %v1541 = vadd.f32 0.0, %v1540
    %v1542 = vpop.f32.mrf.mxu0
    %1543 = vdwg.mxu0
    %1544 = vmatpush.bf16.msra.mxu0 %v1496
    %1545 = vmatpush.bf16.msra.mxu0 %v1492
    %1546 = vmatpush.bf16.msra.mxu0 %v1488
    %1547 = vmatpush.bf16.msra.mxu0 %v1484
    %1548 = vmatpush.bf16.msra.mxu0 %v1480
    %1549 = vmatpush.bf16.msra.mxu0 %v1476
    %1550 = vmatpush.bf16.msra.mxu0 %v1472
    %1551 = vmatpush.bf16.msra.mxu0 %v1468
    %1552 = vmatmul.bf16.gmra.mxu0 %v1338
    %v1553 = vpop.f32.mrf.mxu0
    %v1554 = vadd.f32 0.0, %v1553
    %v1555 = vpop.f32.mrf.mxu0
    %1556 = vdwg.mxu0
    %1557 = vmatpush.bf16.msra.mxu0 %v1497
    %1558 = vmatpush.bf16.msra.mxu0 %v1493
    %1559 = vmatpush.bf16.msra.mxu0 %v1489
    %1560 = vmatpush.bf16.msra.mxu0 %v1485
    %1561 = vmatpush.bf16.msra.mxu0 %v1481
    %1562 = vmatpush.bf16.msra.mxu0 %v1477
    %1563 = vmatpush.bf16.msra.mxu0 %v1473
    %1564 = vmatpush.bf16.msra.mxu0 %v1469
    %1565 = vmatmul.bf16.gmra.mxu0 %v1338
    %v1566 = vpop.f32.mrf.mxu0
    %v1567 = vadd.f32 0.0, %v1566
    %v1568 = vpop.f32.mrf.mxu0
    %1569 = vdwg.mxu0
    %1570 = vmatpush.bf16.msra.mxu0 %v1498
    %1571 = vmatpush.bf16.msra.mxu0 %v1494
    %1572 = vmatpush.bf16.msra.mxu0 %v1490
    %1573 = vmatpush.bf16.msra.mxu0 %v1486
    %1574 = vmatpush.bf16.msra.mxu0 %v1482
    %1575 = vmatpush.bf16.msra.mxu0 %v1478
    %1576 = vmatpush.bf16.msra.mxu0 %v1474
    %1577 = vmatpush.bf16.msra.mxu0 %v1470
    %1578 = vmatmul.bf16.gmra.mxu0 %v1338
    %v1579 = vpop.f32.mrf.mxu0
    %v1580 = vadd.f32 0.0, %v1579
    %v1581 = vpop.f32.mrf.mxu0
    %1582 = vdwg.mxu0
    %v1587 = vrot.slane %v1554, 6
    %v1588 = vrot.slane %v1567, 4
    %v1589 = vrot.slane %v1580, 2
    %v1590 = vsel %vm210, %v1541, %v1587
    %v1591 = vsel %vm234, %v1588, %v1589
    %v1592 = vsel %vm599, %v1590, %v1591
    %v1594 = vadd.f32 %v1337, %v1592
    %v1595 = vxor.u32 %v1594, 2147483648
    %v1596 = vmul.f32 %v1595, 1.442695
    %v1597 = vpow.pop %v1596
    %v1598 = vadd.f32 %v1597, 1.0
    %v1599 = vrcp.pop %v1598
    %v1600 = vmul.f32 %v1598, %v1599
    %v1601 = vsub.f32 1.0, %v1600
    %v1602 = vmul.f32 %v1599, %v1601
    %v1603 = vadd.f32 %v1599, %v1602
    %vm1604 = vweird.f32 %v1598
    %vm1605 = vweird.f32 %v1599
    %vm1606 = vmor %vm1604, %vm1605
    %v1607 = vsel %vm1606, %v1599, %v1603
    %v1608 = vand.u32 2147483647, %v1598
    %vm1609 = vcmp.eq.f32.partialorder %v1608, 8.507059e+37
    %v1610 = vand.u32 %v1598, 2147483648
    %v1611 = vor.u32 1.1754944e-38, %v1610
    %v1612 = vsel %vm1609, %v1611, %v1607
    %v1613 = vmul.f32 1.0, %v1612
    %v1615 = vrot.slane %v1594, 2
    %v1617 = vxor.u32 %v1615, 2147483648
    %v1618 = vmul.f32 %v1617, 1.442695
    %v1619 = vpow.pop %v1618
    %v1620 = vadd.f32 %v1619, 1.0
    %v1621 = vrcp.pop %v1620
    %v1622 = vmul.f32 %v1620, %v1621
    %v1623 = vsub.f32 1.0, %v1622
    %v1624 = vmul.f32 %v1621, %v1623
    %v1625 = vadd.f32 %v1621, %v1624
    %vm1626 = vweird.f32 %v1620
    %vm1627 = vweird.f32 %v1621
    %vm1628 = vmor %vm1626, %vm1627
    %v1629 = vsel %vm1628, %v1621, %v1625
    %v1630 = vand.u32 2147483647, %v1620
    %vm1631 = vcmp.eq.f32.partialorder %v1630, 8.507059e+37
    %v1632 = vand.u32 %v1620, 2147483648
    %v1633 = vor.u32 1.1754944e-38, %v1632
    %v1634 = vsel %vm1631, %v1633, %v1629
    %v1635 = vmul.f32 1.0, %v1634
    %v1636 = vrot.slane %v1594, 4
    %v1638 = vtanh.pop %v1636
    %v1639 = vrot.slane %v1594, 6
    %v1641 = vxor.u32 %v1639, 2147483648
    %v1642 = vmul.f32 %v1641, 1.442695
    %v1643 = vpow.pop %v1642
    %v1644 = vadd.f32 %v1643, 1.0
    %v1645 = vrcp.pop %v1644
    %v1646 = vmul.f32 %v1644, %v1645
    %v1647 = vsub.f32 1.0, %v1646
    %v1648 = vmul.f32 %v1645, %v1647
    %v1649 = vadd.f32 %v1645, %v1648
    %vm1650 = vweird.f32 %v1644
    %vm1651 = vweird.f32 %v1645
    %vm1652 = vmor %vm1650, %vm1651
    %v1653 = vsel %vm1652, %v1645, %v1649
    %v1654 = vand.u32 2147483647, %v1644
    %vm1655 = vcmp.eq.f32.partialorder %v1654, 8.507059e+37
    %v1656 = vand.u32 %v1644, 2147483648
    %v1657 = vor.u32 1.1754944e-38, %v1656
    %v1658 = vsel %vm1655, %v1657, %v1653
    %v1659 = vmul.f32 1.0, %v1658
    %v1660 = vmul.f32 %v1635, %v1331
    %v1661 = vmul.f32 %v1613, %v1638
    %v1662 = vadd.f32 %v1660, %v1661
    %v1663 = vtanh.pop %v1662
    %v1664 = vmul.f32 %v1659, %v1663
    %s1665 = scalar_lea.vmem [#allocation5], 6
    %1666 = vst [vmem:[%s1665] sm:$0x3] %v1664
    %s1667 = scalar_lea.vmem [#allocation4], 32
    %v1668 = vld [vmem:[%s1667] sm:$0xff]
    %v1669 = vpack.c.bf16 %v1664, %v1664
    %v1670 = vld [vmem:[#allocation12] sm:$0xff]
    %v1671 = vld [vmem:[#allocation12 + $0x8] sm:$0xff]
    %v1672 = vld [vmem:[#allocation12 + $0x10] sm:$0xff]
    %v1673 = vld [vmem:[#allocation12 + $0x18] sm:$0xff]
    %v1674 = vld [vmem:[#allocation12 + $0x20] sm:$0xff]
    %v1675 = vld [vmem:[#allocation12 + $0x28] sm:$0xff]
    %v1676 = vld [vmem:[#allocation12 + $0x30] sm:$0xff]
    %v1677 = vld [vmem:[#allocation12 + $0x38] sm:$0xff]
    %v1678 = vld [vmem:[#allocation12 + $0x40] sm:$0xff]
    %v1679 = vld [vmem:[#allocation12 + $0x48] sm:$0xff]
    %v1680 = vld [vmem:[#allocation12 + $0x50] sm:$0xff]
    %v1681 = vld [vmem:[#allocation12 + $0x58] sm:$0xff]
    %v1682 = vld [vmem:[#allocation12 + $0x60] sm:$0xff]
    %v1683 = vld [vmem:[#allocation12 + $0x68] sm:$0xff]
    %v1684 = vld [vmem:[#allocation12 + $0x70] sm:$0xff]
    %v1685 = vld [vmem:[#allocation12 + $0x78] sm:$0xff]
    %v1686 = vld [vmem:[#allocation12 + $0x80] sm:$0xff]
    %v1687 = vld [vmem:[#allocation12 + $0x88] sm:$0xff]
    %v1688 = vld [vmem:[#allocation12 + $0x90] sm:$0xff]
    %v1689 = vld [vmem:[#allocation12 + $0x98] sm:$0xff]
    %v1690 = vld [vmem:[#allocation12 + $0xa0] sm:$0xff]
    %v1691 = vld [vmem:[#allocation12 + $0xa8] sm:$0xff]
    %v1692 = vld [vmem:[#allocation12 + $0xb0] sm:$0xff]
    %v1693 = vld [vmem:[#allocation12 + $0xb8] sm:$0xff]
    %v1694 = vld [vmem:[#allocation12 + $0xc0] sm:$0xff]
    %v1695 = vld [vmem:[#allocation12 + $0xc8] sm:$0xff]
    %v1696 = vld [vmem:[#allocation12 + $0xd0] sm:$0xff]
    %v1697 = vld [vmem:[#allocation12 + $0xd8] sm:$0xff]
    %v1698 = vld [vmem:[#allocation12 + $0xe0] sm:$0xff]
    %v1699 = vld [vmem:[#allocation12 + $0xe8] sm:$0xff]
    %v1700 = vld [vmem:[#allocation12 + $0xf0] sm:$0xff]
    %v1701 = vld [vmem:[#allocation12 + $0xf8] sm:$0xff]
    %v1734 = vunpack.c.l.b16 %v1670
    %v1735 = vunpack.c.h.b16 %v1670
    %v1736 = vunpack.c.l.b16 %v1671
    %v1737 = vunpack.c.h.b16 %v1671
    %v1738 = vunpack.c.l.b16 %v1672
    %v1739 = vunpack.c.h.b16 %v1672
    %v1740 = vunpack.c.l.b16 %v1673
    %v1741 = vunpack.c.h.b16 %v1673
    %v1742 = vunpack.c.l.b16 %v1674
    %v1743 = vunpack.c.h.b16 %v1674
    %v1744 = vunpack.c.l.b16 %v1675
    %v1745 = vunpack.c.h.b16 %v1675
    %v1746 = vunpack.c.l.b16 %v1676
    %v1747 = vunpack.c.h.b16 %v1676
    %v1748 = vunpack.c.l.b16 %v1677
    %v1749 = vunpack.c.h.b16 %v1677
    %v1750 = vunpack.c.l.b16 %v1678
    %v1751 = vunpack.c.h.b16 %v1678
    %v1752 = vunpack.c.l.b16 %v1679
    %v1753 = vunpack.c.h.b16 %v1679
    %v1754 = vunpack.c.l.b16 %v1680
    %v1755 = vunpack.c.h.b16 %v1680
    %v1756 = vunpack.c.l.b16 %v1681
    %v1757 = vunpack.c.h.b16 %v1681
    %v1758 = vunpack.c.l.b16 %v1682
    %v1759 = vunpack.c.h.b16 %v1682
    %v1760 = vunpack.c.l.b16 %v1683
    %v1761 = vunpack.c.h.b16 %v1683
    %v1762 = vunpack.c.l.b16 %v1684
    %v1763 = vunpack.c.h.b16 %v1684
    %v1764 = vunpack.c.l.b16 %v1685
    %v1765 = vunpack.c.h.b16 %v1685
    %v1766 = vunpack.c.l.b16 %v1686
    %v1767 = vunpack.c.h.b16 %v1686
    %v1768 = vunpack.c.l.b16 %v1687
    %v1769 = vunpack.c.h.b16 %v1687
    %v1770 = vunpack.c.l.b16 %v1688
    %v1771 = vunpack.c.h.b16 %v1688
    %v1772 = vunpack.c.l.b16 %v1689
    %v1773 = vunpack.c.h.b16 %v1689
    %v1774 = vunpack.c.l.b16 %v1690
    %v1775 = vunpack.c.h.b16 %v1690
    %v1776 = vunpack.c.l.b16 %v1691
    %v1777 = vunpack.c.h.b16 %v1691
    %v1778 = vunpack.c.l.b16 %v1692
    %v1779 = vunpack.c.h.b16 %v1692
    %v1780 = vunpack.c.l.b16 %v1693
    %v1781 = vunpack.c.h.b16 %v1693
    %v1782 = vunpack.c.l.b16 %v1694
    %v1783 = vunpack.c.h.b16 %v1694
    %v1784 = vunpack.c.l.b16 %v1695
    %v1785 = vunpack.c.h.b16 %v1695
    %v1786 = vunpack.c.l.b16 %v1696
    %v1787 = vunpack.c.h.b16 %v1696
    %v1788 = vunpack.c.l.b16 %v1697
    %v1789 = vunpack.c.h.b16 %v1697
    %v1790 = vunpack.c.l.b16 %v1698
    %v1791 = vunpack.c.h.b16 %v1698
    %v1792 = vunpack.c.l.b16 %v1699
    %v1793 = vunpack.c.h.b16 %v1699
    %v1794 = vunpack.c.l.b16 %v1700
    %v1795 = vunpack.c.h.b16 %v1700
    %v1796 = vunpack.c.l.b16 %v1701
    %v1797 = vunpack.c.h.b16 %v1701
    %v1798 = vpack.c.b16 %v1738, %v1734
    %v1799 = vpack.c.b16 %v1739, %v1735
    %v1800 = vpack.c.b16 %v1740, %v1736
    %v1801 = vpack.c.b16 %v1741, %v1737
    %v1802 = vpack.c.b16 %v1746, %v1742
    %v1803 = vpack.c.b16 %v1747, %v1743
    %v1804 = vpack.c.b16 %v1748, %v1744
    %v1805 = vpack.c.b16 %v1749, %v1745
    %v1806 = vpack.c.b16 %v1754, %v1750
    %v1807 = vpack.c.b16 %v1755, %v1751
    %v1808 = vpack.c.b16 %v1756, %v1752
    %v1809 = vpack.c.b16 %v1757, %v1753
    %v1810 = vpack.c.b16 %v1762, %v1758
    %v1811 = vpack.c.b16 %v1763, %v1759
    %v1812 = vpack.c.b16 %v1764, %v1760
    %v1813 = vpack.c.b16 %v1765, %v1761
    %v1814 = vpack.c.b16 %v1770, %v1766
    %v1815 = vpack.c.b16 %v1771, %v1767
    %v1816 = vpack.c.b16 %v1772, %v1768
    %v1817 = vpack.c.b16 %v1773, %v1769
    %v1818 = vpack.c.b16 %v1778, %v1774
    %v1819 = vpack.c.b16 %v1779, %v1775
    %v1820 = vpack.c.b16 %v1780, %v1776
    %v1821 = vpack.c.b16 %v1781, %v1777
    %v1822 = vpack.c.b16 %v1786, %v1782
    %v1823 = vpack.c.b16 %v1787, %v1783
    %v1824 = vpack.c.b16 %v1788, %v1784
    %v1825 = vpack.c.b16 %v1789, %v1785
    %v1826 = vpack.c.b16 %v1794, %v1790
    %v1827 = vpack.c.b16 %v1795, %v1791
    %v1828 = vpack.c.b16 %v1796, %v1792
    %v1829 = vpack.c.b16 %v1797, %v1793
    %1862 = vmatpush.bf16.msra.mxu0 %v1826
    %1863 = vmatpush.bf16.msra.mxu0 %v1822
    %1864 = vmatpush.bf16.msra.mxu0 %v1818
    %1865 = vmatpush.bf16.msra.mxu0 %v1814
    %1866 = vmatpush.bf16.msra.mxu0 %v1810
    %1867 = vmatpush.bf16.msra.mxu0 %v1806
    %1868 = vmatpush.bf16.msra.mxu0 %v1802
    %1869 = vmatpush.bf16.msra.mxu0 %v1798
    %1870 = vmatmul.bf16.gmra.mxu0 %v1669
    %v1871 = vpop.f32.mrf.mxu0
    %v1872 = vadd.f32 0.0, %v1871
    %v1873 = vpop.f32.mrf.mxu0
    %1874 = vdwg.mxu0
    %1875 = vmatpush.bf16.msra.mxu0 %v1827
    %1876 = vmatpush.bf16.msra.mxu0 %v1823
    %1877 = vmatpush.bf16.msra.mxu0 %v1819
    %1878 = vmatpush.bf16.msra.mxu0 %v1815
    %1879 = vmatpush.bf16.msra.mxu0 %v1811
    %1880 = vmatpush.bf16.msra.mxu0 %v1807
    %1881 = vmatpush.bf16.msra.mxu0 %v1803
    %1882 = vmatpush.bf16.msra.mxu0 %v1799
    %1883 = vmatmul.bf16.gmra.mxu0 %v1669
    %v1884 = vpop.f32.mrf.mxu0
    %v1885 = vadd.f32 0.0, %v1884
    %v1886 = vpop.f32.mrf.mxu0
    %1887 = vdwg.mxu0
    %1888 = vmatpush.bf16.msra.mxu0 %v1828
    %1889 = vmatpush.bf16.msra.mxu0 %v1824
    %1890 = vmatpush.bf16.msra.mxu0 %v1820
    %1891 = vmatpush.bf16.msra.mxu0 %v1816
    %1892 = vmatpush.bf16.msra.mxu0 %v1812
    %1893 = vmatpush.bf16.msra.mxu0 %v1808
    %1894 = vmatpush.bf16.msra.mxu0 %v1804
    %1895 = vmatpush.bf16.msra.mxu0 %v1800
    %1896 = vmatmul.bf16.gmra.mxu0 %v1669
    %v1897 = vpop.f32.mrf.mxu0
    %v1898 = vadd.f32 0.0, %v1897
    %v1899 = vpop.f32.mrf.mxu0
    %1900 = vdwg.mxu0
    %1901 = vmatpush.bf16.msra.mxu0 %v1829
    %1902 = vmatpush.bf16.msra.mxu0 %v1825
    %1903 = vmatpush.bf16.msra.mxu0 %v1821
    %1904 = vmatpush.bf16.msra.mxu0 %v1817
    %1905 = vmatpush.bf16.msra.mxu0 %v1813
    %1906 = vmatpush.bf16.msra.mxu0 %v1809
    %1907 = vmatpush.bf16.msra.mxu0 %v1805
    %1908 = vmatpush.bf16.msra.mxu0 %v1801
    %1909 = vmatmul.bf16.gmra.mxu0 %v1669
    %v1910 = vpop.f32.mrf.mxu0
    %v1911 = vadd.f32 0.0, %v1910
    %v1912 = vpop.f32.mrf.mxu0
    %1913 = vdwg.mxu0
    %v1918 = vrot.slane %v1885, 6
    %v1919 = vrot.slane %v1898, 4
    %v1920 = vrot.slane %v1911, 2
    %v1921 = vsel %vm210, %v1872, %v1918
    %v1922 = vsel %vm234, %v1919, %v1920
    %v1923 = vsel %vm599, %v1921, %v1922
    %v1925 = vadd.f32 %v1668, %v1923
    %v1926 = vxor.u32 %v1925, 2147483648
    %v1927 = vmul.f32 %v1926, 1.442695
    %v1928 = vpow.pop %v1927
    %v1929 = vadd.f32 %v1928, 1.0
    %v1930 = vrcp.pop %v1929
    %v1931 = vmul.f32 %v1929, %v1930
    %v1932 = vsub.f32 1.0, %v1931
    %v1933 = vmul.f32 %v1930, %v1932
    %v1934 = vadd.f32 %v1930, %v1933
    %vm1935 = vweird.f32 %v1929
    %vm1936 = vweird.f32 %v1930
    %vm1937 = vmor %vm1935, %vm1936
    %v1938 = vsel %vm1937, %v1930, %v1934
    %v1939 = vand.u32 2147483647, %v1929
    %vm1940 = vcmp.eq.f32.partialorder %v1939, 8.507059e+37
    %v1941 = vand.u32 %v1929, 2147483648
    %v1942 = vor.u32 1.1754944e-38, %v1941
    %v1943 = vsel %vm1940, %v1942, %v1938
    %v1944 = vmul.f32 1.0, %v1943
    %v1946 = vrot.slane %v1925, 2
    %v1948 = vxor.u32 %v1946, 2147483648
    %v1949 = vmul.f32 %v1948, 1.442695
    %v1950 = vpow.pop %v1949
    %v1951 = vadd.f32 %v1950, 1.0
    %v1952 = vrcp.pop %v1951
    %v1953 = vmul.f32 %v1951, %v1952
    %v1954 = vsub.f32 1.0, %v1953
    %v1955 = vmul.f32 %v1952, %v1954
    %v1956 = vadd.f32 %v1952, %v1955
    %vm1957 = vweird.f32 %v1951
    %vm1958 = vweird.f32 %v1952
    %vm1959 = vmor %vm1957, %vm1958
    %v1960 = vsel %vm1959, %v1952, %v1956
    %v1961 = vand.u32 2147483647, %v1951
    %vm1962 = vcmp.eq.f32.partialorder %v1961, 8.507059e+37
    %v1963 = vand.u32 %v1951, 2147483648
    %v1964 = vor.u32 1.1754944e-38, %v1963
    %v1965 = vsel %vm1962, %v1964, %v1960
    %v1966 = vmul.f32 1.0, %v1965
    %v1967 = vrot.slane %v1925, 4
    %v1969 = vtanh.pop %v1967
    %v1970 = vrot.slane %v1925, 6
    %v1972 = vxor.u32 %v1970, 2147483648
    %v1973 = vmul.f32 %v1972, 1.442695
    %v1974 = vpow.pop %v1973
    %v1975 = vadd.f32 %v1974, 1.0
    %v1976 = vrcp.pop %v1975
    %v1977 = vmul.f32 %v1975, %v1976
    %v1978 = vsub.f32 1.0, %v1977
    %v1979 = vmul.f32 %v1976, %v1978
    %v1980 = vadd.f32 %v1976, %v1979
    %vm1981 = vweird.f32 %v1975
    %vm1982 = vweird.f32 %v1976
    %vm1983 = vmor %vm1981, %vm1982
    %v1984 = vsel %vm1983, %v1976, %v1980
    %v1985 = vand.u32 2147483647, %v1975
    %vm1986 = vcmp.eq.f32.partialorder %v1985, 8.507059e+37
    %v1987 = vand.u32 %v1975, 2147483648
    %v1988 = vor.u32 1.1754944e-38, %v1987
    %v1989 = vsel %vm1986, %v1988, %v1984
    %v1990 = vmul.f32 1.0, %v1989
    %v1991 = vmul.f32 %v1966, %v1662
    %v1992 = vmul.f32 %v1944, %v1969
    %v1993 = vadd.f32 %v1991, %v1992
    %v1994 = vtanh.pop %v1993
    %v1995 = vmul.f32 %v1990, %v1994
    %s1996 = scalar_lea.vmem [#allocation5], 8
    %1997 = vst [vmem:[%s1996] sm:$0x3] %v1995
    %s1998 = scalar_lea.vmem [#allocation4], 40
    %v1999 = vld [vmem:[%s1998] sm:$0xff]
    %v2000 = vpack.c.bf16 %v1995, %v1995
    %v2001 = vld [vmem:[#allocation12] sm:$0xff]
    %v2002 = vld [vmem:[#allocation12 + $0x8] sm:$0xff]
    %v2003 = vld [vmem:[#allocation12 + $0x10] sm:$0xff]
    %v2004 = vld [vmem:[#allocation12 + $0x18] sm:$0xff]
    %v2005 = vld [vmem:[#allocation12 + $0x20] sm:$0xff]
    %v2006 = vld [vmem:[#allocation12 + $0x28] sm:$0xff]
    %v2007 = vld [vmem:[#allocation12 + $0x30] sm:$0xff]
    %v2008 = vld [vmem:[#allocation12 + $0x38] sm:$0xff]
    %v2009 = vld [vmem:[#allocation12 + $0x40] sm:$0xff]
    %v2010 = vld [vmem:[#allocation12 + $0x48] sm:$0xff]
    %v2011 = vld [vmem:[#allocation12 + $0x50] sm:$0xff]
    %v2012 = vld [vmem:[#allocation12 + $0x58] sm:$0xff]
    %v2013 = vld [vmem:[#allocation12 + $0x60] sm:$0xff]
    %v2014 = vld [vmem:[#allocation12 + $0x68] sm:$0xff]
    %v2015 = vld [vmem:[#allocation12 + $0x70] sm:$0xff]
    %v2016 = vld [vmem:[#allocation12 + $0x78] sm:$0xff]
    %v2017 = vld [vmem:[#allocation12 + $0x80] sm:$0xff]
    %v2018 = vld [vmem:[#allocation12 + $0x88] sm:$0xff]
    %v2019 = vld [vmem:[#allocation12 + $0x90] sm:$0xff]
    %v2020 = vld [vmem:[#allocation12 + $0x98] sm:$0xff]
    %v2021 = vld [vmem:[#allocation12 + $0xa0] sm:$0xff]
    %v2022 = vld [vmem:[#allocation12 + $0xa8] sm:$0xff]
    %v2023 = vld [vmem:[#allocation12 + $0xb0] sm:$0xff]
    %v2024 = vld [vmem:[#allocation12 + $0xb8] sm:$0xff]
    %v2025 = vld [vmem:[#allocation12 + $0xc0] sm:$0xff]
    %v2026 = vld [vmem:[#allocation12 + $0xc8] sm:$0xff]
    %v2027 = vld [vmem:[#allocation12 + $0xd0] sm:$0xff]
    %v2028 = vld [vmem:[#allocation12 + $0xd8] sm:$0xff]
    %v2029 = vld [vmem:[#allocation12 + $0xe0] sm:$0xff]
    %v2030 = vld [vmem:[#allocation12 + $0xe8] sm:$0xff]
    %v2031 = vld [vmem:[#allocation12 + $0xf0] sm:$0xff]
    %v2032 = vld [vmem:[#allocation12 + $0xf8] sm:$0xff]
    %v2065 = vunpack.c.l.b16 %v2001
    %v2066 = vunpack.c.h.b16 %v2001
    %v2067 = vunpack.c.l.b16 %v2002
    %v2068 = vunpack.c.h.b16 %v2002
    %v2069 = vunpack.c.l.b16 %v2003
    %v2070 = vunpack.c.h.b16 %v2003
    %v2071 = vunpack.c.l.b16 %v2004
    %v2072 = vunpack.c.h.b16 %v2004
    %v2073 = vunpack.c.l.b16 %v2005
    %v2074 = vunpack.c.h.b16 %v2005
    %v2075 = vunpack.c.l.b16 %v2006
    %v2076 = vunpack.c.h.b16 %v2006
    %v2077 = vunpack.c.l.b16 %v2007
    %v2078 = vunpack.c.h.b16 %v2007
    %v2079 = vunpack.c.l.b16 %v2008
    %v2080 = vunpack.c.h.b16 %v2008
    %v2081 = vunpack.c.l.b16 %v2009
    %v2082 = vunpack.c.h.b16 %v2009
    %v2083 = vunpack.c.l.b16 %v2010
    %v2084 = vunpack.c.h.b16 %v2010
    %v2085 = vunpack.c.l.b16 %v2011
    %v2086 = vunpack.c.h.b16 %v2011
    %v2087 = vunpack.c.l.b16 %v2012
    %v2088 = vunpack.c.h.b16 %v2012
    %v2089 = vunpack.c.l.b16 %v2013
    %v2090 = vunpack.c.h.b16 %v2013
    %v2091 = vunpack.c.l.b16 %v2014
    %v2092 = vunpack.c.h.b16 %v2014
    %v2093 = vunpack.c.l.b16 %v2015
    %v2094 = vunpack.c.h.b16 %v2015
    %v2095 = vunpack.c.l.b16 %v2016
    %v2096 = vunpack.c.h.b16 %v2016
    %v2097 = vunpack.c.l.b16 %v2017
    %v2098 = vunpack.c.h.b16 %v2017
    %v2099 = vunpack.c.l.b16 %v2018
    %v2100 = vunpack.c.h.b16 %v2018
    %v2101 = vunpack.c.l.b16 %v2019
    %v2102 = vunpack.c.h.b16 %v2019
    %v2103 = vunpack.c.l.b16 %v2020
    %v2104 = vunpack.c.h.b16 %v2020
    %v2105 = vunpack.c.l.b16 %v2021
    %v2106 = vunpack.c.h.b16 %v2021
    %v2107 = vunpack.c.l.b16 %v2022
    %v2108 = vunpack.c.h.b16 %v2022
    %v2109 = vunpack.c.l.b16 %v2023
    %v2110 = vunpack.c.h.b16 %v2023
    %v2111 = vunpack.c.l.b16 %v2024
    %v2112 = vunpack.c.h.b16 %v2024
    %v2113 = vunpack.c.l.b16 %v2025
    %v2114 = vunpack.c.h.b16 %v2025
    %v2115 = vunpack.c.l.b16 %v2026
    %v2116 = vunpack.c.h.b16 %v2026
    %v2117 = vunpack.c.l.b16 %v2027
    %v2118 = vunpack.c.h.b16 %v2027
    %v2119 = vunpack.c.l.b16 %v2028
    %v2120 = vunpack.c.h.b16 %v2028
    %v2121 = vunpack.c.l.b16 %v2029
    %v2122 = vunpack.c.h.b16 %v2029
    %v2123 = vunpack.c.l.b16 %v2030
    %v2124 = vunpack.c.h.b16 %v2030
    %v2125 = vunpack.c.l.b16 %v2031
    %v2126 = vunpack.c.h.b16 %v2031
    %v2127 = vunpack.c.l.b16 %v2032
    %v2128 = vunpack.c.h.b16 %v2032
    %v2129 = vpack.c.b16 %v2069, %v2065
    %v2130 = vpack.c.b16 %v2070, %v2066
    %v2131 = vpack.c.b16 %v2071, %v2067
    %v2132 = vpack.c.b16 %v2072, %v2068
    %v2133 = vpack.c.b16 %v2077, %v2073
    %v2134 = vpack.c.b16 %v2078, %v2074
    %v2135 = vpack.c.b16 %v2079, %v2075
    %v2136 = vpack.c.b16 %v2080, %v2076
    %v2137 = vpack.c.b16 %v2085, %v2081
    %v2138 = vpack.c.b16 %v2086, %v2082
    %v2139 = vpack.c.b16 %v2087, %v2083
    %v2140 = vpack.c.b16 %v2088, %v2084
    %v2141 = vpack.c.b16 %v2093, %v2089
    %v2142 = vpack.c.b16 %v2094, %v2090
    %v2143 = vpack.c.b16 %v2095, %v2091
    %v2144 = vpack.c.b16 %v2096, %v2092
    %v2145 = vpack.c.b16 %v2101, %v2097
    %v2146 = vpack.c.b16 %v2102, %v2098
    %v2147 = vpack.c.b16 %v2103, %v2099
    %v2148 = vpack.c.b16 %v2104, %v2100
    %v2149 = vpack.c.b16 %v2109, %v2105
    %v2150 = vpack.c.b16 %v2110, %v2106
    %v2151 = vpack.c.b16 %v2111, %v2107
    %v2152 = vpack.c.b16 %v2112, %v2108
    %v2153 = vpack.c.b16 %v2117, %v2113
    %v2154 = vpack.c.b16 %v2118, %v2114
    %v2155 = vpack.c.b16 %v2119, %v2115
    %v2156 = vpack.c.b16 %v2120, %v2116
    %v2157 = vpack.c.b16 %v2125, %v2121
    %v2158 = vpack.c.b16 %v2126, %v2122
    %v2159 = vpack.c.b16 %v2127, %v2123
    %v2160 = vpack.c.b16 %v2128, %v2124
    %2193 = vmatpush.bf16.msra.mxu0 %v2157
    %2194 = vmatpush.bf16.msra.mxu0 %v2153
    %2195 = vmatpush.bf16.msra.mxu0 %v2149
    %2196 = vmatpush.bf16.msra.mxu0 %v2145
    %2197 = vmatpush.bf16.msra.mxu0 %v2141
    %2198 = vmatpush.bf16.msra.mxu0 %v2137
    %2199 = vmatpush.bf16.msra.mxu0 %v2133
    %2200 = vmatpush.bf16.msra.mxu0 %v2129
    %2201 = vmatmul.bf16.gmra.mxu0 %v2000
    %v2202 = vpop.f32.mrf.mxu0
    %v2203 = vadd.f32 0.0, %v2202
    %v2204 = vpop.f32.mrf.mxu0
    %2205 = vdwg.mxu0
    %2206 = vmatpush.bf16.msra.mxu0 %v2158
    %2207 = vmatpush.bf16.msra.mxu0 %v2154
    %2208 = vmatpush.bf16.msra.mxu0 %v2150
    %2209 = vmatpush.bf16.msra.mxu0 %v2146
    %2210 = vmatpush.bf16.msra.mxu0 %v2142
    %2211 = vmatpush.bf16.msra.mxu0 %v2138
    %2212 = vmatpush.bf16.msra.mxu0 %v2134
    %2213 = vmatpush.bf16.msra.mxu0 %v2130
    %2214 = vmatmul.bf16.gmra.mxu0 %v2000
    %v2215 = vpop.f32.mrf.mxu0
    %v2216 = vadd.f32 0.0, %v2215
    %v2217 = vpop.f32.mrf.mxu0
    %2218 = vdwg.mxu0
    %2219 = vmatpush.bf16.msra.mxu0 %v2159
    %2220 = vmatpush.bf16.msra.mxu0 %v2155
    %2221 = vmatpush.bf16.msra.mxu0 %v2151
    %2222 = vmatpush.bf16.msra.mxu0 %v2147
    %2223 = vmatpush.bf16.msra.mxu0 %v2143
    %2224 = vmatpush.bf16.msra.mxu0 %v2139
    %2225 = vmatpush.bf16.msra.mxu0 %v2135
    %2226 = vmatpush.bf16.msra.mxu0 %v2131
    %2227 = vmatmul.bf16.gmra.mxu0 %v2000
    %v2228 = vpop.f32.mrf.mxu0
    %v2229 = vadd.f32 0.0, %v2228
    %v2230 = vpop.f32.mrf.mxu0
    %2231 = vdwg.mxu0
    %2232 = vmatpush.bf16.msra.mxu0 %v2160
    %2233 = vmatpush.bf16.msra.mxu0 %v2156
    %2234 = vmatpush.bf16.msra.mxu0 %v2152
    %2235 = vmatpush.bf16.msra.mxu0 %v2148
    %2236 = vmatpush.bf16.msra.mxu0 %v2144
    %2237 = vmatpush.bf16.msra.mxu0 %v2140
    %2238 = vmatpush.bf16.msra.mxu0 %v2136
    %2239 = vmatpush.bf16.msra.mxu0 %v2132
    %2240 = vmatmul.bf16.gmra.mxu0 %v2000
    %v2241 = vpop.f32.mrf.mxu0
    %v2242 = vadd.f32 0.0, %v2241
    %v2243 = vpop.f32.mrf.mxu0
    %2244 = vdwg.mxu0
    %v2249 = vrot.slane %v2216, 6
    %v2250 = vrot.slane %v2229, 4
    %v2251 = vrot.slane %v2242, 2
    %v2252 = vsel %vm210, %v2203, %v2249
    %v2253 = vsel %vm234, %v2250, %v2251
    %v2254 = vsel %vm599, %v2252, %v2253
    %v2256 = vadd.f32 %v1999, %v2254
    %v2257 = vxor.u32 %v2256, 2147483648
    %v2258 = vmul.f32 %v2257, 1.442695
    %v2259 = vpow.pop %v2258
    %v2260 = vadd.f32 %v2259, 1.0
    %v2261 = vrcp.pop %v2260
    %v2262 = vmul.f32 %v2260, %v2261
    %v2263 = vsub.f32 1.0, %v2262
    %v2264 = vmul.f32 %v2261, %v2263
    %v2265 = vadd.f32 %v2261, %v2264
    %vm2266 = vweird.f32 %v2260
    %vm2267 = vweird.f32 %v2261
    %vm2268 = vmor %vm2266, %vm2267
    %v2269 = vsel %vm2268, %v2261, %v2265
    %v2270 = vand.u32 2147483647, %v2260
    %vm2271 = vcmp.eq.f32.partialorder %v2270, 8.507059e+37
    %v2272 = vand.u32 %v2260, 2147483648
    %v2273 = vor.u32 1.1754944e-38, %v2272
    %v2274 = vsel %vm2271, %v2273, %v2269
    %v2275 = vmul.f32 1.0, %v2274
    %v2277 = vrot.slane %v2256, 2
    %v2279 = vxor.u32 %v2277, 2147483648
    %v2280 = vmul.f32 %v2279, 1.442695
    %v2281 = vpow.pop %v2280
    %v2282 = vadd.f32 %v2281, 1.0
    %v2283 = vrcp.pop %v2282
    %v2284 = vmul.f32 %v2282, %v2283
    %v2285 = vsub.f32 1.0, %v2284
    %v2286 = vmul.f32 %v2283, %v2285
    %v2287 = vadd.f32 %v2283, %v2286
    %vm2288 = vweird.f32 %v2282
    %vm2289 = vweird.f32 %v2283
    %vm2290 = vmor %vm2288, %vm2289
    %v2291 = vsel %vm2290, %v2283, %v2287
    %v2292 = vand.u32 2147483647, %v2282
    %vm2293 = vcmp.eq.f32.partialorder %v2292, 8.507059e+37
    %v2294 = vand.u32 %v2282, 2147483648
    %v2295 = vor.u32 1.1754944e-38, %v2294
    %v2296 = vsel %vm2293, %v2295, %v2291
    %v2297 = vmul.f32 1.0, %v2296
    %v2298 = vrot.slane %v2256, 4
    %v2300 = vtanh.pop %v2298
    %v2301 = vrot.slane %v2256, 6
    %v2303 = vxor.u32 %v2301, 2147483648
    %v2304 = vmul.f32 %v2303, 1.442695
    %v2305 = vpow.pop %v2304
    %v2306 = vadd.f32 %v2305, 1.0
    %v2307 = vrcp.pop %v2306
    %v2308 = vmul.f32 %v2306, %v2307
    %v2309 = vsub.f32 1.0, %v2308
    %v2310 = vmul.f32 %v2307, %v2309
    %v2311 = vadd.f32 %v2307, %v2310
    %vm2312 = vweird.f32 %v2306
    %vm2313 = vweird.f32 %v2307
    %vm2314 = vmor %vm2312, %vm2313
    %v2315 = vsel %vm2314, %v2307, %v2311
    %v2316 = vand.u32 2147483647, %v2306
    %vm2317 = vcmp.eq.f32.partialorder %v2316, 8.507059e+37
    %v2318 = vand.u32 %v2306, 2147483648
    %v2319 = vor.u32 1.1754944e-38, %v2318
    %v2320 = vsel %vm2317, %v2319, %v2315
    %v2321 = vmul.f32 1.0, %v2320
    %v2322 = vmul.f32 %v2297, %v1993
    %v2323 = vmul.f32 %v2275, %v2300
    %v2324 = vadd.f32 %v2322, %v2323
    %v2325 = vtanh.pop %v2324
    %v2326 = vmul.f32 %v2321, %v2325
    %s2327 = scalar_lea.vmem [#allocation5], 10
    %2328 = vst [vmem:[%s2327] sm:$0x3] %v2326
    %s2329 = scalar_lea.vmem [#allocation4], 48
    %v2330 = vld [vmem:[%s2329] sm:$0xff]
    %v2331 = vpack.c.bf16 %v2326, %v2326
    %v2332 = vld [vmem:[#allocation12] sm:$0xff]
    %v2333 = vld [vmem:[#allocation12 + $0x8] sm:$0xff]
    %v2334 = vld [vmem:[#allocation12 + $0x10] sm:$0xff]
    %v2335 = vld [vmem:[#allocation12 + $0x18] sm:$0xff]
    %v2336 = vld [vmem:[#allocation12 + $0x20] sm:$0xff]
    %v2337 = vld [vmem:[#allocation12 + $0x28] sm:$0xff]
    %v2338 = vld [vmem:[#allocation12 + $0x30] sm:$0xff]
    %v2339 = vld [vmem:[#allocation12 + $0x38] sm:$0xff]
    %v2340 = vld [vmem:[#allocation12 + $0x40] sm:$0xff]
    %v2341 = vld [vmem:[#allocation12 + $0x48] sm:$0xff]
    %v2342 = vld [vmem:[#allocation12 + $0x50] sm:$0xff]
    %v2343 = vld [vmem:[#allocation12 + $0x58] sm:$0xff]
    %v2344 = vld [vmem:[#allocation12 + $0x60] sm:$0xff]
    %v2345 = vld [vmem:[#allocation12 + $0x68] sm:$0xff]
    %v2346 = vld [vmem:[#allocation12 + $0x70] sm:$0xff]
    %v2347 = vld [vmem:[#allocation12 + $0x78] sm:$0xff]
    %v2348 = vld [vmem:[#allocation12 + $0x80] sm:$0xff]
    %v2349 = vld [vmem:[#allocation12 + $0x88] sm:$0xff]
    %v2350 = vld [vmem:[#allocation12 + $0x90] sm:$0xff]
    %v2351 = vld [vmem:[#allocation12 + $0x98] sm:$0xff]
    %v2352 = vld [vmem:[#allocation12 + $0xa0] sm:$0xff]
    %v2353 = vld [vmem:[#allocation12 + $0xa8] sm:$0xff]
    %v2354 = vld [vmem:[#allocation12 + $0xb0] sm:$0xff]
    %v2355 = vld [vmem:[#allocation12 + $0xb8] sm:$0xff]
    %v2356 = vld [vmem:[#allocation12 + $0xc0] sm:$0xff]
    %v2357 = vld [vmem:[#allocation12 + $0xc8] sm:$0xff]
    %v2358 = vld [vmem:[#allocation12 + $0xd0] sm:$0xff]
    %v2359 = vld [vmem:[#allocation12 + $0xd8] sm:$0xff]
    %v2360 = vld [vmem:[#allocation12 + $0xe0] sm:$0xff]
    %v2361 = vld [vmem:[#allocation12 + $0xe8] sm:$0xff]
    %v2362 = vld [vmem:[#allocation12 + $0xf0] sm:$0xff]
    %v2363 = vld [vmem:[#allocation12 + $0xf8] sm:$0xff]
    %v2396 = vunpack.c.l.b16 %v2332
    %v2397 = vunpack.c.h.b16 %v2332
    %v2398 = vunpack.c.l.b16 %v2333
    %v2399 = vunpack.c.h.b16 %v2333
    %v2400 = vunpack.c.l.b16 %v2334
    %v2401 = vunpack.c.h.b16 %v2334
    %v2402 = vunpack.c.l.b16 %v2335
    %v2403 = vunpack.c.h.b16 %v2335
    %v2404 = vunpack.c.l.b16 %v2336
    %v2405 = vunpack.c.h.b16 %v2336
    %v2406 = vunpack.c.l.b16 %v2337
    %v2407 = vunpack.c.h.b16 %v2337
    %v2408 = vunpack.c.l.b16 %v2338
    %v2409 = vunpack.c.h.b16 %v2338
    %v2410 = vunpack.c.l.b16 %v2339
    %v2411 = vunpack.c.h.b16 %v2339
    %v2412 = vunpack.c.l.b16 %v2340
    %v2413 = vunpack.c.h.b16 %v2340
    %v2414 = vunpack.c.l.b16 %v2341
    %v2415 = vunpack.c.h.b16 %v2341
    %v2416 = vunpack.c.l.b16 %v2342
    %v2417 = vunpack.c.h.b16 %v2342
    %v2418 = vunpack.c.l.b16 %v2343
    %v2419 = vunpack.c.h.b16 %v2343
    %v2420 = vunpack.c.l.b16 %v2344
    %v2421 = vunpack.c.h.b16 %v2344
    %v2422 = vunpack.c.l.b16 %v2345
    %v2423 = vunpack.c.h.b16 %v2345
    %v2424 = vunpack.c.l.b16 %v2346
    %v2425 = vunpack.c.h.b16 %v2346
    %v2426 = vunpack.c.l.b16 %v2347
    %v2427 = vunpack.c.h.b16 %v2347
    %v2428 = vunpack.c.l.b16 %v2348
    %v2429 = vunpack.c.h.b16 %v2348
    %v2430 = vunpack.c.l.b16 %v2349
    %v2431 = vunpack.c.h.b16 %v2349
    %v2432 = vunpack.c.l.b16 %v2350
    %v2433 = vunpack.c.h.b16 %v2350
    %v2434 = vunpack.c.l.b16 %v2351
    %v2435 = vunpack.c.h.b16 %v2351
    %v2436 = vunpack.c.l.b16 %v2352
    %v2437 = vunpack.c.h.b16 %v2352
    %v2438 = vunpack.c.l.b16 %v2353
    %v2439 = vunpack.c.h.b16 %v2353
    %v2440 = vunpack.c.l.b16 %v2354
    %v2441 = vunpack.c.h.b16 %v2354
    %v2442 = vunpack.c.l.b16 %v2355
    %v2443 = vunpack.c.h.b16 %v2355
    %v2444 = vunpack.c.l.b16 %v2356
    %v2445 = vunpack.c.h.b16 %v2356
    %v2446 = vunpack.c.l.b16 %v2357
    %v2447 = vunpack.c.h.b16 %v2357
    %v2448 = vunpack.c.l.b16 %v2358
    %v2449 = vunpack.c.h.b16 %v2358
    %v2450 = vunpack.c.l.b16 %v2359
    %v2451 = vunpack.c.h.b16 %v2359
    %v2452 = vunpack.c.l.b16 %v2360
    %v2453 = vunpack.c.h.b16 %v2360
    %v2454 = vunpack.c.l.b16 %v2361
    %v2455 = vunpack.c.h.b16 %v2361
    %v2456 = vunpack.c.l.b16 %v2362
    %v2457 = vunpack.c.h.b16 %v2362
    %v2458 = vunpack.c.l.b16 %v2363
    %v2459 = vunpack.c.h.b16 %v2363
    %v2460 = vpack.c.b16 %v2400, %v2396
    %v2461 = vpack.c.b16 %v2401, %v2397
    %v2462 = vpack.c.b16 %v2402, %v2398
    %v2463 = vpack.c.b16 %v2403, %v2399
    %v2464 = vpack.c.b16 %v2408, %v2404
    %v2465 = vpack.c.b16 %v2409, %v2405
    %v2466 = vpack.c.b16 %v2410, %v2406
    %v2467 = vpack.c.b16 %v2411, %v2407
    %v2468 = vpack.c.b16 %v2416, %v2412
    %v2469 = vpack.c.b16 %v2417, %v2413
    %v2470 = vpack.c.b16 %v2418, %v2414
    %v2471 = vpack.c.b16 %v2419, %v2415
    %v2472 = vpack.c.b16 %v2424, %v2420
    %v2473 = vpack.c.b16 %v2425, %v2421
    %v2474 = vpack.c.b16 %v2426, %v2422
    %v2475 = vpack.c.b16 %v2427, %v2423
    %v2476 = vpack.c.b16 %v2432, %v2428
    %v2477 = vpack.c.b16 %v2433, %v2429
    %v2478 = vpack.c.b16 %v2434, %v2430
    %v2479 = vpack.c.b16 %v2435, %v2431
    %v2480 = vpack.c.b16 %v2440, %v2436
    %v2481 = vpack.c.b16 %v2441, %v2437
    %v2482 = vpack.c.b16 %v2442, %v2438
    %v2483 = vpack.c.b16 %v2443, %v2439
    %v2484 = vpack.c.b16 %v2448, %v2444
    %v2485 = vpack.c.b16 %v2449, %v2445
    %v2486 = vpack.c.b16 %v2450, %v2446
    %v2487 = vpack.c.b16 %v2451, %v2447
    %v2488 = vpack.c.b16 %v2456, %v2452
    %v2489 = vpack.c.b16 %v2457, %v2453
    %v2490 = vpack.c.b16 %v2458, %v2454
    %v2491 = vpack.c.b16 %v2459, %v2455
    %2524 = vmatpush.bf16.msra.mxu0 %v2488
    %2525 = vmatpush.bf16.msra.mxu0 %v2484
    %2526 = vmatpush.bf16.msra.mxu0 %v2480
    %2527 = vmatpush.bf16.msra.mxu0 %v2476
    %2528 = vmatpush.bf16.msra.mxu0 %v2472
    %2529 = vmatpush.bf16.msra.mxu0 %v2468
    %2530 = vmatpush.bf16.msra.mxu0 %v2464
    %2531 = vmatpush.bf16.msra.mxu0 %v2460
    %2532 = vmatmul.bf16.gmra.mxu0 %v2331
    %v2533 = vpop.f32.mrf.mxu0
    %v2534 = vadd.f32 0.0, %v2533
    %v2535 = vpop.f32.mrf.mxu0
    %2536 = vdwg.mxu0
    %2537 = vmatpush.bf16.msra.mxu0 %v2489
    %2538 = vmatpush.bf16.msra.mxu0 %v2485
    %2539 = vmatpush.bf16.msra.mxu0 %v2481
    %2540 = vmatpush.bf16.msra.mxu0 %v2477
    %2541 = vmatpush.bf16.msra.mxu0 %v2473
    %2542 = vmatpush.bf16.msra.mxu0 %v2469
    %2543 = vmatpush.bf16.msra.mxu0 %v2465
    %2544 = vmatpush.bf16.msra.mxu0 %v2461
    %2545 = vmatmul.bf16.gmra.mxu0 %v2331
    %v2546 = vpop.f32.mrf.mxu0
    %v2547 = vadd.f32 0.0, %v2546
    %v2548 = vpop.f32.mrf.mxu0
    %2549 = vdwg.mxu0
    %2550 = vmatpush.bf16.msra.mxu0 %v2490
    %2551 = vmatpush.bf16.msra.mxu0 %v2486
    %2552 = vmatpush.bf16.msra.mxu0 %v2482
    %2553 = vmatpush.bf16.msra.mxu0 %v2478
    %2554 = vmatpush.bf16.msra.mxu0 %v2474
    %2555 = vmatpush.bf16.msra.mxu0 %v2470
    %2556 = vmatpush.bf16.msra.mxu0 %v2466
    %2557 = vmatpush.bf16.msra.mxu0 %v2462
    %2558 = vmatmul.bf16.gmra.mxu0 %v2331
    %v2559 = vpop.f32.mrf.mxu0
    %v2560 = vadd.f32 0.0, %v2559
    %v2561 = vpop.f32.mrf.mxu0
    %2562 = vdwg.mxu0
    %2563 = vmatpush.bf16.msra.mxu0 %v2491
    %2564 = vmatpush.bf16.msra.mxu0 %v2487
    %2565 = vmatpush.bf16.msra.mxu0 %v2483
    %2566 = vmatpush.bf16.msra.mxu0 %v2479
    %2567 = vmatpush.bf16.msra.mxu0 %v2475
    %2568 = vmatpush.bf16.msra.mxu0 %v2471
    %2569 = vmatpush.bf16.msra.mxu0 %v2467
    %2570 = vmatpush.bf16.msra.mxu0 %v2463
    %2571 = vmatmul.bf16.gmra.mxu0 %v2331
    %v2572 = vpop.f32.mrf.mxu0
    %v2573 = vadd.f32 0.0, %v2572
    %v2574 = vpop.f32.mrf.mxu0
    %2575 = vdwg.mxu0
    %v2580 = vrot.slane %v2547, 6
    %v2581 = vrot.slane %v2560, 4
    %v2582 = vrot.slane %v2573, 2
    %v2583 = vsel %vm210, %v2534, %v2580
    %v2584 = vsel %vm234, %v2581, %v2582
    %v2585 = vsel %vm599, %v2583, %v2584
    %v2587 = vadd.f32 %v2330, %v2585
    %v2588 = vxor.u32 %v2587, 2147483648
    %v2589 = vmul.f32 %v2588, 1.442695
    %v2590 = vpow.pop %v2589
    %v2591 = vadd.f32 %v2590, 1.0
    %v2592 = vrcp.pop %v2591
    %v2593 = vmul.f32 %v2591, %v2592
    %v2594 = vsub.f32 1.0, %v2593
    %v2595 = vmul.f32 %v2592, %v2594
    %v2596 = vadd.f32 %v2592, %v2595
    %vm2597 = vweird.f32 %v2591
    %vm2598 = vweird.f32 %v2592
    %vm2599 = vmor %vm2597, %vm2598
    %v2600 = vsel %vm2599, %v2592, %v2596
    %v2601 = vand.u32 2147483647, %v2591
    %vm2602 = vcmp.eq.f32.partialorder %v2601, 8.507059e+37
    %v2603 = vand.u32 %v2591, 2147483648
    %v2604 = vor.u32 1.1754944e-38, %v2603
    %v2605 = vsel %vm2602, %v2604, %v2600
    %v2606 = vmul.f32 1.0, %v2605
    %v2608 = vrot.slane %v2587, 2
    %v2610 = vxor.u32 %v2608, 2147483648
    %v2611 = vmul.f32 %v2610, 1.442695
    %v2612 = vpow.pop %v2611
    %v2613 = vadd.f32 %v2612, 1.0
    %v2614 = vrcp.pop %v2613
    %v2615 = vmul.f32 %v2613, %v2614
    %v2616 = vsub.f32 1.0, %v2615
    %v2617 = vmul.f32 %v2614, %v2616
    %v2618 = vadd.f32 %v2614, %v2617
    %vm2619 = vweird.f32 %v2613
    %vm2620 = vweird.f32 %v2614
    %vm2621 = vmor %vm2619, %vm2620
    %v2622 = vsel %vm2621, %v2614, %v2618
    %v2623 = vand.u32 2147483647, %v2613
    %vm2624 = vcmp.eq.f32.partialorder %v2623, 8.507059e+37
    %v2625 = vand.u32 %v2613, 2147483648
    %v2626 = vor.u32 1.1754944e-38, %v2625
    %v2627 = vsel %vm2624, %v2626, %v2622
    %v2628 = vmul.f32 1.0, %v2627
    %v2629 = vrot.slane %v2587, 4
    %v2631 = vtanh.pop %v2629
    %v2632 = vrot.slane %v2587, 6
    %v2634 = vxor.u32 %v2632, 2147483648
    %v2635 = vmul.f32 %v2634, 1.442695
    %v2636 = vpow.pop %v2635
    %v2637 = vadd.f32 %v2636, 1.0
    %v2638 = vrcp.pop %v2637
    %v2639 = vmul.f32 %v2637, %v2638
    %v2640 = vsub.f32 1.0, %v2639
    %v2641 = vmul.f32 %v2638, %v2640
    %v2642 = vadd.f32 %v2638, %v2641
    %vm2643 = vweird.f32 %v2637
    %vm2644 = vweird.f32 %v2638
    %vm2645 = vmor %vm2643, %vm2644
    %v2646 = vsel %vm2645, %v2638, %v2642
    %v2647 = vand.u32 2147483647, %v2637
    %vm2648 = vcmp.eq.f32.partialorder %v2647, 8.507059e+37
    %v2649 = vand.u32 %v2637, 2147483648
    %v2650 = vor.u32 1.1754944e-38, %v2649
    %v2651 = vsel %vm2648, %v2650, %v2646
    %v2652 = vmul.f32 1.0, %v2651
    %v2653 = vmul.f32 %v2628, %v2324
    %v2654 = vmul.f32 %v2606, %v2631
    %v2655 = vadd.f32 %v2653, %v2654
    %v2656 = vtanh.pop %v2655
    %v2657 = vmul.f32 %v2652, %v2656
    %s2658 = scalar_lea.vmem [#allocation5], 12
    %2659 = vst [vmem:[%s2658] sm:$0x3] %v2657
    %s2660 = scalar_lea.vmem [#allocation4], 56
    %v2661 = vld [vmem:[%s2660] sm:$0xff]
    %v2662 = vpack.c.bf16 %v2657, %v2657
    %v2663 = vld [vmem:[#allocation12] sm:$0xff]
    %v2664 = vld [vmem:[#allocation12 + $0x8] sm:$0xff]
    %v2665 = vld [vmem:[#allocation12 + $0x10] sm:$0xff]
    %v2666 = vld [vmem:[#allocation12 + $0x18] sm:$0xff]
    %v2667 = vld [vmem:[#allocation12 + $0x20] sm:$0xff]
    %v2668 = vld [vmem:[#allocation12 + $0x28] sm:$0xff]
    %v2669 = vld [vmem:[#allocation12 + $0x30] sm:$0xff]
    %v2670 = vld [vmem:[#allocation12 + $0x38] sm:$0xff]
    %v2671 = vld [vmem:[#allocation12 + $0x40] sm:$0xff]
    %v2672 = vld [vmem:[#allocation12 + $0x48] sm:$0xff]
    %v2673 = vld [vmem:[#allocation12 + $0x50] sm:$0xff]
    %v2674 = vld [vmem:[#allocation12 + $0x58] sm:$0xff]
    %v2675 = vld [vmem:[#allocation12 + $0x60] sm:$0xff]
    %v2676 = vld [vmem:[#allocation12 + $0x68] sm:$0xff]
    %v2677 = vld [vmem:[#allocation12 + $0x70] sm:$0xff]
    %v2678 = vld [vmem:[#allocation12 + $0x78] sm:$0xff]
    %v2679 = vld [vmem:[#allocation12 + $0x80] sm:$0xff]
    %v2680 = vld [vmem:[#allocation12 + $0x88] sm:$0xff]
    %v2681 = vld [vmem:[#allocation12 + $0x90] sm:$0xff]
    %v2682 = vld [vmem:[#allocation12 + $0x98] sm:$0xff]
    %v2683 = vld [vmem:[#allocation12 + $0xa0] sm:$0xff]
    %v2684 = vld [vmem:[#allocation12 + $0xa8] sm:$0xff]
    %v2685 = vld [vmem:[#allocation12 + $0xb0] sm:$0xff]
    %v2686 = vld [vmem:[#allocation12 + $0xb8] sm:$0xff]
    %v2687 = vld [vmem:[#allocation12 + $0xc0] sm:$0xff]
    %v2688 = vld [vmem:[#allocation12 + $0xc8] sm:$0xff]
    %v2689 = vld [vmem:[#allocation12 + $0xd0] sm:$0xff]
    %v2690 = vld [vmem:[#allocation12 + $0xd8] sm:$0xff]
    %v2691 = vld [vmem:[#allocation12 + $0xe0] sm:$0xff]
    %v2692 = vld [vmem:[#allocation12 + $0xe8] sm:$0xff]
    %v2693 = vld [vmem:[#allocation12 + $0xf0] sm:$0xff]
    %v2694 = vld [vmem:[#allocation12 + $0xf8] sm:$0xff]
    %v2727 = vunpack.c.l.b16 %v2663
    %v2728 = vunpack.c.h.b16 %v2663
    %v2729 = vunpack.c.l.b16 %v2664
    %v2730 = vunpack.c.h.b16 %v2664
    %v2731 = vunpack.c.l.b16 %v2665
    %v2732 = vunpack.c.h.b16 %v2665
    %v2733 = vunpack.c.l.b16 %v2666
    %v2734 = vunpack.c.h.b16 %v2666
    %v2735 = vunpack.c.l.b16 %v2667
    %v2736 = vunpack.c.h.b16 %v2667
    %v2737 = vunpack.c.l.b16 %v2668
    %v2738 = vunpack.c.h.b16 %v2668
    %v2739 = vunpack.c.l.b16 %v2669
    %v2740 = vunpack.c.h.b16 %v2669
    %v2741 = vunpack.c.l.b16 %v2670
    %v2742 = vunpack.c.h.b16 %v2670
    %v2743 = vunpack.c.l.b16 %v2671
    %v2744 = vunpack.c.h.b16 %v2671
    %v2745 = vunpack.c.l.b16 %v2672
    %v2746 = vunpack.c.h.b16 %v2672
    %v2747 = vunpack.c.l.b16 %v2673
    %v2748 = vunpack.c.h.b16 %v2673
    %v2749 = vunpack.c.l.b16 %v2674
    %v2750 = vunpack.c.h.b16 %v2674
    %v2751 = vunpack.c.l.b16 %v2675
    %v2752 = vunpack.c.h.b16 %v2675
    %v2753 = vunpack.c.l.b16 %v2676
    %v2754 = vunpack.c.h.b16 %v2676
    %v2755 = vunpack.c.l.b16 %v2677
    %v2756 = vunpack.c.h.b16 %v2677
    %v2757 = vunpack.c.l.b16 %v2678
    %v2758 = vunpack.c.h.b16 %v2678
    %v2759 = vunpack.c.l.b16 %v2679
    %v2760 = vunpack.c.h.b16 %v2679
    %v2761 = vunpack.c.l.b16 %v2680
    %v2762 = vunpack.c.h.b16 %v2680
    %v2763 = vunpack.c.l.b16 %v2681
    %v2764 = vunpack.c.h.b16 %v2681
    %v2765 = vunpack.c.l.b16 %v2682
    %v2766 = vunpack.c.h.b16 %v2682
    %v2767 = vunpack.c.l.b16 %v2683
    %v2768 = vunpack.c.h.b16 %v2683
    %v2769 = vunpack.c.l.b16 %v2684
    %v2770 = vunpack.c.h.b16 %v2684
    %v2771 = vunpack.c.l.b16 %v2685
    %v2772 = vunpack.c.h.b16 %v2685
    %v2773 = vunpack.c.l.b16 %v2686
    %v2774 = vunpack.c.h.b16 %v2686
    %v2775 = vunpack.c.l.b16 %v2687
    %v2776 = vunpack.c.h.b16 %v2687
    %v2777 = vunpack.c.l.b16 %v2688
    %v2778 = vunpack.c.h.b16 %v2688
    %v2779 = vunpack.c.l.b16 %v2689
    %v2780 = vunpack.c.h.b16 %v2689
    %v2781 = vunpack.c.l.b16 %v2690
    %v2782 = vunpack.c.h.b16 %v2690
    %v2783 = vunpack.c.l.b16 %v2691
    %v2784 = vunpack.c.h.b16 %v2691
    %v2785 = vunpack.c.l.b16 %v2692
    %v2786 = vunpack.c.h.b16 %v2692
    %v2787 = vunpack.c.l.b16 %v2693
    %v2788 = vunpack.c.h.b16 %v2693
    %v2789 = vunpack.c.l.b16 %v2694
    %v2790 = vunpack.c.h.b16 %v2694
    %v2791 = vpack.c.b16 %v2731, %v2727
    %v2792 = vpack.c.b16 %v2732, %v2728
    %v2793 = vpack.c.b16 %v2733, %v2729
    %v2794 = vpack.c.b16 %v2734, %v2730
    %v2795 = vpack.c.b16 %v2739, %v2735
    %v2796 = vpack.c.b16 %v2740, %v2736
    %v2797 = vpack.c.b16 %v2741, %v2737
    %v2798 = vpack.c.b16 %v2742, %v2738
    %v2799 = vpack.c.b16 %v2747, %v2743
    %v2800 = vpack.c.b16 %v2748, %v2744
    %v2801 = vpack.c.b16 %v2749, %v2745
    %v2802 = vpack.c.b16 %v2750, %v2746
    %v2803 = vpack.c.b16 %v2755, %v2751
    %v2804 = vpack.c.b16 %v2756, %v2752
    %v2805 = vpack.c.b16 %v2757, %v2753
    %v2806 = vpack.c.b16 %v2758, %v2754
    %v2807 = vpack.c.b16 %v2763, %v2759
    %v2808 = vpack.c.b16 %v2764, %v2760
    %v2809 = vpack.c.b16 %v2765, %v2761
    %v2810 = vpack.c.b16 %v2766, %v2762
    %v2811 = vpack.c.b16 %v2771, %v2767
    %v2812 = vpack.c.b16 %v2772, %v2768
    %v2813 = vpack.c.b16 %v2773, %v2769
    %v2814 = vpack.c.b16 %v2774, %v2770
    %v2815 = vpack.c.b16 %v2779, %v2775
    %v2816 = vpack.c.b16 %v2780, %v2776
    %v2817 = vpack.c.b16 %v2781, %v2777
    %v2818 = vpack.c.b16 %v2782, %v2778
    %v2819 = vpack.c.b16 %v2787, %v2783
    %v2820 = vpack.c.b16 %v2788, %v2784
    %v2821 = vpack.c.b16 %v2789, %v2785
    %v2822 = vpack.c.b16 %v2790, %v2786
    %2855 = vmatpush.bf16.msra.mxu0 %v2819
    %2856 = vmatpush.bf16.msra.mxu0 %v2815
    %2857 = vmatpush.bf16.msra.mxu0 %v2811
    %2858 = vmatpush.bf16.msra.mxu0 %v2807
    %2859 = vmatpush.bf16.msra.mxu0 %v2803
    %2860 = vmatpush.bf16.msra.mxu0 %v2799
    %2861 = vmatpush.bf16.msra.mxu0 %v2795
    %2862 = vmatpush.bf16.msra.mxu0 %v2791
    %2863 = vmatmul.bf16.gmra.mxu0 %v2662
    %v2864 = vpop.f32.mrf.mxu0
    %v2865 = vadd.f32 0.0, %v2864
    %v2866 = vpop.f32.mrf.mxu0
    %2867 = vdwg.mxu0
    %2868 = vmatpush.bf16.msra.mxu0 %v2820
    %2869 = vmatpush.bf16.msra.mxu0 %v2816
    %2870 = vmatpush.bf16.msra.mxu0 %v2812
    %2871 = vmatpush.bf16.msra.mxu0 %v2808
    %2872 = vmatpush.bf16.msra.mxu0 %v2804
    %2873 = vmatpush.bf16.msra.mxu0 %v2800
    %2874 = vmatpush.bf16.msra.mxu0 %v2796
    %2875 = vmatpush.bf16.msra.mxu0 %v2792
    %2876 = vmatmul.bf16.gmra.mxu0 %v2662
    %v2877 = vpop.f32.mrf.mxu0
    %v2878 = vadd.f32 0.0, %v2877
    %v2879 = vpop.f32.mrf.mxu0
    %2880 = vdwg.mxu0
    %2881 = vmatpush.bf16.msra.mxu0 %v2821
    %2882 = vmatpush.bf16.msra.mxu0 %v2817
    %2883 = vmatpush.bf16.msra.mxu0 %v2813
    %2884 = vmatpush.bf16.msra.mxu0 %v2809
    %2885 = vmatpush.bf16.msra.mxu0 %v2805
    %2886 = vmatpush.bf16.msra.mxu0 %v2801
    %2887 = vmatpush.bf16.msra.mxu0 %v2797
    %2888 = vmatpush.bf16.msra.mxu0 %v2793
    %2889 = vmatmul.bf16.gmra.mxu0 %v2662
    %v2890 = vpop.f32.mrf.mxu0
    %v2891 = vadd.f32 0.0, %v2890
    %v2892 = vpop.f32.mrf.mxu0
    %2893 = vdwg.mxu0
    %2894 = vmatpush.bf16.msra.mxu0 %v2822
    %2895 = vmatpush.bf16.msra.mxu0 %v2818
    %2896 = vmatpush.bf16.msra.mxu0 %v2814
    %2897 = vmatpush.bf16.msra.mxu0 %v2810
    %2898 = vmatpush.bf16.msra.mxu0 %v2806
    %2899 = vmatpush.bf16.msra.mxu0 %v2802
    %2900 = vmatpush.bf16.msra.mxu0 %v2798
    %2901 = vmatpush.bf16.msra.mxu0 %v2794
    %2902 = vmatmul.bf16.gmra.mxu0 %v2662
    %v2903 = vpop.f32.mrf.mxu0
    %v2904 = vadd.f32 0.0, %v2903
    %v2905 = vpop.f32.mrf.mxu0
    %2906 = vdwg.mxu0
    %v2911 = vrot.slane %v2878, 6
    %v2912 = vrot.slane %v2891, 4
    %v2913 = vrot.slane %v2904, 2
    %v2914 = vsel %vm210, %v2865, %v2911
    %v2915 = vsel %vm234, %v2912, %v2913
    %v2916 = vsel %vm599, %v2914, %v2915
    %v2918 = vadd.f32 %v2661, %v2916
    %v2919 = vxor.u32 %v2918, 2147483648
    %v2920 = vmul.f32 %v2919, 1.442695
    %v2921 = vpow.pop %v2920
    %v2922 = vadd.f32 %v2921, 1.0
    %v2923 = vrcp.pop %v2922
    %v2924 = vmul.f32 %v2922, %v2923
    %v2925 = vsub.f32 1.0, %v2924
    %v2926 = vmul.f32 %v2923, %v2925
    %v2927 = vadd.f32 %v2923, %v2926
    %vm2928 = vweird.f32 %v2922
    %vm2929 = vweird.f32 %v2923
    %vm2930 = vmor %vm2928, %vm2929
    %v2931 = vsel %vm2930, %v2923, %v2927
    %v2932 = vand.u32 2147483647, %v2922
    %vm2933 = vcmp.eq.f32.partialorder %v2932, 8.507059e+37
    %v2934 = vand.u32 %v2922, 2147483648
    %v2935 = vor.u32 1.1754944e-38, %v2934
    %v2936 = vsel %vm2933, %v2935, %v2931
    %v2937 = vmul.f32 1.0, %v2936
    %v2939 = vrot.slane %v2918, 2
    %v2941 = vxor.u32 %v2939, 2147483648
    %v2942 = vmul.f32 %v2941, 1.442695
    %v2943 = vpow.pop %v2942
    %v2944 = vadd.f32 %v2943, 1.0
    %v2945 = vrcp.pop %v2944
    %v2946 = vmul.f32 %v2944, %v2945
    %v2947 = vsub.f32 1.0, %v2946
    %v2948 = vmul.f32 %v2945, %v2947
    %v2949 = vadd.f32 %v2945, %v2948
    %vm2950 = vweird.f32 %v2944
    %vm2951 = vweird.f32 %v2945
    %vm2952 = vmor %vm2950, %vm2951
    %v2953 = vsel %vm2952, %v2945, %v2949
    %v2954 = vand.u32 2147483647, %v2944
    %vm2955 = vcmp.eq.f32.partialorder %v2954, 8.507059e+37
    %v2956 = vand.u32 %v2944, 2147483648
    %v2957 = vor.u32 1.1754944e-38, %v2956
    %v2958 = vsel %vm2955, %v2957, %v2953
    %v2959 = vmul.f32 1.0, %v2958
    %v2960 = vrot.slane %v2918, 4
    %v2962 = vtanh.pop %v2960
    %v2963 = vrot.slane %v2918, 6
    %v2965 = vxor.u32 %v2963, 2147483648
    %v2966 = vmul.f32 %v2965, 1.442695
    %v2967 = vpow.pop %v2966
    %v2968 = vadd.f32 %v2967, 1.0
    %v2969 = vrcp.pop %v2968
    %v2970 = vmul.f32 %v2968, %v2969
    %v2971 = vsub.f32 1.0, %v2970
    %v2972 = vmul.f32 %v2969, %v2971
    %v2973 = vadd.f32 %v2969, %v2972
    %vm2974 = vweird.f32 %v2968
    %vm2975 = vweird.f32 %v2969
    %vm2976 = vmor %vm2974, %vm2975
    %v2977 = vsel %vm2976, %v2969, %v2973
    %v2978 = vand.u32 2147483647, %v2968
    %vm2979 = vcmp.eq.f32.partialorder %v2978, 8.507059e+37
    %v2980 = vand.u32 %v2968, 2147483648
    %v2981 = vor.u32 1.1754944e-38, %v2980
    %v2982 = vsel %vm2979, %v2981, %v2977
    %v2983 = vmul.f32 1.0, %v2982
    %v2984 = vmul.f32 %v2959, %v2655
    %v2985 = vmul.f32 %v2937, %v2962
    %v2986 = vadd.f32 %v2984, %v2985
    %v2987 = vtanh.pop %v2986
    %v2988 = vmul.f32 %v2983, %v2987
    %s2989 = scalar_lea.vmem [#allocation5], 14
    %2990 = vst [vmem:[%s2989] sm:$0x3] %v2988
    %2991 = vst [vmem:[#allocation2] sm:$0x3] %v2988
    %2992 = vst [vmem:[#allocation3] sm:$0x3] %v2986
    %v2993 = vld [vmem:[#allocation5] sm:$0x1]
    %v2994 = vld [vmem:[#allocation5 + $0x2] sm:$0x1]
    %v2995 = vld [vmem:[#allocation5 + $0x4] sm:$0x1]
    %v2996 = vld [vmem:[#allocation5 + $0x6] sm:$0x1]
    %v2997 = vld [vmem:[#allocation5 + $0x8] sm:$0x1]
    %v2998 = vld [vmem:[#allocation5 + $0xa] sm:$0x1]
    %v2999 = vld [vmem:[#allocation5 + $0xc] sm:$0x1]
    %v3000 = vld [vmem:[#allocation5 + $0xe] sm:$0x1]
    %v3001 = vld [vmem:[#allocation5 + $0x1] sm:$0x1]
    %v3002 = vld [vmem:[#allocation5 + $0x3] sm:$0x1]
    %v3003 = vld [vmem:[#allocation5 + $0x5] sm:$0x1]
    %v3004 = vld [vmem:[#allocation5 + $0x7] sm:$0x1]
    %v3005 = vld [vmem:[#allocation5 + $0x9] sm:$0x1]
    %v3006 = vld [vmem:[#allocation5 + $0xb] sm:$0x1]
    %v3007 = vld [vmem:[#allocation5 + $0xd] sm:$0x1]
    %v3008 = vld [vmem:[#allocation5 + $0xf] sm:$0x1]
    %v3017 = vrot.slane %v2994, 7
    %v3018 = vsel %vm212, %v3017, %v2993
    %v3019 = vrot.slane %v2995, 6
    %v3020 = vsel %vm208, %v3019, %v3018
    %v3021 = vrot.slane %v2996, 5
    %v3022 = vsel %vm214, %v3021, %v3020
    %v3023 = vrot.slane %v2997, 4
    %v3024 = vsel %vm220, %v3023, %v3022
    %v3025 = vrot.slane %v2998, 3
    %v3026 = vsel %vm226, %v3025, %v3024
    %v3027 = vrot.slane %v2999, 2
    %v3028 = vsel %vm232, %v3027, %v3026
    %v3029 = vrot.slane %v3000, 1
    %vm3030 = vcmask 1047559
    %v3031 = vsel %vm3030, %v3029, %v3028
    %v3041 = vrot.slane %v3002, 7
    %v3042 = vsel %vm212, %v3041, %v3001
    %v3043 = vrot.slane %v3003, 6
    %v3044 = vsel %vm208, %v3043, %v3042
    %v3045 = vrot.slane %v3004, 5
    %v3046 = vsel %vm214, %v3045, %v3044
    %v3047 = vrot.slane %v3005, 4
    %v3048 = vsel %vm220, %v3047, %v3046
    %v3049 = vrot.slane %v3006, 3
    %v3050 = vsel %vm226, %v3049, %v3048
    %v3051 = vrot.slane %v3007, 2
    %v3052 = vsel %vm232, %v3051, %v3050
    %v3053 = vrot.slane %v3008, 1
    %v3054 = vsel %vm3030, %v3053, %v3052
    %v3056 = vpack.c.bf16 %v3054, %v3031
    %v3057 = vld [vmem:[#allocation13] sm:$0xf]
    %v3058 = vld [vmem:[#allocation13 + $0x4] sm:$0xf]
    %v3059 = vld [vmem:[#allocation13 + $0x8] sm:$0xf]
    %v3060 = vld [vmem:[#allocation13 + $0xc] sm:$0xf]
    %v3061 = vld [vmem:[#allocation13 + $0x10] sm:$0xf]
    %v3062 = vld [vmem:[#allocation13 + $0x14] sm:$0xf]
    %v3063 = vld [vmem:[#allocation13 + $0x18] sm:$0xf]
    %v3064 = vld [vmem:[#allocation13 + $0x1c] sm:$0xf]
    %v3065 = vld [vmem:[#allocation13 + $0x20] sm:$0xf]
    %v3066 = vld [vmem:[#allocation13 + $0x24] sm:$0xf]
    %v3067 = vld [vmem:[#allocation13 + $0x28] sm:$0xf]
    %v3068 = vld [vmem:[#allocation13 + $0x2c] sm:$0xf]
    %v3069 = vld [vmem:[#allocation13 + $0x30] sm:$0xf]
    %v3070 = vld [vmem:[#allocation13 + $0x34] sm:$0xf]
    %v3071 = vld [vmem:[#allocation13 + $0x38] sm:$0xf]
    %v3072 = vld [vmem:[#allocation13 + $0x3c] sm:$0xf]
    %v3073 = vld [vmem:[%s5] sm:$0x1]
    %v3075 = vperm.slane %v3073, 0
    %v3093 = vunpack.c.l.b16 %v3057
    %v3094 = vunpack.c.l.b16 %v3058
    %v3095 = vunpack.c.l.b16 %v3059
    %v3096 = vunpack.c.l.b16 %v3060
    %v3097 = vunpack.c.l.b16 %v3061
    %v3098 = vunpack.c.l.b16 %v3062
    %v3099 = vunpack.c.l.b16 %v3063
    %v3100 = vunpack.c.l.b16 %v3064
    %v3101 = vunpack.c.l.b16 %v3065
    %v3102 = vunpack.c.l.b16 %v3066
    %v3103 = vunpack.c.l.b16 %v3067
    %v3104 = vunpack.c.l.b16 %v3068
    %v3105 = vunpack.c.l.b16 %v3069
    %v3106 = vunpack.c.l.b16 %v3070
    %v3107 = vunpack.c.l.b16 %v3071
    %v3108 = vunpack.c.l.b16 %v3072
    %v3109 = vpack.c.b16 %v3094, %v3093
    %v3110 = vpack.c.b16 %v3096, %v3095
    %v3111 = vpack.c.b16 %v3098, %v3097
    %v3112 = vpack.c.b16 %v3100, %v3099
    %v3113 = vpack.c.b16 %v3102, %v3101
    %v3114 = vpack.c.b16 %v3104, %v3103
    %v3115 = vpack.c.b16 %v3106, %v3105
    %v3116 = vpack.c.b16 %v3108, %v3107
    %3125 = vmatpush.bf16.msra.mxu0 %v3116
    %3126 = vmatpush.bf16.msra.mxu0 %v3115
    %3127 = vmatpush.bf16.msra.mxu0 %v3114
    %3128 = vmatpush.bf16.msra.mxu0 %v3113
    %3129 = vmatpush.bf16.msra.mxu0 %v3112
    %3130 = vmatpush.bf16.msra.mxu0 %v3111
    %3131 = vmatpush.bf16.msra.mxu0 %v3110
    %3132 = vmatpush.bf16.msra.mxu0 %v3109
    %3133 = vmatmul.bf16.gmra.mxu0 %v3056
    %v3134 = vpop.f32.mrf.mxu0
    %v3135 = vadd.f32 %v3075, %v3134
    %v3136 = vpop.f32.mrf.mxu0
    %v3137 = vadd.f32 %v3075, %v3136
    %3138 = vdwg.mxu0
    %v3139 = vmax.f32 %v3135, 0.0
    %v3140 = vmax.f32 %v3137, 0.0
    %v3141 = vld [vmem:[%s6] sm:$0x1]
    %v3142 = vld [vmem:[#allocation6] sm:$0x1]
    %v3144 = vperm.slane %v3141, 0
    %v3146 = vmul.f32 %v3139, %v3144
    %3147 = vadd.xlane.f32.xlu0 %v3146
    %v3148 = vpop.xlane.xlu0 %3147
    %3150 = vset.pattern.permute.xlu0 0
    %3151 = vperm.xlu0 %3150, %v3142
    %v3152 = vpop.permute.xlu0 %3151
    %v3154 = vperm.slane %v3152, 0
    %v3155 = vadd.f32 %v3148, %v3154
    %v3157 = vlaneseq
    %v3158 = vand.u32 %v3157, 127
    %v3159 = vperm.slane %v3155, %v3158
    %vm3161 = vcmask 57344
    %3162 = vst.msk [vmem:[#allocation15] sm:$0x1] %vm3161, %v3159
    %v3163 = vmul.f32 %v3140, %v3144
    %3164 = vadd.xlane.f32.xlu0 %v3163
    %v3165 = vpop.xlane.xlu0 %3164
    %v3166 = vadd.f32 %v3165, %v3154
    %v3168 = vperm.slane %v3166, %v3158
    %3170 = vst.msk [vmem:[#allocation15 + $0x1] sm:$0x1] %vm3161, %v3168
    // Predicated region
    $region54: #{tpu_custom_call.1} parent=1 // pred_check
      _
    $region55: #{tpu_custom_call.1} parent=1 // pred_check_branch
      %3172 = sbr.rel (0) target = $region57
    $region56: #{tpu_custom_call.1} parent=1 // pred_region
      %3174 = vsyncadd [#allocation9], 0
      %s3176 = sshll.u32 [#allocation15], 4
      %s3177 = int_to_ptr.vmem [resolvable:$true] %s3176
      %s3178 = sshll.u32 %s8, 4
      %s3179 = int_to_ptr.hbm [resolvable:$true] %s3178
      %3181 = dma.vmem_to_hbm [thread:$0]  %s3177, 32, %s3179, [#allocation9]
    $region57: #{tpu_custom_call.1} parent=1 // pred_fallthru
      _
    // Predicated region
    $region58: #{tpu_custom_call.1} parent=1 // pred_check
      _
    $region59: #{tpu_custom_call.1} parent=1 // pred_check_branch
      %3183 = sbr.rel (0) target = $region61
    $region60: #{tpu_custom_call.1} parent=1 // pred_region
      %3185 = dma.done [#allocation9], 32
    $region61: #{tpu_custom_call.1} parent=1 // pred_fallthru
      _
    %3186 = vsyncpa [#allocation8], 1
    %3187 = vsyncpa [#allocation11], 1
    %3188 = vsyncpa [#allocation14], 1
    %3189 = vsyncpa [#allocation9], 1

</llo_original>
